<compile_context>
chip_gen: v6e
topology: v6e:2x2x1
jax: 0.10.0
libtpu: 0.0.40
codegen_flags: <defaults>
</compile_context>

<pallas_src>
import functools

import jax
import jax.numpy as jnp
import numpy as np
from jax.experimental import pallas as pl
from jax.experimental.pallas import tpu as pltpu

_TAPS = tuple((dy, dx) for dy in range(3) for dx in range(3))   # tap-major order


# ----------------------------------------------------------------------------
# Fused network kernel: one image per grid step, everything in VMEM.
# ----------------------------------------------------------------------------
def _net_kernel(x_ref, w1_ref, b1_ref, w2_ref, b2_ref, w3_ref, b3_ref,
                wf_ref, bf_ref, o_ref,
                xp1, xp2, xp3, y1_sc, z1_sc, y2_sc, z2_sc, p3_sc,
                *, use_mean):
    # Zero the padded-input scratches every step: the borders implement "same"
    # padding, and scratch is per-core (can't rely on a previous grid step).
    xp1[...] = jnp.zeros_like(xp1)
    xp2[...] = jnp.zeros_like(xp2)
    xp3[...] = jnp.zeros_like(xp3)

    # ---------- layer 1: conv 1->16 + bias + ReLU + 2x2 maxpool -------------
    xp1[1:17, 1:17, :] = x_ref[0]                      # in-kernel "same" pad
    b1 = b1_ref[...]                                   # hoisted bias load
    acc1 = jnp.zeros((256, 16), jnp.float32)
    for t, (dy, dx) in enumerate(_TAPS):               # Cin=1 -> 9 rank-1 MXU ops
        patch = xp1[dy:dy + 16, dx:dx + 16, :].reshape(256, 1)
        acc1 = acc1 + jnp.dot(patch, w1_ref[t:t + 1, :],
                              preferred_element_type=jnp.float32)
    y1_sc[...] = jnp.maximum(acc1 + b1, 0.0).reshape(16, 16, 16)
    z1_sc[...] = jnp.maximum(y1_sc[pl.ds(0, 8, 2), :, :],
                             y1_sc[pl.ds(1, 8, 2), :, :])          # row pool
    xp2[1:9, 1:9, :] = jnp.maximum(z1_sc[:, pl.ds(0, 8, 2), :],
                                   z1_sc[:, pl.ds(1, 8, 2), :])    # col pool

    # ---------- layer 2: conv 16->32 (im2col) + bias + ReLU + maxpool -------
    p2 = jnp.concatenate(
        [xp2[dy:dy + 8, dx:dx + 8, :].reshape(64, 16) for dy, dx in _TAPS],
        axis=1)                                                    # (64, 144)
    y2 = jnp.maximum(
        jnp.dot(p2, w2_ref[...], preferred_element_type=jnp.float32)
        + b2_ref[...], 0.0)                                        # (64, 32)
    y2_sc[...] = y2.reshape(8, 8, 32)
    z2_sc[...] = jnp.maximum(y2_sc[pl.ds(0, 4, 2), :, :],
                             y2_sc[pl.ds(1, 4, 2), :, :])
    xp3[1:5, 1:5, :] = jnp.maximum(z2_sc[:, pl.ds(0, 4, 2), :],
                                   z2_sc[:, pl.ds(1, 4, 2), :])

    # ---------- layer 3: conv 32->N (im2col) + bias + ReLU ------------------
    # Build the (16, 288) patch matrix row-block by row-block (flat row = 4h+w).
    for h in range(4):
        p3_sc[4 * h:4 * h + 4, :] = jnp.concatenate(
            [xp3[h + dy, dx:dx + 4, :] for dy, dx in _TAPS], axis=1)  # (4, 288)
    y3 = jnp.maximum(
        jnp.dot(p3_sc[...], w3_ref[...], preferred_element_type=jnp.float32)
        + b3_ref[...], 0.0)                                        # (16, N)

    # ---------- 2x2 maxpool + global (max|mean) pool + Linear(N, 10) --------
    if use_mean:
        # AvgPool2d(2) over the 2x2 maxpooled map: mean of the 4 maxpool cells.
        g = None
        for hp in range(2):
            for wp in range(2):
                r0 = 8 * hp + 2 * wp          # rows {r0, r0+1, r0+4, r0+5}
                q = jnp.max(jnp.maximum(y3[r0:r0 + 2, :], y3[r0 + 4:r0 + 6, :]),
                            axis=0, keepdims=True)
                g = q if g is None else g + q
        g = g * 0.25                                               # (1, N)
    else:
        g = jnp.max(y3, axis=0, keepdims=True)   # max of maxes == global max
    o_ref[0] = (jnp.dot(g, wf_ref[...], preferred_element_type=jnp.float32)
                + bf_ref[...])                                     # (1, 10)


# ----------------------------------------------------------------------------
# Wrapper: NCHW -> NHWC, weight repacking (HWIO -> (9*Cin, Cout)), pallas_call.
# ----------------------------------------------------------------------------
def net_forward(x_nchw, p, global_mean_pool=False):
    """x_nchw: (B, 1, 16, 16) -> (B, 10) logits (matches Net.forward)."""
    x = jnp.transpose(x_nchw, (0, 2, 3, 1)).astype(jnp.float32)    # NCHW -> NHWC
    B, H, W, Cin = x.shape
    assert (H, W, Cin) == (16, 16, 1), "kernel is specialized to 1x16x16 inputs"
    # TODO(synk): generalize the fused kernel to other (even) spatial sizes.
    N = p["w3"].shape[-1]
    w1m = p["w1"].reshape(9 * 1, 16)      # tap-major rows: ((dy*3+dx)*Cin + cin)
    w2m = p["w2"].reshape(9 * 16, 32)
    w3m = p["w3"].reshape(9 * 32, N)

    out = pl.pallas_call(
        functools.partial(_net_kernel, use_mean=global_mean_pool),
        out_shape=jax.ShapeDtypeStruct((B, 1, 10), jnp.float32),
        grid=(B,),
        in_specs=[
            pl.BlockSpec((1, 16, 16, 1), lambda b: (b, 0, 0, 0)),   # image b
            pl.BlockSpec((9, 16), lambda b: (0, 0)),                # w1
            pl.BlockSpec((1, 16), lambda b: (0, 0)),                # b1
            pl.BlockSpec((144, 32), lambda b: (0, 0)),              # w2
            pl.BlockSpec((1, 32), lambda b: (0, 0)),                # b2
            pl.BlockSpec((288, N), lambda b: (0, 0)),               # w3
            pl.BlockSpec((1, N), lambda b: (0, 0)),                 # b3
            pl.BlockSpec((N, 10), lambda b: (0, 0)),                # wf
            pl.BlockSpec((1, 10), lambda b: (0, 0)),                # bf
        ],
        out_specs=pl.BlockSpec((1, 1, 10), lambda b: (b, 0, 0)),
        scratch_shapes=[
            pltpu.VMEM((18, 18, 1), jnp.float32),    # xp1: padded input
            pltpu.VMEM((10, 10, 16), jnp.float32),   # xp2: padded pool-1 output
            pltpu.VMEM((6, 6, 32), jnp.float32),     # xp3: padded pool-2 output
            pltpu.VMEM((16, 16, 16), jnp.float32),   # y1_sc: conv1+relu
            pltpu.VMEM((8, 16, 16), jnp.float32),    # z1_sc: row-pooled layer 1
            pltpu.VMEM((8, 8, 32), jnp.float32),     # y2_sc: conv2+relu
            pltpu.VMEM((4, 8, 32), jnp.float32),     # z2_sc: row-pooled layer 2
            pltpu.VMEM((16, 288), jnp.float32),      # p3_sc: layer-3 im2col
        ],
        compiler_params=pltpu.CompilerParams(
            dimension_semantics=("parallel",)),      # v7x: shard batch over TCs
    )(x, w1m, p["b1"], w2m, p["b2"], w3m, p["b3"], p["wf"], p["bf"])
    return out[:, 0, :]


# ----------------------------------------------------------------------------
# Deterministic parameter init and a pure-JAX reference for validation.
# ----------------------------------------------------------------------------
def init_params(key, N=64):
    ks = jax.random.split(key, 8)

    def u(k, shape, fan_in):
        bound = 1.0 / float(np.sqrt(fan_in))
        return jax.random.uniform(k, shape, jnp.float32, -bound, bound)

    return dict(
        w1=u(ks[0], (3, 3, 1, 16), 9 * 1),   b1=u(ks[1], (1, 16), 9 * 1),
        w2=u(ks[2], (3, 3, 16, 32), 9 * 16), b2=u(ks[3], (1, 32), 9 * 16),
        w3=u(ks[4], (3, 3, 32, N), 9 * 32),  b3=u(ks[5], (1, N), 9 * 32),
        wf=u(ks[6], (N, 10), N),             bf=u(ks[7], (1, 10), N),
    )


def ref_forward(x_nchw, p, global_mean_pool=False):
    x = jnp.transpose(x_nchw, (0, 2, 3, 1)).astype(jnp.float32)

    def block(x, w, b):
        y = jax.lax.conv_general_dilated(
            x, w, window_strides=(1, 1), padding="SAME",
            dimension_numbers=("NHWC", "HWIO", "NHWC"))
        y = jnp.maximum(y + b.reshape(1, 1, 1, -1), 0.0)
        return jax.lax.reduce_window(y, -jnp.inf, jax.lax.max,
                                     (1, 2, 2, 1), (1, 2, 2, 1), "VALID")

    x = block(x, p["w1"], p["b1"])
    x = block(x, p["w2"], p["b2"])
    x = block(x, p["w3"], p["b3"])
    g = jnp.mean(x, axis=(1, 2)) if global_mean_pool else jnp.max(x, axis=(1, 2))
    return g @ p["wf"] + p["bf"]


if __name__ == "__main__":
    key = jax.random.PRNGKey(0)
    kx, kp = jax.random.split(key)

    # PyTorch-style NCHW input: batch=2, channels=1, 16x16 spatial.
    x = jax.random.normal(kx, (2, 1, 16, 16), jnp.float32)
    params = init_params(kp, N=64)

    fwd = jax.jit(net_forward, static_argnames=("global_mean_pool",))
    out_max = jax.block_until_ready(fwd(x, params, global_mean_pool=False))
    out_avg = jax.block_until_ready(fwd(x, params, global_mean_pool=True))
    assert out_max.shape == (2, 10) and out_avg.shape == (2, 10)

    ref_max = ref_forward(x, params, global_mean_pool=False)
    ref_avg = ref_forward(x, params, global_mean_pool=True)
    np.testing.assert_allclose(np.asarray(out_max), np.asarray(ref_max),
                               rtol=1e-3, atol=1e-3)
    np.testing.assert_allclose(np.asarray(out_avg), np.asarray(ref_avg),
                               rtol=1e-3, atol=1e-3)
    print("KERNEL_OK")
</pallas_src>

<mosaic_0001>
module attributes {stable_mosaic.version = 11 : i64} {
  func.func @_net_kernel(%arg0: i32, %arg1: memref<1x16x16x1xf32, #tpu.memory_space<vmem>>, %arg2: memref<9x16xf32, #tpu.memory_space<vmem>>, %arg3: memref<1x16xf32, #tpu.memory_space<vmem>>, %arg4: memref<144x32xf32, #tpu.memory_space<vmem>>, %arg5: memref<1x32xf32, #tpu.memory_space<vmem>>, %arg6: memref<288x64xf32, #tpu.memory_space<vmem>>, %arg7: memref<1x64xf32, #tpu.memory_space<vmem>>, %arg8: memref<64x10xf32, #tpu.memory_space<vmem>>, %arg9: memref<1x10xf32, #tpu.memory_space<vmem>>, %arg10: memref<1x1x10xf32, #tpu.memory_space<vmem>>, %arg11: memref<18x18x1xf32, #tpu.memory_space<vmem>>, %arg12: memref<10x10x16xf32, #tpu.memory_space<vmem>>, %arg13: memref<6x6x32xf32, #tpu.memory_space<vmem>>, %arg14: memref<16x16x16xf32, #tpu.memory_space<vmem>>, %arg15: memref<8x16x16xf32, #tpu.memory_space<vmem>>, %arg16: memref<8x8x32xf32, #tpu.memory_space<vmem>>, %arg17: memref<4x8x32xf32, #tpu.memory_space<vmem>>, %arg18: memref<16x288xf32, #tpu.memory_space<vmem>>) attributes {dimension_semantics = [#tpu.dimension_semantics<parallel>], iteration_bounds = array<i64: 2>, scalar_prefetch = 0 : i64, scratch_operands = 8 : i64, tpu.core_type = #tpu.core_type<tc>, window_params = [{transform_indices = @transform_0, window_bounds = array<i64: 1, 16, 16, 1>}, {pipeline_mode = #tpu.pipeline_mode<synchronous>, transform_indices = @transform_1, window_bounds = array<i64: 9, 16>}, {pipeline_mode = #tpu.pipeline_mode<synchronous>, transform_indices = @transform_2, window_bounds = array<i64: 1, 16>}, {pipeline_mode = #tpu.pipeline_mode<synchronous>, transform_indices = @transform_3, window_bounds = array<i64: 144, 32>}, {pipeline_mode = #tpu.pipeline_mode<synchronous>, transform_indices = @transform_4, window_bounds = array<i64: 1, 32>}, {pipeline_mode = #tpu.pipeline_mode<synchronous>, transform_indices = @transform_5, window_bounds = array<i64: 288, 64>}, {pipeline_mode = #tpu.pipeline_mode<synchronous>, transform_indices = @transform_6, window_bounds = array<i64: 1, 64>}, {pipeline_mode = #tpu.pipeline_mode<synchronous>, transform_indices = @transform_7, window_bounds = array<i64: 64, 10>}, {pipeline_mode = #tpu.pipeline_mode<synchronous>, transform_indices = @transform_8, window_bounds = array<i64: 1, 10>}, {transform_indices = @transform_9, window_bounds = array<i64: 1, 1, 10>}]} {
    %cst = arith.constant 0.000000e+00 : f32
    %0 = vector.broadcast %cst : f32 to vector<18x18x1xf32>
    %c0 = arith.constant 0 : index
    %c0_0 = arith.constant 0 : index
    %c0_1 = arith.constant 0 : index
    %1 = vector.load %arg11[%c0, %c0_0, %c0_1] : memref<18x18x1xf32, #tpu.memory_space<vmem>>, vector<18x18x1xf32>
    tpu.vector_store %arg11[%c0, %c0_0, %c0_1], %0 {strides = array<i32>} : memref<18x18x1xf32, #tpu.memory_space<vmem>>, vector<18x18x1xf32>,
    %cst_2 = arith.constant 0.000000e+00 : f32
    %2 = vector.broadcast %cst_2 : f32 to vector<10x10x16xf32>
    %c0_3 = arith.constant 0 : index
    %c0_4 = arith.constant 0 : index
    %c0_5 = arith.constant 0 : index
    %3 = vector.load %arg12[%c0_3, %c0_4, %c0_5] : memref<10x10x16xf32, #tpu.memory_space<vmem>>, vector<10x10x16xf32>
    tpu.vector_store %arg12[%c0_3, %c0_4, %c0_5], %2 {strides = array<i32>} : memref<10x10x16xf32, #tpu.memory_space<vmem>>, vector<10x10x16xf32>,
    %cst_6 = arith.constant 0.000000e+00 : f32
    %4 = vector.broadcast %cst_6 : f32 to vector<6x6x32xf32>
    %c0_7 = arith.constant 0 : index
    %c0_8 = arith.constant 0 : index
    %c0_9 = arith.constant 0 : index
    %5 = vector.load %arg13[%c0_7, %c0_8, %c0_9] : memref<6x6x32xf32, #tpu.memory_space<vmem>>, vector<6x6x32xf32>
    tpu.vector_store %arg13[%c0_7, %c0_8, %c0_9], %4 {strides = array<i32>} : memref<6x6x32xf32, #tpu.memory_space<vmem>>, vector<6x6x32xf32>,
    %c0_10 = arith.constant 0 : index
    %c0_11 = arith.constant 0 : index
    %c0_12 = arith.constant 0 : index
    %c0_13 = arith.constant 0 : index
    %6 = vector.load %arg1[%c0_10, %c0_11, %c0_12, %c0_13] : memref<1x16x16x1xf32, #tpu.memory_space<vmem>>, vector<1x16x16x1xf32>
    %7 = vector.shape_cast %6 : vector<1x16x16x1xf32> to vector<16x16x1xf32>
    %c1 = arith.constant 1 : index
    %c1_14 = arith.constant 1 : index
    %c0_15 = arith.constant 0 : index
    %8 = vector.load %arg11[%c1, %c1_14, %c0_15] : memref<18x18x1xf32, #tpu.memory_space<vmem>>, vector<16x16x1xf32>
    tpu.vector_store %arg11[%c1, %c1_14, %c0_15], %7 {strides = array<i32>} : memref<18x18x1xf32, #tpu.memory_space<vmem>>, vector<16x16x1xf32>,
    %c0_16 = arith.constant 0 : index
    %c0_17 = arith.constant 0 : index
    %9 = vector.load %arg3[%c0_16, %c0_17] : memref<1x16xf32, #tpu.memory_space<vmem>>, vector<1x16xf32>
    %cst_18 = arith.constant 0.000000e+00 : f32
    %10 = vector.broadcast %cst_18 : f32 to vector<256x16xf32>
    %c0_19 = arith.constant 0 : index
    %c0_20 = arith.constant 0 : index
    %c0_21 = arith.constant 0 : index
    %11 = vector.load %arg11[%c0_19, %c0_20, %c0_21] : memref<18x18x1xf32, #tpu.memory_space<vmem>>, vector<16x16x1xf32>
    %12 = vector.shape_cast %11 : vector<16x16x1xf32> to vector<256x1xf32>
    %c0_22 = arith.constant 0 : index
    %c0_23 = arith.constant 0 : index
    %13 = vector.load %arg2[%c0_22, %c0_23] : memref<9x16xf32, #tpu.memory_space<vmem>>, vector<1x16xf32>
    %cst_24 = arith.constant dense<0.000000e+00> : vector<256x16xf32>
    %14 = tpu.matmul %12, %13, %cst_24 {dimension_numbers = #tpu.dot_dimension_numbers<[1], [0], [0], [1], [0, 0, 1, 1], [], []>} : vector<256x1xf32>, vector<1x16xf32>, vector<256x16xf32> -> vector<256x16xf32>
    %15 = arith.addf %10, %14 : vector<256x16xf32>
    %c0_25 = arith.constant 0 : index
    %c1_26 = arith.constant 1 : index
    %c0_27 = arith.constant 0 : index
    %16 = vector.load %arg11[%c0_25, %c1_26, %c0_27] : memref<18x18x1xf32, #tpu.memory_space<vmem>>, vector<16x16x1xf32>
    %17 = vector.shape_cast %16 : vector<16x16x1xf32> to vector<256x1xf32>
    %c1_28 = arith.constant 1 : index
    %c0_29 = arith.constant 0 : index
    %18 = vector.load %arg2[%c1_28, %c0_29] : memref<9x16xf32, #tpu.memory_space<vmem>>, vector<1x16xf32>
    %cst_30 = arith.constant dense<0.000000e+00> : vector<256x16xf32>
    %19 = tpu.matmul %17, %18, %cst_30 {dimension_numbers = #tpu.dot_dimension_numbers<[1], [0], [0], [1], [0, 0, 1, 1], [], []>} : vector<256x1xf32>, vector<1x16xf32>, vector<256x16xf32> -> vector<256x16xf32>
    %20 = arith.addf %15, %19 : vector<256x16xf32>
    %c0_31 = arith.constant 0 : index
    %c2 = arith.constant 2 : index
    %c0_32 = arith.constant 0 : index
    %21 = vector.load %arg11[%c0_31, %c2, %c0_32] : memref<18x18x1xf32, #tpu.memory_space<vmem>>, vector<16x16x1xf32>
    %22 = vector.shape_cast %21 : vector<16x16x1xf32> to vector<256x1xf32>
    %c2_33 = arith.constant 2 : index
    %c0_34 = arith.constant 0 : index
    %23 = vector.load %arg2[%c2_33, %c0_34] : memref<9x16xf32, #tpu.memory_space<vmem>>, vector<1x16xf32>
    %cst_35 = arith.constant dense<0.000000e+00> : vector<256x16xf32>
    %24 = tpu.matmul %22, %23, %cst_35 {dimension_numbers = #tpu.dot_dimension_numbers<[1], [0], [0], [1], [0, 0, 1, 1], [], []>} : vector<256x1xf32>, vector<1x16xf32>, vector<256x16xf32> -> vector<256x16xf32>
    %25 = arith.addf %20, %24 : vector<256x16xf32>
    %c1_36 = arith.constant 1 : index
    %c0_37 = arith.constant 0 : index
    %c0_38 = arith.constant 0 : index
    %26 = vector.load %arg11[%c1_36, %c0_37, %c0_38] : memref<18x18x1xf32, #tpu.memory_space<vmem>>, vector<16x16x1xf32>
    %27 = vector.shape_cast %26 : vector<16x16x1xf32> to vector<256x1xf32>
    %c3 = arith.constant 3 : index
    %c0_39 = arith.constant 0 : index
    %28 = vector.load %arg2[%c3, %c0_39] : memref<9x16xf32, #tpu.memory_space<vmem>>, vector<1x16xf32>
    %cst_40 = arith.constant dense<0.000000e+00> : vector<256x16xf32>
    %29 = tpu.matmul %27, %28, %cst_40 {dimension_numbers = #tpu.dot_dimension_numbers<[1], [0], [0], [1], [0, 0, 1, 1], [], []>} : vector<256x1xf32>, vector<1x16xf32>, vector<256x16xf32> -> vector<256x16xf32>
    %30 = arith.addf %25, %29 : vector<256x16xf32>
    %c1_41 = arith.constant 1 : index
    %c1_42 = arith.constant 1 : index
    %c0_43 = arith.constant 0 : index
    %31 = vector.load %arg11[%c1_41, %c1_42, %c0_43] : memref<18x18x1xf32, #tpu.memory_space<vmem>>, vector<16x16x1xf32>
    %32 = vector.shape_cast %31 : vector<16x16x1xf32> to vector<256x1xf32>
    %c4 = arith.constant 4 : index
    %c0_44 = arith.constant 0 : index
    %33 = vector.load %arg2[%c4, %c0_44] : memref<9x16xf32, #tpu.memory_space<vmem>>, vector<1x16xf32>
    %cst_45 = arith.constant dense<0.000000e+00> : vector<256x16xf32>
    %34 = tpu.matmul %32, %33, %cst_45 {dimension_numbers = #tpu.dot_dimension_numbers<[1], [0], [0], [1], [0, 0, 1, 1], [], []>} : vector<256x1xf32>, vector<1x16xf32>, vector<256x16xf32> -> vector<256x16xf32>
    %35 = arith.addf %30, %34 : vector<256x16xf32>
    %c1_46 = arith.constant 1 : index
    %c2_47 = arith.constant 2 : index
    %c0_48 = arith.constant 0 : index
    %36 = vector.load %arg11[%c1_46, %c2_47, %c0_48] : memref<18x18x1xf32, #tpu.memory_space<vmem>>, vector<16x16x1xf32>
    %37 = vector.shape_cast %36 : vector<16x16x1xf32> to vector<256x1xf32>
    %c5 = arith.constant 5 : index
    %c0_49 = arith.constant 0 : index
    %38 = vector.load %arg2[%c5, %c0_49] : memref<9x16xf32, #tpu.memory_space<vmem>>, vector<1x16xf32>
    %cst_50 = arith.constant dense<0.000000e+00> : vector<256x16xf32>
    %39 = tpu.matmul %37, %38, %cst_50 {dimension_numbers = #tpu.dot_dimension_numbers<[1], [0], [0], [1], [0, 0, 1, 1], [], []>} : vector<256x1xf32>, vector<1x16xf32>, vector<256x16xf32> -> vector<256x16xf32>
    %40 = arith.addf %35, %39 : vector<256x16xf32>
    %c2_51 = arith.constant 2 : index
    %c0_52 = arith.constant 0 : index
    %c0_53 = arith.constant 0 : index
    %41 = vector.load %arg11[%c2_51, %c0_52, %c0_53] : memref<18x18x1xf32, #tpu.memory_space<vmem>>, vector<16x16x1xf32>
    %42 = vector.shape_cast %41 : vector<16x16x1xf32> to vector<256x1xf32>
    %c6 = arith.constant 6 : index
    %c0_54 = arith.constant 0 : index
    %43 = vector.load %arg2[%c6, %c0_54] : memref<9x16xf32, #tpu.memory_space<vmem>>, vector<1x16xf32>
    %cst_55 = arith.constant dense<0.000000e+00> : vector<256x16xf32>
    %44 = tpu.matmul %42, %43, %cst_55 {dimension_numbers = #tpu.dot_dimension_numbers<[1], [0], [0], [1], [0, 0, 1, 1], [], []>} : vector<256x1xf32>, vector<1x16xf32>, vector<256x16xf32> -> vector<256x16xf32>
    %45 = arith.addf %40, %44 : vector<256x16xf32>
    %c2_56 = arith.constant 2 : index
    %c1_57 = arith.constant 1 : index
    %c0_58 = arith.constant 0 : index
    %46 = vector.load %arg11[%c2_56, %c1_57, %c0_58] : memref<18x18x1xf32, #tpu.memory_space<vmem>>, vector<16x16x1xf32>
    %47 = vector.shape_cast %46 : vector<16x16x1xf32> to vector<256x1xf32>
    %c7 = arith.constant 7 : index
    %c0_59 = arith.constant 0 : index
    %48 = vector.load %arg2[%c7, %c0_59] : memref<9x16xf32, #tpu.memory_space<vmem>>, vector<1x16xf32>
    %cst_60 = arith.constant dense<0.000000e+00> : vector<256x16xf32>
    %49 = tpu.matmul %47, %48, %cst_60 {dimension_numbers = #tpu.dot_dimension_numbers<[1], [0], [0], [1], [0, 0, 1, 1], [], []>} : vector<256x1xf32>, vector<1x16xf32>, vector<256x16xf32> -> vector<256x16xf32>
    %50 = arith.addf %45, %49 : vector<256x16xf32>
    %c2_61 = arith.constant 2 : index
    %c2_62 = arith.constant 2 : index
    %c0_63 = arith.constant 0 : index
    %51 = vector.load %arg11[%c2_61, %c2_62, %c0_63] : memref<18x18x1xf32, #tpu.memory_space<vmem>>, vector<16x16x1xf32>
    %52 = vector.shape_cast %51 : vector<16x16x1xf32> to vector<256x1xf32>
    %c8 = arith.constant 8 : index
    %c0_64 = arith.constant 0 : index
    %53 = vector.load %arg2[%c8, %c0_64] : memref<9x16xf32, #tpu.memory_space<vmem>>, vector<1x16xf32>
    %cst_65 = arith.constant dense<0.000000e+00> : vector<256x16xf32>
    %54 = tpu.matmul %52, %53, %cst_65 {dimension_numbers = #tpu.dot_dimension_numbers<[1], [0], [0], [1], [0, 0, 1, 1], [], []>} : vector<256x1xf32>, vector<1x16xf32>, vector<256x16xf32> -> vector<256x16xf32>
    %55 = arith.addf %50, %54 : vector<256x16xf32>
    %56 = vector.broadcast %9 : vector<1x16xf32> to vector<256x16xf32>
    %57 = arith.addf %55, %56 : vector<256x16xf32>
    %cst_66 = arith.constant 0.000000e+00 : f32
    %58 = vector.broadcast %cst_66 : f32 to vector<256x16xf32>
    %59 = arith.maximumf %57, %58 : vector<256x16xf32>
    %60 = vector.shape_cast %59 : vector<256x16xf32> to vector<16x16x16xf32>
    %c0_67 = arith.constant 0 : index
    %c0_68 = arith.constant 0 : index
    %c0_69 = arith.constant 0 : index
    %61 = vector.load %arg14[%c0_67, %c0_68, %c0_69] : memref<16x16x16xf32, #tpu.memory_space<vmem>>, vector<16x16x16xf32>
    tpu.vector_store %arg14[%c0_67, %c0_68, %c0_69], %60 {strides = array<i32>} : memref<16x16x16xf32, #tpu.memory_space<vmem>>, vector<16x16x16xf32>,
    %c0_70 = arith.constant 0 : index
    %c0_71 = arith.constant 0 : index
    %c0_72 = arith.constant 0 : index
    %62 = tpu.strided_load %arg14[%c0_70, %c0_71, %c0_72] {strides = array<i32: 2, 1, 1>} : memref<16x16x16xf32, #tpu.memory_space<vmem>>, vector<8x16x16xf32>
    %c1_73 = arith.constant 1 : index
    %c0_74 = arith.constant 0 : index
    %c0_75 = arith.constant 0 : index
    %63 = tpu.strided_load %arg14[%c1_73, %c0_74, %c0_75] {strides = array<i32: 2, 1, 1>} : memref<16x16x16xf32, #tpu.memory_space<vmem>>, vector<8x16x16xf32>
    %64 = arith.maximumf %62, %63 : vector<8x16x16xf32>
    %c0_76 = arith.constant 0 : index
    %c0_77 = arith.constant 0 : index
    %c0_78 = arith.constant 0 : index
    %65 = vector.load %arg15[%c0_76, %c0_77, %c0_78] : memref<8x16x16xf32, #tpu.memory_space<vmem>>, vector<8x16x16xf32>
    tpu.vector_store %arg15[%c0_76, %c0_77, %c0_78], %64 {strides = array<i32>} : memref<8x16x16xf32, #tpu.memory_space<vmem>>, vector<8x16x16xf32>,
    %c0_79 = arith.constant 0 : index
    %c0_80 = arith.constant 0 : index
    %c0_81 = arith.constant 0 : index
    %66 = tpu.strided_load %arg15[%c0_79, %c0_80, %c0_81] {strides = array<i32: 1, 2, 1>} : memref<8x16x16xf32, #tpu.memory_space<vmem>>, vector<8x8x16xf32>
    %c0_82 = arith.constant 0 : index
    %c1_83 = arith.constant 1 : index
    %c0_84 = arith.constant 0 : index
    %67 = tpu.strided_load %arg15[%c0_82, %c1_83, %c0_84] {strides = array<i32: 1, 2, 1>} : memref<8x16x16xf32, #tpu.memory_space<vmem>>, vector<8x8x16xf32>
    %68 = arith.maximumf %66, %67 : vector<8x8x16xf32>
    %c1_85 = arith.constant 1 : index
    %c1_86 = arith.constant 1 : index
    %c0_87 = arith.constant 0 : index
    %69 = vector.load %arg12[%c1_85, %c1_86, %c0_87] : memref<10x10x16xf32, #tpu.memory_space<vmem>>, vector<8x8x16xf32>
    tpu.vector_store %arg12[%c1_85, %c1_86, %c0_87], %68 {strides = array<i32>} : memref<10x10x16xf32, #tpu.memory_space<vmem>>, vector<8x8x16xf32>,
    %c0_88 = arith.constant 0 : index
    %c0_89 = arith.constant 0 : index
    %c0_90 = arith.constant 0 : index
    %70 = vector.load %arg12[%c0_88, %c0_89, %c0_90] : memref<10x10x16xf32, #tpu.memory_space<vmem>>, vector<8x8x16xf32>
    %71 = vector.shape_cast %70 : vector<8x8x16xf32> to vector<64x16xf32>
    %c0_91 = arith.constant 0 : index
    %c1_92 = arith.constant 1 : index
    %c0_93 = arith.constant 0 : index
    %72 = vector.load %arg12[%c0_91, %c1_92, %c0_93] : memref<10x10x16xf32, #tpu.memory_space<vmem>>, vector<8x8x16xf32>
    %73 = vector.shape_cast %72 : vector<8x8x16xf32> to vector<64x16xf32>
    %c0_94 = arith.constant 0 : index
    %c2_95 = arith.constant 2 : index
    %c0_96 = arith.constant 0 : index
    %74 = vector.load %arg12[%c0_94, %c2_95, %c0_96] : memref<10x10x16xf32, #tpu.memory_space<vmem>>, vector<8x8x16xf32>
    %75 = vector.shape_cast %74 : vector<8x8x16xf32> to vector<64x16xf32>
    %c1_97 = arith.constant 1 : index
    %c0_98 = arith.constant 0 : index
    %c0_99 = arith.constant 0 : index
    %76 = vector.load %arg12[%c1_97, %c0_98, %c0_99] : memref<10x10x16xf32, #tpu.memory_space<vmem>>, vector<8x8x16xf32>
    %77 = vector.shape_cast %76 : vector<8x8x16xf32> to vector<64x16xf32>
    %c1_100 = arith.constant 1 : index
    %c1_101 = arith.constant 1 : index
    %c0_102 = arith.constant 0 : index
    %78 = vector.load %arg12[%c1_100, %c1_101, %c0_102] : memref<10x10x16xf32, #tpu.memory_space<vmem>>, vector<8x8x16xf32>
    %79 = vector.shape_cast %78 : vector<8x8x16xf32> to vector<64x16xf32>
    %c1_103 = arith.constant 1 : index
    %c2_104 = arith.constant 2 : index
    %c0_105 = arith.constant 0 : index
    %80 = vector.load %arg12[%c1_103, %c2_104, %c0_105] : memref<10x10x16xf32, #tpu.memory_space<vmem>>, vector<8x8x16xf32>
    %81 = vector.shape_cast %80 : vector<8x8x16xf32> to vector<64x16xf32>
    %c2_106 = arith.constant 2 : index
    %c0_107 = arith.constant 0 : index
    %c0_108 = arith.constant 0 : index
    %82 = vector.load %arg12[%c2_106, %c0_107, %c0_108] : memref<10x10x16xf32, #tpu.memory_space<vmem>>, vector<8x8x16xf32>
    %83 = vector.shape_cast %82 : vector<8x8x16xf32> to vector<64x16xf32>
    %c2_109 = arith.constant 2 : index
    %c1_110 = arith.constant 1 : index
    %c0_111 = arith.constant 0 : index
    %84 = vector.load %arg12[%c2_109, %c1_110, %c0_111] : memref<10x10x16xf32, #tpu.memory_space<vmem>>, vector<8x8x16xf32>
    %85 = vector.shape_cast %84 : vector<8x8x16xf32> to vector<64x16xf32>
    %c2_112 = arith.constant 2 : index
    %c2_113 = arith.constant 2 : index
    %c0_114 = arith.constant 0 : index
    %86 = vector.load %arg12[%c2_112, %c2_113, %c0_114] : memref<10x10x16xf32, #tpu.memory_space<vmem>>, vector<8x8x16xf32>
    %87 = vector.shape_cast %86 : vector<8x8x16xf32> to vector<64x16xf32>
    %88 = tpu.concatenate %71, %73, %75, %77, %79, %81, %83, %85, %87 in 1 : vector<64x16xf32>, vector<64x16xf32>, vector<64x16xf32>, vector<64x16xf32>, vector<64x16xf32>, vector<64x16xf32>, vector<64x16xf32>, vector<64x16xf32>, vector<64x16xf32> -> vector<64x144xf32>
    %c0_115 = arith.constant 0 : index
    %c0_116 = arith.constant 0 : index
    %89 = vector.load %arg4[%c0_115, %c0_116] : memref<144x32xf32, #tpu.memory_space<vmem>>, vector<144x32xf32>
    %cst_117 = arith.constant dense<0.000000e+00> : vector<64x32xf32>
    %90 = tpu.matmul %88, %89, %cst_117 {dimension_numbers = #tpu.dot_dimension_numbers<[1], [0], [0], [1], [0, 0, 1, 1], [], []>} : vector<64x144xf32>, vector<144x32xf32>, vector<64x32xf32> -> vector<64x32xf32>
    %c0_118 = arith.constant 0 : index
    %c0_119 = arith.constant 0 : index
    %91 = vector.load %arg5[%c0_118, %c0_119] : memref<1x32xf32, #tpu.memory_space<vmem>>, vector<1x32xf32>
    %92 = vector.broadcast %91 : vector<1x32xf32> to vector<64x32xf32>
    %93 = arith.addf %90, %92 : vector<64x32xf32>
    %cst_120 = arith.constant 0.000000e+00 : f32
    %94 = vector.broadcast %cst_120 : f32 to vector<64x32xf32>
    %95 = arith.maximumf %93, %94 : vector<64x32xf32>
    %96 = vector.shape_cast %95 : vector<64x32xf32> to vector<8x8x32xf32>
    %c0_121 = arith.constant 0 : index
    %c0_122 = arith.constant 0 : index
    %c0_123 = arith.constant 0 : index
    %97 = vector.load %arg16[%c0_121, %c0_122, %c0_123] : memref<8x8x32xf32, #tpu.memory_space<vmem>>, vector<8x8x32xf32>
    tpu.vector_store %arg16[%c0_121, %c0_122, %c0_123], %96 {strides = array<i32>} : memref<8x8x32xf32, #tpu.memory_space<vmem>>, vector<8x8x32xf32>,
    %c0_124 = arith.constant 0 : index
    %c0_125 = arith.constant 0 : index
    %c0_126 = arith.constant 0 : index
    %98 = tpu.strided_load %arg16[%c0_124, %c0_125, %c0_126] {strides = array<i32: 2, 1, 1>} : memref<8x8x32xf32, #tpu.memory_space<vmem>>, vector<4x8x32xf32>
    %c1_127 = arith.constant 1 : index
    %c0_128 = arith.constant 0 : index
    %c0_129 = arith.constant 0 : index
    %99 = tpu.strided_load %arg16[%c1_127, %c0_128, %c0_129] {strides = array<i32: 2, 1, 1>} : memref<8x8x32xf32, #tpu.memory_space<vmem>>, vector<4x8x32xf32>
    %100 = arith.maximumf %98, %99 : vector<4x8x32xf32>
    %c0_130 = arith.constant 0 : index
    %c0_131 = arith.constant 0 : index
    %c0_132 = arith.constant 0 : index
    %101 = vector.load %arg17[%c0_130, %c0_131, %c0_132] : memref<4x8x32xf32, #tpu.memory_space<vmem>>, vector<4x8x32xf32>
    tpu.vector_store %arg17[%c0_130, %c0_131, %c0_132], %100 {strides = array<i32>} : memref<4x8x32xf32, #tpu.memory_space<vmem>>, vector<4x8x32xf32>,
    %c0_133 = arith.constant 0 : index
    %c0_134 = arith.constant 0 : index
    %c0_135 = arith.constant 0 : index
    %102 = tpu.strided_load %arg17[%c0_133, %c0_134, %c0_135] {strides = array<i32: 1, 2, 1>} : memref<4x8x32xf32, #tpu.memory_space<vmem>>, vector<4x4x32xf32>
    %c0_136 = arith.constant 0 : index
    %c1_137 = arith.constant 1 : index
    %c0_138 = arith.constant 0 : index
    %103 = tpu.strided_load %arg17[%c0_136, %c1_137, %c0_138] {strides = array<i32: 1, 2, 1>} : memref<4x8x32xf32, #tpu.memory_space<vmem>>, vector<4x4x32xf32>
    %104 = arith.maximumf %102, %103 : vector<4x4x32xf32>
    %c1_139 = arith.constant 1 : index
    %c1_140 = arith.constant 1 : index
    %c0_141 = arith.constant 0 : index
    %105 = vector.load %arg13[%c1_139, %c1_140, %c0_141] : memref<6x6x32xf32, #tpu.memory_space<vmem>>, vector<4x4x32xf32>
    tpu.vector_store %arg13[%c1_139, %c1_140, %c0_141], %104 {strides = array<i32>} : memref<6x6x32xf32, #tpu.memory_space<vmem>>, vector<4x4x32xf32>,
    %c0_142 = arith.constant 0 : index
    %c0_143 = arith.constant 0 : index
    %c0_144 = arith.constant 0 : index
    %106 = vector.load %arg13[%c0_142, %c0_143, %c0_144] : memref<6x6x32xf32, #tpu.memory_space<vmem>>, vector<1x4x32xf32>
    %107 = vector.shape_cast %106 : vector<1x4x32xf32> to vector<4x32xf32>
    %c0_145 = arith.constant 0 : index
    %c1_146 = arith.constant 1 : index
    %c0_147 = arith.constant 0 : index
    %108 = vector.load %arg13[%c0_145, %c1_146, %c0_147] : memref<6x6x32xf32, #tpu.memory_space<vmem>>, vector<1x4x32xf32>
    %109 = vector.shape_cast %108 : vector<1x4x32xf32> to vector<4x32xf32>
    %c0_148 = arith.constant 0 : index
    %c2_149 = arith.constant 2 : index
    %c0_150 = arith.constant 0 : index
    %110 = vector.load %arg13[%c0_148, %c2_149, %c0_150] : memref<6x6x32xf32, #tpu.memory_space<vmem>>, vector<1x4x32xf32>
    %111 = vector.shape_cast %110 : vector<1x4x32xf32> to vector<4x32xf32>
    %c1_151 = arith.constant 1 : index
    %c0_152 = arith.constant 0 : index
    %c0_153 = arith.constant 0 : index
    %112 = vector.load %arg13[%c1_151, %c0_152, %c0_153] : memref<6x6x32xf32, #tpu.memory_space<vmem>>, vector<1x4x32xf32>
    %113 = vector.shape_cast %112 : vector<1x4x32xf32> to vector<4x32xf32>
    %c1_154 = arith.constant 1 : index
    %c1_155 = arith.constant 1 : index
    %c0_156 = arith.constant 0 : index
    %114 = vector.load %arg13[%c1_154, %c1_155, %c0_156] : memref<6x6x32xf32, #tpu.memory_space<vmem>>, vector<1x4x32xf32>
    %115 = vector.shape_cast %114 : vector<1x4x32xf32> to vector<4x32xf32>
    %c1_157 = arith.constant 1 : index
    %c2_158 = arith.constant 2 : index
    %c0_159 = arith.constant 0 : index
    %116 = vector.load %arg13[%c1_157, %c2_158, %c0_159] : memref<6x6x32xf32, #tpu.memory_space<vmem>>, vector<1x4x32xf32>
    %117 = vector.shape_cast %116 : vector<1x4x32xf32> to vector<4x32xf32>
    %c2_160 = arith.constant 2 : index
    %c0_161 = arith.constant 0 : index
    %c0_162 = arith.constant 0 : index
    %118 = vector.load %arg13[%c2_160, %c0_161, %c0_162] : memref<6x6x32xf32, #tpu.memory_space<vmem>>, vector<1x4x32xf32>
    %119 = vector.shape_cast %118 : vector<1x4x32xf32> to vector<4x32xf32>
    %c2_163 = arith.constant 2 : index
    %c1_164 = arith.constant 1 : index
    %c0_165 = arith.constant 0 : index
    %120 = vector.load %arg13[%c2_163, %c1_164, %c0_165] : memref<6x6x32xf32, #tpu.memory_space<vmem>>, vector<1x4x32xf32>
    %121 = vector.shape_cast %120 : vector<1x4x32xf32> to vector<4x32xf32>
    %c2_166 = arith.constant 2 : index
    %c2_167 = arith.constant 2 : index
    %c0_168 = arith.constant 0 : index
    %122 = vector.load %arg13[%c2_166, %c2_167, %c0_168] : memref<6x6x32xf32, #tpu.memory_space<vmem>>, vector<1x4x32xf32>
    %123 = vector.shape_cast %122 : vector<1x4x32xf32> to vector<4x32xf32>
    %124 = tpu.concatenate %107, %109, %111, %113, %115, %117, %119, %121, %123 in 1 : vector<4x32xf32>, vector<4x32xf32>, vector<4x32xf32>, vector<4x32xf32>, vector<4x32xf32>, vector<4x32xf32>, vector<4x32xf32>, vector<4x32xf32>, vector<4x32xf32> -> vector<4x288xf32>
    %c0_169 = arith.constant 0 : index
    %c0_170 = arith.constant 0 : index
    %125 = vector.load %arg18[%c0_169, %c0_170] : memref<16x288xf32, #tpu.memory_space<vmem>>, vector<4x288xf32>
    tpu.vector_store %arg18[%c0_169, %c0_170], %124 {strides = array<i32>} : memref<16x288xf32, #tpu.memory_space<vmem>>, vector<4x288xf32>,
    %c1_171 = arith.constant 1 : index
    %c0_172 = arith.constant 0 : index
    %c0_173 = arith.constant 0 : index
    %126 = vector.load %arg13[%c1_171, %c0_172, %c0_173] : memref<6x6x32xf32, #tpu.memory_space<vmem>>, vector<1x4x32xf32>
    %127 = vector.shape_cast %126 : vector<1x4x32xf32> to vector<4x32xf32>
    %c1_174 = arith.constant 1 : index
    %c1_175 = arith.constant 1 : index
    %c0_176 = arith.constant 0 : index
    %128 = vector.load %arg13[%c1_174, %c1_175, %c0_176] : memref<6x6x32xf32, #tpu.memory_space<vmem>>, vector<1x4x32xf32>
    %129 = vector.shape_cast %128 : vector<1x4x32xf32> to vector<4x32xf32>
    %c1_177 = arith.constant 1 : index
    %c2_178 = arith.constant 2 : index
    %c0_179 = arith.constant 0 : index
    %130 = vector.load %arg13[%c1_177, %c2_178, %c0_179] : memref<6x6x32xf32, #tpu.memory_space<vmem>>, vector<1x4x32xf32>
    %131 = vector.shape_cast %130 : vector<1x4x32xf32> to vector<4x32xf32>
    %c2_180 = arith.constant 2 : index
    %c0_181 = arith.constant 0 : index
    %c0_182 = arith.constant 0 : index
    %132 = vector.load %arg13[%c2_180, %c0_181, %c0_182] : memref<6x6x32xf32, #tpu.memory_space<vmem>>, vector<1x4x32xf32>
    %133 = vector.shape_cast %132 : vector<1x4x32xf32> to vector<4x32xf32>
    %c2_183 = arith.constant 2 : index
    %c1_184 = arith.constant 1 : index
    %c0_185 = arith.constant 0 : index
    %134 = vector.load %arg13[%c2_183, %c1_184, %c0_185] : memref<6x6x32xf32, #tpu.memory_space<vmem>>, vector<1x4x32xf32>
    %135 = vector.shape_cast %134 : vector<1x4x32xf32> to vector<4x32xf32>
    %c2_186 = arith.constant 2 : index
    %c2_187 = arith.constant 2 : index
    %c0_188 = arith.constant 0 : index
    %136 = vector.load %arg13[%c2_186, %c2_187, %c0_188] : memref<6x6x32xf32, #tpu.memory_space<vmem>>, vector<1x4x32xf32>
    %137 = vector.shape_cast %136 : vector<1x4x32xf32> to vector<4x32xf32>
    %c3_189 = arith.constant 3 : index
    %c0_190 = arith.constant 0 : index
    %c0_191 = arith.constant 0 : index
    %138 = vector.load %arg13[%c3_189, %c0_190, %c0_191] : memref<6x6x32xf32, #tpu.memory_space<vmem>>, vector<1x4x32xf32>
    %139 = vector.shape_cast %138 : vector<1x4x32xf32> to vector<4x32xf32>
    %c3_192 = arith.constant 3 : index
    %c1_193 = arith.constant 1 : index
    %c0_194 = arith.constant 0 : index
    %140 = vector.load %arg13[%c3_192, %c1_193, %c0_194] : memref<6x6x32xf32, #tpu.memory_space<vmem>>, vector<1x4x32xf32>
    %141 = vector.shape_cast %140 : vector<1x4x32xf32> to vector<4x32xf32>
    %c3_195 = arith.constant 3 : index
    %c2_196 = arith.constant 2 : index
    %c0_197 = arith.constant 0 : index
    %142 = vector.load %arg13[%c3_195, %c2_196, %c0_197] : memref<6x6x32xf32, #tpu.memory_space<vmem>>, vector<1x4x32xf32>
    %143 = vector.shape_cast %142 : vector<1x4x32xf32> to vector<4x32xf32>
    %144 = tpu.concatenate %127, %129, %131, %133, %135, %137, %139, %141, %143 in 1 : vector<4x32xf32>, vector<4x32xf32>, vector<4x32xf32>, vector<4x32xf32>, vector<4x32xf32>, vector<4x32xf32>, vector<4x32xf32>, vector<4x32xf32>, vector<4x32xf32> -> vector<4x288xf32>
    %c4_198 = arith.constant 4 : index
    %c0_199 = arith.constant 0 : index
    %145 = vector.load %arg18[%c4_198, %c0_199] : memref<16x288xf32, #tpu.memory_space<vmem>>, vector<4x288xf32>
    tpu.vector_store %arg18[%c4_198, %c0_199], %144 {strides = array<i32>} : memref<16x288xf32, #tpu.memory_space<vmem>>, vector<4x288xf32>,
    %c2_200 = arith.constant 2 : index
    %c0_201 = arith.constant 0 : index
    %c0_202 = arith.constant 0 : index
    %146 = vector.load %arg13[%c2_200, %c0_201, %c0_202] : memref<6x6x32xf32, #tpu.memory_space<vmem>>, vector<1x4x32xf32>
    %147 = vector.shape_cast %146 : vector<1x4x32xf32> to vector<4x32xf32>
    %c2_203 = arith.constant 2 : index
    %c1_204 = arith.constant 1 : index
    %c0_205 = arith.constant 0 : index
    %148 = vector.load %arg13[%c2_203, %c1_204, %c0_205] : memref<6x6x32xf32, #tpu.memory_space<vmem>>, vector<1x4x32xf32>
    %149 = vector.shape_cast %148 : vector<1x4x32xf32> to vector<4x32xf32>
    %c2_206 = arith.constant 2 : index
    %c2_207 = arith.constant 2 : index
    %c0_208 = arith.constant 0 : index
    %150 = vector.load %arg13[%c2_206, %c2_207, %c0_208] : memref<6x6x32xf32, #tpu.memory_space<vmem>>, vector<1x4x32xf32>
    %151 = vector.shape_cast %150 : vector<1x4x32xf32> to vector<4x32xf32>
    %c3_209 = arith.constant 3 : index
    %c0_210 = arith.constant 0 : index
    %c0_211 = arith.constant 0 : index
    %152 = vector.load %arg13[%c3_209, %c0_210, %c0_211] : memref<6x6x32xf32, #tpu.memory_space<vmem>>, vector<1x4x32xf32>
    %153 = vector.shape_cast %152 : vector<1x4x32xf32> to vector<4x32xf32>
    %c3_212 = arith.constant 3 : index
    %c1_213 = arith.constant 1 : index
    %c0_214 = arith.constant 0 : index
    %154 = vector.load %arg13[%c3_212, %c1_213, %c0_214] : memref<6x6x32xf32, #tpu.memory_space<vmem>>, vector<1x4x32xf32>
    %155 = vector.shape_cast %154 : vector<1x4x32xf32> to vector<4x32xf32>
    %c3_215 = arith.constant 3 : index
    %c2_216 = arith.constant 2 : index
    %c0_217 = arith.constant 0 : index
    %156 = vector.load %arg13[%c3_215, %c2_216, %c0_217] : memref<6x6x32xf32, #tpu.memory_space<vmem>>, vector<1x4x32xf32>
    %157 = vector.shape_cast %156 : vector<1x4x32xf32> to vector<4x32xf32>
    %c4_218 = arith.constant 4 : index
    %c0_219 = arith.constant 0 : index
    %c0_220 = arith.constant 0 : index
    %158 = vector.load %arg13[%c4_218, %c0_219, %c0_220] : memref<6x6x32xf32, #tpu.memory_space<vmem>>, vector<1x4x32xf32>
    %159 = vector.shape_cast %158 : vector<1x4x32xf32> to vector<4x32xf32>
    %c4_221 = arith.constant 4 : index
    %c1_222 = arith.constant 1 : index
    %c0_223 = arith.constant 0 : index
    %160 = vector.load %arg13[%c4_221, %c1_222, %c0_223] : memref<6x6x32xf32, #tpu.memory_space<vmem>>, vector<1x4x32xf32>
    %161 = vector.shape_cast %160 : vector<1x4x32xf32> to vector<4x32xf32>
    %c4_224 = arith.constant 4 : index
    %c2_225 = arith.constant 2 : index
    %c0_226 = arith.constant 0 : index
    %162 = vector.load %arg13[%c4_224, %c2_225, %c0_226] : memref<6x6x32xf32, #tpu.memory_space<vmem>>, vector<1x4x32xf32>
    %163 = vector.shape_cast %162 : vector<1x4x32xf32> to vector<4x32xf32>
    %164 = tpu.concatenate %147, %149, %151, %153, %155, %157, %159, %161, %163 in 1 : vector<4x32xf32>, vector<4x32xf32>, vector<4x32xf32>, vector<4x32xf32>, vector<4x32xf32>, vector<4x32xf32>, vector<4x32xf32>, vector<4x32xf32>, vector<4x32xf32> -> vector<4x288xf32>
    %c8_227 = arith.constant 8 : index
    %c0_228 = arith.constant 0 : index
    %165 = vector.load %arg18[%c8_227, %c0_228] : memref<16x288xf32, #tpu.memory_space<vmem>>, vector<4x288xf32>
    tpu.vector_store %arg18[%c8_227, %c0_228], %164 {strides = array<i32>} : memref<16x288xf32, #tpu.memory_space<vmem>>, vector<4x288xf32>,
    %c3_229 = arith.constant 3 : index
    %c0_230 = arith.constant 0 : index
    %c0_231 = arith.constant 0 : index
    %166 = vector.load %arg13[%c3_229, %c0_230, %c0_231] : memref<6x6x32xf32, #tpu.memory_space<vmem>>, vector<1x4x32xf32>
    %167 = vector.shape_cast %166 : vector<1x4x32xf32> to vector<4x32xf32>
    %c3_232 = arith.constant 3 : index
    %c1_233 = arith.constant 1 : index
    %c0_234 = arith.constant 0 : index
    %168 = vector.load %arg13[%c3_232, %c1_233, %c0_234] : memref<6x6x32xf32, #tpu.memory_space<vmem>>, vector<1x4x32xf32>
    %169 = vector.shape_cast %168 : vector<1x4x32xf32> to vector<4x32xf32>
    %c3_235 = arith.constant 3 : index
    %c2_236 = arith.constant 2 : index
    %c0_237 = arith.constant 0 : index
    %170 = vector.load %arg13[%c3_235, %c2_236, %c0_237] : memref<6x6x32xf32, #tpu.memory_space<vmem>>, vector<1x4x32xf32>
    %171 = vector.shape_cast %170 : vector<1x4x32xf32> to vector<4x32xf32>
    %c4_238 = arith.constant 4 : index
    %c0_239 = arith.constant 0 : index
    %c0_240 = arith.constant 0 : index
    %172 = vector.load %arg13[%c4_238, %c0_239, %c0_240] : memref<6x6x32xf32, #tpu.memory_space<vmem>>, vector<1x4x32xf32>
    %173 = vector.shape_cast %172 : vector<1x4x32xf32> to vector<4x32xf32>
    %c4_241 = arith.constant 4 : index
    %c1_242 = arith.constant 1 : index
    %c0_243 = arith.constant 0 : index
    %174 = vector.load %arg13[%c4_241, %c1_242, %c0_243] : memref<6x6x32xf32, #tpu.memory_space<vmem>>, vector<1x4x32xf32>
    %175 = vector.shape_cast %174 : vector<1x4x32xf32> to vector<4x32xf32>
    %c4_244 = arith.constant 4 : index
    %c2_245 = arith.constant 2 : index
    %c0_246 = arith.constant 0 : index
    %176 = vector.load %arg13[%c4_244, %c2_245, %c0_246] : memref<6x6x32xf32, #tpu.memory_space<vmem>>, vector<1x4x32xf32>
    %177 = vector.shape_cast %176 : vector<1x4x32xf32> to vector<4x32xf32>
    %c5_247 = arith.constant 5 : index
    %c0_248 = arith.constant 0 : index
    %c0_249 = arith.constant 0 : index
    %178 = vector.load %arg13[%c5_247, %c0_248, %c0_249] : memref<6x6x32xf32, #tpu.memory_space<vmem>>, vector<1x4x32xf32>
    %179 = vector.shape_cast %178 : vector<1x4x32xf32> to vector<4x32xf32>
    %c5_250 = arith.constant 5 : index
    %c1_251 = arith.constant 1 : index
    %c0_252 = arith.constant 0 : index
    %180 = vector.load %arg13[%c5_250, %c1_251, %c0_252] : memref<6x6x32xf32, #tpu.memory_space<vmem>>, vector<1x4x32xf32>
    %181 = vector.shape_cast %180 : vector<1x4x32xf32> to vector<4x32xf32>
    %c5_253 = arith.constant 5 : index
    %c2_254 = arith.constant 2 : index
    %c0_255 = arith.constant 0 : index
    %182 = vector.load %arg13[%c5_253, %c2_254, %c0_255] : memref<6x6x32xf32, #tpu.memory_space<vmem>>, vector<1x4x32xf32>
    %183 = vector.shape_cast %182 : vector<1x4x32xf32> to vector<4x32xf32>
    %184 = tpu.concatenate %167, %169, %171, %173, %175, %177, %179, %181, %183 in 1 : vector<4x32xf32>, vector<4x32xf32>, vector<4x32xf32>, vector<4x32xf32>, vector<4x32xf32>, vector<4x32xf32>, vector<4x32xf32>, vector<4x32xf32>, vector<4x32xf32> -> vector<4x288xf32>
    %c12 = arith.constant 12 : index
    %c0_256 = arith.constant 0 : index
    %185 = vector.load %arg18[%c12, %c0_256] : memref<16x288xf32, #tpu.memory_space<vmem>>, vector<4x288xf32>
    tpu.vector_store %arg18[%c12, %c0_256], %184 {strides = array<i32>} : memref<16x288xf32, #tpu.memory_space<vmem>>, vector<4x288xf32>,
    %c0_257 = arith.constant 0 : index
    %c0_258 = arith.constant 0 : index
    %186 = vector.load %arg18[%c0_257, %c0_258] : memref<16x288xf32, #tpu.memory_space<vmem>>, vector<16x288xf32>
    %c0_259 = arith.constant 0 : index
    %c0_260 = arith.constant 0 : index
    %187 = vector.load %arg6[%c0_259, %c0_260] : memref<288x64xf32, #tpu.memory_space<vmem>>, vector<288x64xf32>
    %cst_261 = arith.constant dense<0.000000e+00> : vector<16x64xf32>
    %188 = tpu.matmul %186, %187, %cst_261 {dimension_numbers = #tpu.dot_dimension_numbers<[1], [0], [0], [1], [0, 0, 1, 1], [], []>} : vector<16x288xf32>, vector<288x64xf32>, vector<16x64xf32> -> vector<16x64xf32>
    %c0_262 = arith.constant 0 : index
    %c0_263 = arith.constant 0 : index
    %189 = vector.load %arg7[%c0_262, %c0_263] : memref<1x64xf32, #tpu.memory_space<vmem>>, vector<1x64xf32>
    %190 = vector.broadcast %189 : vector<1x64xf32> to vector<16x64xf32>
    %191 = arith.addf %188, %190 : vector<16x64xf32>
    %cst_264 = arith.constant 0.000000e+00 : f32
    %192 = vector.broadcast %cst_264 : f32 to vector<16x64xf32>
    %193 = arith.maximumf %191, %192 : vector<16x64xf32>
    %cst_265 = arith.constant dense<0xFF800000> : vector<64xf32>
    %194 = vector.multi_reduction <maximumf>, %193, %cst_265 [0] : vector<16x64xf32> to vector<64xf32>
    %195 = vector.shape_cast %194 : vector<64xf32> to vector<1x64xf32>
    %c0_266 = arith.constant 0 : index
    %c0_267 = arith.constant 0 : index
    %196 = vector.load %arg8[%c0_266, %c0_267] : memref<64x10xf32, #tpu.memory_space<vmem>>, vector<64x10xf32>
    %cst_268 = arith.constant dense<0.000000e+00> : vector<1x10xf32>
    %197 = tpu.matmul %195, %196, %cst_268 {dimension_numbers = #tpu.dot_dimension_numbers<[1], [0], [0], [1], [0, 0, 1, 1], [], []>} : vector<1x64xf32>, vector<64x10xf32>, vector<1x10xf32> -> vector<1x10xf32>
    %c0_269 = arith.constant 0 : index
    %c0_270 = arith.constant 0 : index
    %198 = vector.load %arg9[%c0_269, %c0_270] : memref<1x10xf32, #tpu.memory_space<vmem>>, vector<1x10xf32>
    %199 = arith.addf %197, %198 : vector<1x10xf32>
    %c0_271 = arith.constant 0 : index
    %c0_272 = arith.constant 0 : index
    %c0_273 = arith.constant 0 : index
    %200 = vector.load %arg10[%c0_271, %c0_272, %c0_273] : memref<1x1x10xf32, #tpu.memory_space<vmem>>, vector<1x1x10xf32>
    %201 = vector.shape_cast %200 : vector<1x1x10xf32> to vector<1x10xf32>
    %202 = vector.shape_cast %199 : vector<1x10xf32> to vector<1x1x10xf32>
    tpu.vector_store %arg10[%c0_271, %c0_272, %c0_273], %202 {strides = array<i32>} : memref<1x1x10xf32, #tpu.memory_space<vmem>>, vector<1x1x10xf32>,
    return
  }
  func.func @transform_0(%arg0: i32) -> (i32, i32, i32, i32) {
    %c0_i32 = arith.constant 0 : i32
    %c0_i32_0 = arith.constant 0 : i32
    %c0_i32_1 = arith.constant 0 : i32
    %c0_i32_2 = arith.constant 0 : i32
    return %arg0, %c0_i32, %c0_i32_0, %c0_i32_1 : i32, i32, i32, i32
  }
  func.func @transform_1(%arg0: i32) -> (i32, i32) {
    %c0_i32 = arith.constant 0 : i32
    %c0_i32_0 = arith.constant 0 : i32
    %c0_i32_1 = arith.constant 0 : i32
    return %c0_i32, %c0_i32_0 : i32, i32
  }
  func.func @transform_2(%arg0: i32) -> (i32, i32) {
    %c0_i32 = arith.constant 0 : i32
    %c0_i32_0 = arith.constant 0 : i32
    %c0_i32_1 = arith.constant 0 : i32
    return %c0_i32, %c0_i32_0 : i32, i32
  }
  func.func @transform_3(%arg0: i32) -> (i32, i32) {
    %c0_i32 = arith.constant 0 : i32
    %c0_i32_0 = arith.constant 0 : i32
    %c0_i32_1 = arith.constant 0 : i32
    return %c0_i32, %c0_i32_0 : i32, i32
  }
  func.func @transform_4(%arg0: i32) -> (i32, i32) {
    %c0_i32 = arith.constant 0 : i32
    %c0_i32_0 = arith.constant 0 : i32
    %c0_i32_1 = arith.constant 0 : i32
    return %c0_i32, %c0_i32_0 : i32, i32
  }
  func.func @transform_5(%arg0: i32) -> (i32, i32) {
    %c0_i32 = arith.constant 0 : i32
    %c0_i32_0 = arith.constant 0 : i32
    %c0_i32_1 = arith.constant 0 : i32
    return %c0_i32, %c0_i32_0 : i32, i32
  }
  func.func @transform_6(%arg0: i32) -> (i32, i32) {
    %c0_i32 = arith.constant 0 : i32
    %c0_i32_0 = arith.constant 0 : i32
    %c0_i32_1 = arith.constant 0 : i32
    return %c0_i32, %c0_i32_0 : i32, i32
  }
  func.func @transform_7(%arg0: i32) -> (i32, i32) {
    %c0_i32 = arith.constant 0 : i32
    %c0_i32_0 = arith.constant 0 : i32
    %c0_i32_1 = arith.constant 0 : i32
    return %c0_i32, %c0_i32_0 : i32, i32
  }
  func.func @transform_8(%arg0: i32) -> (i32, i32) {
    %c0_i32 = arith.constant 0 : i32
    %c0_i32_0 = arith.constant 0 : i32
    %c0_i32_1 = arith.constant 0 : i32
    return %c0_i32, %c0_i32_0 : i32, i32
  }
  func.func @transform_9(%arg0: i32) -> (i32, i32, i32) {
    %c0_i32 = arith.constant 0 : i32
    %c0_i32_0 = arith.constant 0 : i32
    %c0_i32_1 = arith.constant 0 : i32
    return %arg0, %c0_i32, %c0_i32_0 : i32, i32, i32
  }
}

</mosaic_0001>

<llo_original>
// kernel: net_forward.1
$region0: #{net_forward.1}
  #allocation0 [shape = 'u32[]', space=smem, size = 0x4, offset = 0x4, fixed_abs, tag = 'smem constant byte address 0x4 - core index']
  #allocation1 [shape = 'u32[144,128]{1,0:T(1,128)}', space=vmem, size = 0x12000, scoped, tag = 'internal scratch']
  #allocation2 [shape = 'f32[18,18,1]{2,1,0:T(8,128)}', space=vmem, size = 0x36000, scoped, tag = 'scratch operand']
  #allocation3 [shape = 'f32[10,10,16]{2,1,0:T(8,128)}', space=vmem, size = 0x14000, scoped, tag = 'scratch operand']
  #allocation4 [shape = 'f32[6,6,32]{2,1,0:T(8,128)}', space=vmem, size = 0x6000, scoped, tag = 'scratch operand']
  #allocation5 [shape = 'f32[16,16,16]{2,1,0:T(8,128)}', space=vmem, size = 0x20000, scoped, tag = 'scratch operand']
  #allocation6 [shape = 'f32[8,16,16]{2,1,0:T(8,128)}', space=vmem, size = 0x10000, scoped, tag = 'scratch operand']
  #allocation7 [shape = 'f32[8,8,32]{2,1,0:T(8,128)}', space=vmem, size = 0x8000, scoped, tag = 'scratch operand']
  #allocation8 [shape = 'f32[4,8,32]{2,1,0:T(8,128)}', space=vmem, size = 0x4000, scoped, tag = 'scratch operand']
  #allocation9 [shape = 'f32[16,288]{1,0:T(8,128)}', space=vmem, size = 0x6000, scoped, tag = 'scratch operand']
  %s0 = inlined_call_operand.vmem [shape: f32[2,16,16,1], index: 0, kind: input, shape index: {}]
  %s1 = inlined_call_operand.vmem [shape: f32[9,16], index: 1, kind: input, shape index: {}]
  %s2 = inlined_call_operand.vmem [shape: f32[1,16], index: 2, kind: input, shape index: {}]
  %s3 = inlined_call_operand.vmem [shape: f32[144,32], index: 3, kind: input, shape index: {}]
  %s4 = inlined_call_operand.vmem [shape: f32[1,32], index: 4, kind: input, shape index: {}]
  %s5 = inlined_call_operand.vmem [shape: f32[288,64], index: 5, kind: input, shape index: {}]
  %s6 = inlined_call_operand.vmem [shape: f32[1,64], index: 6, kind: input, shape index: {}]
  %s7 = inlined_call_operand.vmem [shape: f32[64,10], index: 7, kind: input, shape index: {}]
  %s8 = inlined_call_operand.vmem [shape: f32[1,10], index: 8, kind: input, shape index: {}]
  %s9 = inlined_call_operand.hbm [shape: f32[2,1,10], index: 9, kind: output, shape index: {}]
  %s10 = sld [smem:[#allocation0]]
  $region69: #{net_forward.1} parent=0
    _
  %s12 = ssub.s32 1, %s10
  %s13 = scalar_select 0, %s12, %s10
  $region1: #{net_forward.1} parent=0
    #allocation10 [shape = 'u8[1024]{0}', space=vmem, size = 0x400, scoped, tag = 'output window, operand 0']
    #allocation11 [shape = 's32[2]{0}', space=sflag, size = 0x8, scoped, tag = 'scoped memory for net_forward.1']
    %14 = vsyncpa [#allocation11], 0
    %s15 = scalar_lea.sflag [#allocation11], 1
    %16 = vsyncpa %s15, 0
    loop: start=0, step=1, limit=4
    $region2: #{net_forward.1} parent=1 // loop_pre_header
      _
    $region3: #{net_forward.1} parent=1 // loop_header
      %s18 = sphi 0, %s22
      %p19 = scmp.ge.s32.totalorder %s18, 4
      %s28 = sphi 0, %s30
      %s31 = sphi 0, %s28
      %s32 = sphi 0, %s31
      %s48 = sphi 0, %s32
      %s52 = sphi 0, %s52
      %s54 = sphi 0, %s52
      %s55 = sphi 0, %s54
      %s69 = sphi 0, %s55
      %s73 = sphi 0, %s73
      %s75 = sphi 0, %s73
      %s76 = sphi 0, %s75
      %s90 = sphi 0, %s76
      %s94 = sphi 0, %s94
      %s96 = sphi 0, %s94
      %s97 = sphi 0, %s96
      %s111 = sphi 0, %s97
      %s115 = sphi 0, %s115
      %s117 = sphi 0, %s115
      %s118 = sphi 0, %s117
      %s132 = sphi 0, %s118
      %s136 = sphi 0, %s136
      %s138 = sphi 0, %s136
      %s139 = sphi 0, %s138
      %s153 = sphi 0, %s139
      %s157 = sphi 0, %s157
      %s159 = sphi 0, %s157
      %s160 = sphi 0, %s159
      %s174 = sphi 0, %s160
      %s178 = sphi 0, %s178
      %s180 = sphi 0, %s178
      %s181 = sphi 0, %s180
      %s195 = sphi 0, %s181
      %s199 = sphi 0, %s199
      %s201 = sphi 0, %s199
      %s202 = sphi 0, %s201
      %s216 = sphi 0, %s202
      %s222 = sphi 0, %s224
      %s225 = sphi 0, %s222
      %s226 = sphi 0, %s225
      %s242 = sphi 0, %s226
    $region4: #{net_forward.1} parent=1 // loop_header_branch
      %21 = sbr.rel (%p19) target = $region8
    $region5: #{net_forward.1} parent=1 // loop_body
      %s23 = ssub.s32 %s18, 1
      %s24 = ssub.s32 %s18, 2
      %s25 = sadd.s32 %s18, 1
      %s26 = ssub.s32 %s18, %s25
      %p27 = scmp.eq.s32.totalorder %s26, 0
      %s29 = sadd.s32 %s28, 1
      %s30 = scalar_select %p27, %s28, %s29
      %p33 = pneg %p27
      %p34 = scmp.eq.s32.totalorder %s18, 1
      %p35 = por %p33, %p34
      %p36 = scmp.ne.s32.totalorder %s28, %s31
      %p37 = scmp.eq.s32.totalorder %s18, 0
      %p38 = por %p36, %p37
      %p39 = scmp.ne.s32.totalorder %s28, %s31
      %p40 = scmp.eq.s32.totalorder %s23, 1
      %p41 = por %p39, %p40
      %p42 = scmp.ne.s32.totalorder %s31, %s32
      %p43 = scmp.eq.s32.totalorder %s23, 0
      %p44 = por %p42, %p43
      %p45 = scmp.ne.s32.totalorder %s31, %s32
      %p46 = scmp.eq.s32.totalorder %s24, 1
      %p47 = por %p45, %p46
      %p49 = scmp.ne.s32.totalorder %s32, %s48
      %p50 = scmp.eq.s32.totalorder %s24, 0
      %p51 = por %p49, %p50
      %s53 = sadd.s32 %s52, 1
      %p56 = scmp.eq.s32.totalorder %s18, 1
      %p57 = scmp.ne.s32.totalorder %s52, %s54
      %p58 = scmp.eq.s32.totalorder %s18, 0
      %p59 = por %p57, %p58
      %p60 = scmp.ne.s32.totalorder %s52, %s54
      %p61 = scmp.eq.s32.totalorder %s23, 1
      %p62 = por %p60, %p61
      %p63 = scmp.ne.s32.totalorder %s54, %s55
      %p64 = scmp.eq.s32.totalorder %s23, 0
      %p65 = por %p63, %p64
      %p66 = scmp.ne.s32.totalorder %s54, %s55
      %p67 = scmp.eq.s32.totalorder %s24, 1
      %p68 = por %p66, %p67
      %p70 = scmp.ne.s32.totalorder %s55, %s69
      %p71 = scmp.eq.s32.totalorder %s24, 0
      %p72 = por %p70, %p71
      %s74 = sadd.s32 %s73, 1
      %p77 = scmp.eq.s32.totalorder %s18, 1
      %p78 = scmp.ne.s32.totalorder %s73, %s75
      %p79 = scmp.eq.s32.totalorder %s18, 0
      %p80 = por %p78, %p79
      %p81 = scmp.ne.s32.totalorder %s73, %s75
      %p82 = scmp.eq.s32.totalorder %s23, 1
      %p83 = por %p81, %p82
      %p84 = scmp.ne.s32.totalorder %s75, %s76
      %p85 = scmp.eq.s32.totalorder %s23, 0
      %p86 = por %p84, %p85
      %p87 = scmp.ne.s32.totalorder %s75, %s76
      %p88 = scmp.eq.s32.totalorder %s24, 1
      %p89 = por %p87, %p88
      %p91 = scmp.ne.s32.totalorder %s76, %s90
      %p92 = scmp.eq.s32.totalorder %s24, 0
      %p93 = por %p91, %p92
      %s95 = sadd.s32 %s94, 1
      %p98 = scmp.eq.s32.totalorder %s18, 1
      %p99 = scmp.ne.s32.totalorder %s94, %s96
      %p100 = scmp.eq.s32.totalorder %s18, 0
      %p101 = por %p99, %p100
      %p102 = scmp.ne.s32.totalorder %s94, %s96
      %p103 = scmp.eq.s32.totalorder %s23, 1
      %p104 = por %p102, %p103
      %p105 = scmp.ne.s32.totalorder %s96, %s97
      %p106 = scmp.eq.s32.totalorder %s23, 0
      %p107 = por %p105, %p106
      %p108 = scmp.ne.s32.totalorder %s96, %s97
      %p109 = scmp.eq.s32.totalorder %s24, 1
      %p110 = por %p108, %p109
      %p112 = scmp.ne.s32.totalorder %s97, %s111
      %p113 = scmp.eq.s32.totalorder %s24, 0
      %p114 = por %p112, %p113
      %s116 = sadd.s32 %s115, 1
      %p119 = scmp.eq.s32.totalorder %s18, 1
      %p120 = scmp.ne.s32.totalorder %s115, %s117
      %p121 = scmp.eq.s32.totalorder %s18, 0
      %p122 = por %p120, %p121
      %p123 = scmp.ne.s32.totalorder %s115, %s117
      %p124 = scmp.eq.s32.totalorder %s23, 1
      %p125 = por %p123, %p124
      %p126 = scmp.ne.s32.totalorder %s117, %s118
      %p127 = scmp.eq.s32.totalorder %s23, 0
      %p128 = por %p126, %p127
      %p129 = scmp.ne.s32.totalorder %s117, %s118
      %p130 = scmp.eq.s32.totalorder %s24, 1
      %p131 = por %p129, %p130
      %p133 = scmp.ne.s32.totalorder %s118, %s132
      %p134 = scmp.eq.s32.totalorder %s24, 0
      %p135 = por %p133, %p134
      %s137 = sadd.s32 %s136, 1
      %p140 = scmp.eq.s32.totalorder %s18, 1
      %p141 = scmp.ne.s32.totalorder %s136, %s138
      %p142 = scmp.eq.s32.totalorder %s18, 0
      %p143 = por %p141, %p142
      %p144 = scmp.ne.s32.totalorder %s136, %s138
      %p145 = scmp.eq.s32.totalorder %s23, 1
      %p146 = por %p144, %p145
      %p147 = scmp.ne.s32.totalorder %s138, %s139
      %p148 = scmp.eq.s32.totalorder %s23, 0
      %p149 = por %p147, %p148
      %p150 = scmp.ne.s32.totalorder %s138, %s139
      %p151 = scmp.eq.s32.totalorder %s24, 1
      %p152 = por %p150, %p151
      %p154 = scmp.ne.s32.totalorder %s139, %s153
      %p155 = scmp.eq.s32.totalorder %s24, 0
      %p156 = por %p154, %p155
      %s158 = sadd.s32 %s157, 1
      %p161 = scmp.eq.s32.totalorder %s18, 1
      %p162 = scmp.ne.s32.totalorder %s157, %s159
      %p163 = scmp.eq.s32.totalorder %s18, 0
      %p164 = por %p162, %p163
      %p165 = scmp.ne.s32.totalorder %s157, %s159
      %p166 = scmp.eq.s32.totalorder %s23, 1
      %p167 = por %p165, %p166
      %p168 = scmp.ne.s32.totalorder %s159, %s160
      %p169 = scmp.eq.s32.totalorder %s23, 0
      %p170 = por %p168, %p169
      %p171 = scmp.ne.s32.totalorder %s159, %s160
      %p172 = scmp.eq.s32.totalorder %s24, 1
      %p173 = por %p171, %p172
      %p175 = scmp.ne.s32.totalorder %s160, %s174
      %p176 = scmp.eq.s32.totalorder %s24, 0
      %p177 = por %p175, %p176
      %s179 = sadd.s32 %s178, 1
      %p182 = scmp.eq.s32.totalorder %s18, 1
      %p183 = scmp.ne.s32.totalorder %s178, %s180
      %p184 = scmp.eq.s32.totalorder %s18, 0
      %p185 = por %p183, %p184
      %p186 = scmp.ne.s32.totalorder %s178, %s180
      %p187 = scmp.eq.s32.totalorder %s23, 1
      %p188 = por %p186, %p187
      %p189 = scmp.ne.s32.totalorder %s180, %s181
      %p190 = scmp.eq.s32.totalorder %s23, 0
      %p191 = por %p189, %p190
      %p192 = scmp.ne.s32.totalorder %s180, %s181
      %p193 = scmp.eq.s32.totalorder %s24, 1
      %p194 = por %p192, %p193
      %p196 = scmp.ne.s32.totalorder %s181, %s195
      %p197 = scmp.eq.s32.totalorder %s24, 0
      %p198 = por %p196, %p197
      %s200 = sadd.s32 %s199, 1
      %p203 = scmp.eq.s32.totalorder %s18, 1
      %p204 = scmp.ne.s32.totalorder %s199, %s201
      %p205 = scmp.eq.s32.totalorder %s18, 0
      %p206 = por %p204, %p205
      %p207 = scmp.ne.s32.totalorder %s199, %s201
      %p208 = scmp.eq.s32.totalorder %s23, 1
      %p209 = por %p207, %p208
      %p210 = scmp.ne.s32.totalorder %s201, %s202
      %p211 = scmp.eq.s32.totalorder %s23, 0
      %p212 = por %p210, %p211
      %p213 = scmp.ne.s32.totalorder %s201, %s202
      %p214 = scmp.eq.s32.totalorder %s24, 1
      %p215 = por %p213, %p214
      %p217 = scmp.ne.s32.totalorder %s202, %s216
      %p218 = scmp.eq.s32.totalorder %s24, 0
      %p219 = por %p217, %p218
      %s220 = ssub.s32 %s18, %s25
      %p221 = scmp.eq.s32.totalorder %s220, 0
      %s223 = sadd.s32 %s222, 1
      %s224 = scalar_select %p221, %s222, %s223
      %p227 = pneg %p221
      %p228 = scmp.eq.s32.totalorder %s18, 1
      %p229 = por %p227, %p228
      %p230 = scmp.ne.s32.totalorder %s222, %s225
      %p231 = scmp.eq.s32.totalorder %s18, 0
      %p232 = por %p230, %p231
      %p233 = scmp.ne.s32.totalorder %s222, %s225
      %p234 = scmp.eq.s32.totalorder %s23, 1
      %p235 = por %p233, %p234
      %p236 = scmp.ne.s32.totalorder %s225, %s226
      %p237 = scmp.eq.s32.totalorder %s23, 0
      %p238 = por %p236, %p237
      %p239 = scmp.ne.s32.totalorder %s225, %s226
      %p240 = scmp.eq.s32.totalorder %s24, 1
      %p241 = por %p239, %p240
      %p243 = scmp.ne.s32.totalorder %s226, %s242
      %p244 = scmp.eq.s32.totalorder %s24, 0
      %p245 = por %p243, %p244
      %p246 = scmp.le.s32.totalorder 1, %s18
      %p247 = scmp.lt.s32.totalorder %s18, 3
      %p248 = pnand %p246, %p247
      %p249 = pneg %p248
      // Predicated region
      $region9: #{net_forward.1} parent=5 // pred_check
        _
      $region10: #{net_forward.1} parent=5 // pred_check_branch
        %251 = sbr.rel (%p248) target = $region12
      $region11: #{net_forward.1} parent=5 // pred_region
        %s252 = ssub.s32 %s18, 1
        // Predicated region
        $region13: #{net_forward.1} parent=11 // pred_check
          %p253 = pneg %p65
        $region14: #{net_forward.1} parent=11 // pred_check_branch
          %255 = sbr.rel (%p253) target = $region16
        $region15: #{net_forward.1} parent=11 // pred_region
          _
        $region16: #{net_forward.1} parent=11 // pred_fallthru
          _
        // Predicated region
        $region17: #{net_forward.1} parent=11 // pred_check
          %p256 = pneg %p86
        $region18: #{net_forward.1} parent=11 // pred_check_branch
          %258 = sbr.rel (%p256) target = $region20
        $region19: #{net_forward.1} parent=11 // pred_region
          _
        $region20: #{net_forward.1} parent=11 // pred_fallthru
          _
        // Predicated region
        $region21: #{net_forward.1} parent=11 // pred_check
          %p259 = pneg %p107
        $region22: #{net_forward.1} parent=11 // pred_check_branch
          %261 = sbr.rel (%p259) target = $region24
        $region23: #{net_forward.1} parent=11 // pred_region
          _
        $region24: #{net_forward.1} parent=11 // pred_fallthru
          _
        // Predicated region
        $region25: #{net_forward.1} parent=11 // pred_check
          %p262 = pneg %p128
        $region26: #{net_forward.1} parent=11 // pred_check_branch
          %264 = sbr.rel (%p262) target = $region28
        $region27: #{net_forward.1} parent=11 // pred_region
          _
        $region28: #{net_forward.1} parent=11 // pred_fallthru
          _
        // Predicated region
        $region29: #{net_forward.1} parent=11 // pred_check
          %p265 = pneg %p149
        $region30: #{net_forward.1} parent=11 // pred_check_branch
          %267 = sbr.rel (%p265) target = $region32
        $region31: #{net_forward.1} parent=11 // pred_region
          _
        $region32: #{net_forward.1} parent=11 // pred_fallthru
          _
        // Predicated region
        $region33: #{net_forward.1} parent=11 // pred_check
          %p268 = pneg %p170
        $region34: #{net_forward.1} parent=11 // pred_check_branch
          %270 = sbr.rel (%p268) target = $region36
        $region35: #{net_forward.1} parent=11 // pred_region
          _
        $region36: #{net_forward.1} parent=11 // pred_fallthru
          _
        // Predicated region
        $region37: #{net_forward.1} parent=11 // pred_check
          %p271 = pneg %p191
        $region38: #{net_forward.1} parent=11 // pred_check_branch
          %273 = sbr.rel (%p271) target = $region40
        $region39: #{net_forward.1} parent=11 // pred_region
          _
        $region40: #{net_forward.1} parent=11 // pred_fallthru
          _
        // Predicated region
        $region41: #{net_forward.1} parent=11 // pred_check
          %p274 = pneg %p212
        $region42: #{net_forward.1} parent=11 // pred_check_branch
          %276 = sbr.rel (%p274) target = $region44
        $region43: #{net_forward.1} parent=11 // pred_region
          _
        $region44: #{net_forward.1} parent=11 // pred_fallthru
          _
      $region12: #{net_forward.1} parent=5 // pred_fallthru
        _
      %p277 = scmp.lt.s32.totalorder %s18, 2
      // Predicated region
      $region45: #{net_forward.1} parent=5 // pred_check
        %p278 = pneg %p277
      $region46: #{net_forward.1} parent=5 // pred_check_branch
        %280 = sbr.rel (%p278) target = $region48
      $region47: #{net_forward.1} parent=5 // pred_region
        // Predicated region
        $region49: #{net_forward.1} parent=47 // pred_check
          %p281 = pneg %p38
        $region50: #{net_forward.1} parent=47 // pred_check_branch
          %283 = sbr.rel (%p281) target = $region52
        $region51: #{net_forward.1} parent=47 // pred_region
          %p284 = scmp.lt.s32.totalorder %s18, 1
          %s285 = scalar_select %p284, %s18, 1
          %s286 = smul.addr %s285, 32
          %s287 = smul.addr %s286, 8
          %s288 = scalar_lea.vmem %s0, %s287
        $region52: #{net_forward.1} parent=47 // pred_fallthru
          _
      $region48: #{net_forward.1} parent=5 // pred_fallthru
        _
      %p289 = scmp.le.s32.totalorder 1, %s18
      %p290 = scmp.lt.s32.totalorder %s18, 3
      %p291 = pnand %p289, %p290
      %p292 = pneg %p291
      // Predicated region
      $region53: #{net_forward.1} parent=5 // pred_check
        _
      $region54: #{net_forward.1} parent=5 // pred_check_branch
        %294 = sbr.rel (%p291) target = $region56
      $region55: #{net_forward.1} parent=5 // pred_region
        %s295 = ssub.s32 %s18, 1
        %p296 = scmp.lt.s32.totalorder %s23, 1
        %s297 = scalar_select %p296, %s23, 1
        %s298 = smul.addr %s297, 32
        %s299 = smul.addr %s298, 8
        %s300 = scalar_lea.vmem %s0, %s299
        %p301 = pneg %p44
        %p302 = pneg %p41
        %p303 = pneg %p65
        %p304 = pneg %p62
        %p305 = pneg %p86
        %p306 = pneg %p83
        %p307 = pneg %p107
        %p308 = pneg %p104
        %p309 = pneg %p128
        %p310 = pneg %p125
        %p311 = pneg %p149
        %p312 = pneg %p146
        %p313 = pneg %p170
        %p314 = pneg %p167
        %p315 = pneg %p191
        %p316 = pneg %p188
        %p317 = pneg %p212
        %p318 = pneg %p209
        %p319 = pneg %p238
        %p320 = pneg %p235
        %s321 = sand.u32 %s225, 1
        %s322 = scalar_lea.sflag [#allocation11], %s321
        %s323 = sand.u32 %s225, 1
        %s324 = scalar_lea.vmem [#allocation10], %s323
        %p325 = scmp.lt.s32.totalorder %s23, 1
        %s326 = scalar_select %p325, %s23, 1
        %s327 = smul.addr %s326, 32
        %s328 = smul.addr %s327, 8
        %s329 = scalar_lea.vmem %s0, %s328
        %vm330 = vcmask 7168
        %331 = vst.msk [vmem:[#allocation2] sm:$0xff] %vm330, 0.0
        %332 = vst.msk [vmem:[#allocation2 + $0x8] sm:$0xff] %vm330, 0.0
        %vm333 = vcmask 1024
        %334 = vst.msk [vmem:[#allocation2 + $0x10] sm:$0x3] %vm333, 0.0
        %335 = vst.msk [vmem:[#allocation2 + $0x18] sm:$0xff] %vm330, 0.0
        %336 = vst.msk [vmem:[#allocation2 + $0x20] sm:$0xff] %vm330, 0.0
        %337 = vst.msk [vmem:[#allocation2 + $0x28] sm:$0x3] %vm333, 0.0
        %338 = vst.msk [vmem:[#allocation2 + $0x30] sm:$0xff] %vm330, 0.0
        %339 = vst.msk [vmem:[#allocation2 + $0x38] sm:$0xff] %vm330, 0.0
        %340 = vst.msk [vmem:[#allocation2 + $0x40] sm:$0x3] %vm333, 0.0
        %341 = vst.msk [vmem:[#allocation2 + $0x48] sm:$0xff] %vm330, 0.0
        %342 = vst.msk [vmem:[#allocation2 + $0x50] sm:$0xff] %vm330, 0.0
        %343 = vst.msk [vmem:[#allocation2 + $0x58] sm:$0x3] %vm333, 0.0
        %344 = vst.msk [vmem:[#allocation2 + $0x60] sm:$0xff] %vm330, 0.0
        %345 = vst.msk [vmem:[#allocation2 + $0x68] sm:$0xff] %vm330, 0.0
        %346 = vst.msk [vmem:[#allocation2 + $0x70] sm:$0x3] %vm333, 0.0
        %347 = vst.msk [vmem:[#allocation2 + $0x78] sm:$0xff] %vm330, 0.0
        %348 = vst.msk [vmem:[#allocation2 + $0x80] sm:$0xff] %vm330, 0.0
        %349 = vst.msk [vmem:[#allocation2 + $0x88] sm:$0x3] %vm333, 0.0
        %350 = vst.msk [vmem:[#allocation2 + $0x90] sm:$0xff] %vm330, 0.0
        %351 = vst.msk [vmem:[#allocation2 + $0x98] sm:$0xff] %vm330, 0.0
        %352 = vst.msk [vmem:[#allocation2 + $0xa0] sm:$0x3] %vm333, 0.0
        %353 = vst.msk [vmem:[#allocation2 + $0xa8] sm:$0xff] %vm330, 0.0
        %354 = vst.msk [vmem:[#allocation2 + $0xb0] sm:$0xff] %vm330, 0.0
        %355 = vst.msk [vmem:[#allocation2 + $0xb8] sm:$0x3] %vm333, 0.0
        %356 = vst.msk [vmem:[#allocation2 + $0xc0] sm:$0xff] %vm330, 0.0
        %357 = vst.msk [vmem:[#allocation2 + $0xc8] sm:$0xff] %vm330, 0.0
        %358 = vst.msk [vmem:[#allocation2 + $0xd0] sm:$0x3] %vm333, 0.0
        %359 = vst.msk [vmem:[#allocation2 + $0xd8] sm:$0xff] %vm330, 0.0
        %360 = vst.msk [vmem:[#allocation2 + $0xe0] sm:$0xff] %vm330, 0.0
        %361 = vst.msk [vmem:[#allocation2 + $0xe8] sm:$0x3] %vm333, 0.0
        %362 = vst.msk [vmem:[#allocation2 + $0xf0] sm:$0xff] %vm330, 0.0
        %363 = vst.msk [vmem:[#allocation2 + $0xf8] sm:$0xff] %vm330, 0.0
        %364 = vst.msk [vmem:[#allocation2 + $0x100] sm:$0x3] %vm333, 0.0
        %365 = vst.msk [vmem:[#allocation2 + $0x108] sm:$0xff] %vm330, 0.0
        %366 = vst.msk [vmem:[#allocation2 + $0x110] sm:$0xff] %vm330, 0.0
        %367 = vst.msk [vmem:[#allocation2 + $0x118] sm:$0x3] %vm333, 0.0
        %368 = vst.msk [vmem:[#allocation2 + $0x120] sm:$0xff] %vm330, 0.0
        %369 = vst.msk [vmem:[#allocation2 + $0x128] sm:$0xff] %vm330, 0.0
        %370 = vst.msk [vmem:[#allocation2 + $0x130] sm:$0x3] %vm333, 0.0
        %371 = vst.msk [vmem:[#allocation2 + $0x138] sm:$0xff] %vm330, 0.0
        %372 = vst.msk [vmem:[#allocation2 + $0x140] sm:$0xff] %vm330, 0.0
        %373 = vst.msk [vmem:[#allocation2 + $0x148] sm:$0x3] %vm333, 0.0
        %374 = vst.msk [vmem:[#allocation2 + $0x150] sm:$0xff] %vm330, 0.0
        %375 = vst.msk [vmem:[#allocation2 + $0x158] sm:$0xff] %vm330, 0.0
        %376 = vst.msk [vmem:[#allocation2 + $0x160] sm:$0x3] %vm333, 0.0
        %377 = vst.msk [vmem:[#allocation2 + $0x168] sm:$0xff] %vm330, 0.0
        %378 = vst.msk [vmem:[#allocation2 + $0x170] sm:$0xff] %vm330, 0.0
        %379 = vst.msk [vmem:[#allocation2 + $0x178] sm:$0x3] %vm333, 0.0
        %380 = vst.msk [vmem:[#allocation2 + $0x180] sm:$0xff] %vm330, 0.0
        %381 = vst.msk [vmem:[#allocation2 + $0x188] sm:$0xff] %vm330, 0.0
        %382 = vst.msk [vmem:[#allocation2 + $0x190] sm:$0x3] %vm333, 0.0
        %383 = vst.msk [vmem:[#allocation2 + $0x198] sm:$0xff] %vm330, 0.0
        %384 = vst.msk [vmem:[#allocation2 + $0x1a0] sm:$0xff] %vm330, 0.0
        %385 = vst.msk [vmem:[#allocation2 + $0x1a8] sm:$0x3] %vm333, 0.0
        %vm386 = vcmask 130048
        %387 = vst.msk [vmem:[#allocation3] sm:$0xff] %vm386, 0.0
        %vm388 = vcmask 123904
        %389 = vst.msk [vmem:[#allocation3 + $0x8] sm:$0x3] %vm388, 0.0
        %390 = vst.msk [vmem:[#allocation3 + $0x10] sm:$0xff] %vm386, 0.0
        %391 = vst.msk [vmem:[#allocation3 + $0x18] sm:$0x3] %vm388, 0.0
        %392 = vst.msk [vmem:[#allocation3 + $0x20] sm:$0xff] %vm386, 0.0
        %393 = vst.msk [vmem:[#allocation3 + $0x28] sm:$0x3] %vm388, 0.0
        %394 = vst.msk [vmem:[#allocation3 + $0x30] sm:$0xff] %vm386, 0.0
        %395 = vst.msk [vmem:[#allocation3 + $0x38] sm:$0x3] %vm388, 0.0
        %396 = vst.msk [vmem:[#allocation3 + $0x40] sm:$0xff] %vm386, 0.0
        %397 = vst.msk [vmem:[#allocation3 + $0x48] sm:$0x3] %vm388, 0.0
        %398 = vst.msk [vmem:[#allocation3 + $0x50] sm:$0xff] %vm386, 0.0
        %399 = vst.msk [vmem:[#allocation3 + $0x58] sm:$0x3] %vm388, 0.0
        %400 = vst.msk [vmem:[#allocation3 + $0x60] sm:$0xff] %vm386, 0.0
        %401 = vst.msk [vmem:[#allocation3 + $0x68] sm:$0x3] %vm388, 0.0
        %402 = vst.msk [vmem:[#allocation3 + $0x70] sm:$0xff] %vm386, 0.0
        %403 = vst.msk [vmem:[#allocation3 + $0x78] sm:$0x3] %vm388, 0.0
        %404 = vst.msk [vmem:[#allocation3 + $0x80] sm:$0xff] %vm386, 0.0
        %405 = vst.msk [vmem:[#allocation3 + $0x88] sm:$0x3] %vm388, 0.0
        %406 = vst.msk [vmem:[#allocation3 + $0x90] sm:$0xff] %vm386, 0.0
        %407 = vst.msk [vmem:[#allocation3 + $0x98] sm:$0x3] %vm388, 0.0
        %vm408 = vcmask 259072
        %409 = vst.msk [vmem:[#allocation4] sm:$0x3f] %vm408, 0.0
        %410 = vst.msk [vmem:[#allocation4 + $0x8] sm:$0x3f] %vm408, 0.0
        %411 = vst.msk [vmem:[#allocation4 + $0x10] sm:$0x3f] %vm408, 0.0
        %412 = vst.msk [vmem:[#allocation4 + $0x18] sm:$0x3f] %vm408, 0.0
        %413 = vst.msk [vmem:[#allocation4 + $0x20] sm:$0x3f] %vm408, 0.0
        %414 = vst.msk [vmem:[#allocation4 + $0x28] sm:$0x3f] %vm408, 0.0
        %v415 = vld [vmem:[%s329] sm:$0xff]
        %v416 = vld [vmem:[%s329 + $0x8] sm:$0xff]
        %v417 = vld [vmem:[%s329 + $0x10] sm:$0xff]
        %v418 = vld [vmem:[%s329 + $0x18] sm:$0xff]
        %v419 = vld [vmem:[%s329 + $0x20] sm:$0xff]
        %v420 = vld [vmem:[%s329 + $0x28] sm:$0xff]
        %v421 = vld [vmem:[%s329 + $0x30] sm:$0xff]
        %v422 = vld [vmem:[%s329 + $0x38] sm:$0xff]
        %v423 = vld [vmem:[%s329 + $0x40] sm:$0xff]
        %v424 = vld [vmem:[%s329 + $0x48] sm:$0xff]
        %v425 = vld [vmem:[%s329 + $0x50] sm:$0xff]
        %v426 = vld [vmem:[%s329 + $0x58] sm:$0xff]
        %v427 = vld [vmem:[%s329 + $0x60] sm:$0xff]
        %v428 = vld [vmem:[%s329 + $0x68] sm:$0xff]
        %v429 = vld [vmem:[%s329 + $0x70] sm:$0xff]
        %v430 = vld [vmem:[%s329 + $0x78] sm:$0xff]
        %v431 = vld [vmem:[%s329 + $0x80] sm:$0xff]
        %v432 = vld [vmem:[%s329 + $0x88] sm:$0xff]
        %v433 = vld [vmem:[%s329 + $0x90] sm:$0xff]
        %v434 = vld [vmem:[%s329 + $0x98] sm:$0xff]
        %v435 = vld [vmem:[%s329 + $0xa0] sm:$0xff]
        %v436 = vld [vmem:[%s329 + $0xa8] sm:$0xff]
        %v437 = vld [vmem:[%s329 + $0xb0] sm:$0xff]
        %v438 = vld [vmem:[%s329 + $0xb8] sm:$0xff]
        %v439 = vld [vmem:[%s329 + $0xc0] sm:$0xff]
        %v440 = vld [vmem:[%s329 + $0xc8] sm:$0xff]
        %v441 = vld [vmem:[%s329 + $0xd0] sm:$0xff]
        %v442 = vld [vmem:[%s329 + $0xd8] sm:$0xff]
        %v443 = vld [vmem:[%s329 + $0xe0] sm:$0xff]
        %v444 = vld [vmem:[%s329 + $0xe8] sm:$0xff]
        %v445 = vld [vmem:[%s329 + $0xf0] sm:$0xff]
        %v446 = vld [vmem:[%s329 + $0xf8] sm:$0xff]
        %s447 = scalar_lea.vmem [#allocation2], 24
        %448 = vst.msk [vmem:[%s447 + $0x1] sm:$0xff] %vm330, %v415
        %449 = vst.msk [vmem:[%s447 + $0x9] sm:$0xff] %vm330, %v416
        %450 = vst.msk [vmem:[%s447 + $0x19] sm:$0xff] %vm330, %v417
        %451 = vst.msk [vmem:[%s447 + $0x21] sm:$0xff] %vm330, %v418
        %452 = vst.msk [vmem:[%s447 + $0x31] sm:$0xff] %vm330, %v419
        %453 = vst.msk [vmem:[%s447 + $0x39] sm:$0xff] %vm330, %v420
        %454 = vst.msk [vmem:[%s447 + $0x49] sm:$0xff] %vm330, %v421
        %455 = vst.msk [vmem:[%s447 + $0x51] sm:$0xff] %vm330, %v422
        %456 = vst.msk [vmem:[%s447 + $0x61] sm:$0xff] %vm330, %v423
        %457 = vst.msk [vmem:[%s447 + $0x69] sm:$0xff] %vm330, %v424
        %458 = vst.msk [vmem:[%s447 + $0x79] sm:$0xff] %vm330, %v425
        %459 = vst.msk [vmem:[%s447 + $0x81] sm:$0xff] %vm330, %v426
        %460 = vst.msk [vmem:[%s447 + $0x91] sm:$0xff] %vm330, %v427
        %461 = vst.msk [vmem:[%s447 + $0x99] sm:$0xff] %vm330, %v428
        %462 = vst.msk [vmem:[%s447 + $0xa9] sm:$0xff] %vm330, %v429
        %463 = vst.msk [vmem:[%s447 + $0xb1] sm:$0xff] %vm330, %v430
        %464 = vst.msk [vmem:[%s447 + $0xc1] sm:$0xff] %vm330, %v431
        %465 = vst.msk [vmem:[%s447 + $0xc9] sm:$0xff] %vm330, %v432
        %466 = vst.msk [vmem:[%s447 + $0xd9] sm:$0xff] %vm330, %v433
        %467 = vst.msk [vmem:[%s447 + $0xe1] sm:$0xff] %vm330, %v434
        %468 = vst.msk [vmem:[%s447 + $0xf1] sm:$0xff] %vm330, %v435
        %469 = vst.msk [vmem:[%s447 + $0xf9] sm:$0xff] %vm330, %v436
        %470 = vst.msk [vmem:[%s447 + $0x109] sm:$0xff] %vm330, %v437
        %471 = vst.msk [vmem:[%s447 + $0x111] sm:$0xff] %vm330, %v438
        %472 = vst.msk [vmem:[%s447 + $0x121] sm:$0xff] %vm330, %v439
        %473 = vst.msk [vmem:[%s447 + $0x129] sm:$0xff] %vm330, %v440
        %474 = vst.msk [vmem:[%s447 + $0x139] sm:$0xff] %vm330, %v441
        %475 = vst.msk [vmem:[%s447 + $0x141] sm:$0xff] %vm330, %v442
        %476 = vst.msk [vmem:[%s447 + $0x151] sm:$0xff] %vm330, %v443
        %477 = vst.msk [vmem:[%s447 + $0x159] sm:$0xff] %vm330, %v444
        %478 = vst.msk [vmem:[%s447 + $0x169] sm:$0xff] %vm330, %v445
        %479 = vst.msk [vmem:[%s447 + $0x171] sm:$0xff] %vm330, %v446
        %v480 = vld [vmem:[%s2] sm:$0x1]
        %v481 = vld [vmem:[#allocation2] sm:$0xff]
        %v482 = vld [vmem:[#allocation2 + $0x8] sm:$0xff]
        %v483 = vld [vmem:[#allocation2 + $0x18] sm:$0xff]
        %v484 = vld [vmem:[#allocation2 + $0x20] sm:$0xff]
        %v485 = vld [vmem:[#allocation2 + $0x30] sm:$0xff]
        %v486 = vld [vmem:[#allocation2 + $0x38] sm:$0xff]
        %v487 = vld [vmem:[#allocation2 + $0x48] sm:$0xff]
        %v488 = vld [vmem:[#allocation2 + $0x50] sm:$0xff]
        %v489 = vld [vmem:[#allocation2 + $0x60] sm:$0xff]
        %v490 = vld [vmem:[#allocation2 + $0x68] sm:$0xff]
        %v491 = vld [vmem:[#allocation2 + $0x78] sm:$0xff]
        %v492 = vld [vmem:[#allocation2 + $0x80] sm:$0xff]
        %v493 = vld [vmem:[#allocation2 + $0x90] sm:$0xff]
        %v494 = vld [vmem:[#allocation2 + $0x98] sm:$0xff]
        %v495 = vld [vmem:[#allocation2 + $0xa8] sm:$0xff]
        %v496 = vld [vmem:[#allocation2 + $0xb0] sm:$0xff]
        %v497 = vld [vmem:[#allocation2 + $0xc0] sm:$0xff]
        %v498 = vld [vmem:[#allocation2 + $0xc8] sm:$0xff]
        %v499 = vld [vmem:[#allocation2 + $0xd8] sm:$0xff]
        %v500 = vld [vmem:[#allocation2 + $0xe0] sm:$0xff]
        %v501 = vld [vmem:[#allocation2 + $0xf0] sm:$0xff]
        %v502 = vld [vmem:[#allocation2 + $0xf8] sm:$0xff]
        %v503 = vld [vmem:[#allocation2 + $0x108] sm:$0xff]
        %v504 = vld [vmem:[#allocation2 + $0x110] sm:$0xff]
        %v505 = vld [vmem:[#allocation2 + $0x120] sm:$0xff]
        %v506 = vld [vmem:[#allocation2 + $0x128] sm:$0xff]
        %v507 = vld [vmem:[#allocation2 + $0x138] sm:$0xff]
        %v508 = vld [vmem:[#allocation2 + $0x140] sm:$0xff]
        %v509 = vld [vmem:[#allocation2 + $0x150] sm:$0xff]
        %v510 = vld [vmem:[#allocation2 + $0x158] sm:$0xff]
        %v511 = vld [vmem:[#allocation2 + $0x168] sm:$0xff]
        %v512 = vld [vmem:[#allocation2 + $0x170] sm:$0xff]
        %v513 = vld [vmem:[%s1] sm:$0x1]
        %v514 = vld [vmem:[#allocation2 + $0x1] sm:$0xff]
        %v515 = vld [vmem:[#allocation2 + $0x9] sm:$0xff]
        %v516 = vld [vmem:[#allocation2 + $0x19] sm:$0xff]
        %v517 = vld [vmem:[#allocation2 + $0x21] sm:$0xff]
        %v518 = vld [vmem:[#allocation2 + $0x31] sm:$0xff]
        %v519 = vld [vmem:[#allocation2 + $0x39] sm:$0xff]
        %v520 = vld [vmem:[#allocation2 + $0x49] sm:$0xff]
        %v521 = vld [vmem:[#allocation2 + $0x51] sm:$0xff]
        %v522 = vld [vmem:[#allocation2 + $0x61] sm:$0xff]
        %v523 = vld [vmem:[#allocation2 + $0x69] sm:$0xff]
        %v524 = vld [vmem:[#allocation2 + $0x79] sm:$0xff]
        %v525 = vld [vmem:[#allocation2 + $0x81] sm:$0xff]
        %v526 = vld [vmem:[#allocation2 + $0x91] sm:$0xff]
        %v527 = vld [vmem:[#allocation2 + $0x99] sm:$0xff]
        %v528 = vld [vmem:[#allocation2 + $0xa9] sm:$0xff]
        %v529 = vld [vmem:[#allocation2 + $0xb1] sm:$0xff]
        %v530 = vld [vmem:[#allocation2 + $0xc1] sm:$0xff]
        %v531 = vld [vmem:[#allocation2 + $0xc9] sm:$0xff]
        %v532 = vld [vmem:[#allocation2 + $0xd9] sm:$0xff]
        %v533 = vld [vmem:[#allocation2 + $0xe1] sm:$0xff]
        %v534 = vld [vmem:[#allocation2 + $0xf1] sm:$0xff]
        %v535 = vld [vmem:[#allocation2 + $0xf9] sm:$0xff]
        %v536 = vld [vmem:[#allocation2 + $0x109] sm:$0xff]
        %v537 = vld [vmem:[#allocation2 + $0x111] sm:$0xff]
        %v538 = vld [vmem:[#allocation2 + $0x121] sm:$0xff]
        %v539 = vld [vmem:[#allocation2 + $0x129] sm:$0xff]
        %v540 = vld [vmem:[#allocation2 + $0x139] sm:$0xff]
        %v541 = vld [vmem:[#allocation2 + $0x141] sm:$0xff]
        %v542 = vld [vmem:[#allocation2 + $0x151] sm:$0xff]
        %v543 = vld [vmem:[#allocation2 + $0x159] sm:$0xff]
        %v544 = vld [vmem:[#allocation2 + $0x169] sm:$0xff]
        %v545 = vld [vmem:[#allocation2 + $0x171] sm:$0xff]
        %v546 = vld [vmem:[%s1 + $0x1] sm:$0x1]
        %v548 = vsel %vm330, %v514, 0
        %v551 = vsel %vm330, %v515, 0
        %v554 = vsel %vm330, %v516, 0
        %v557 = vsel %vm330, %v517, 0
        %v560 = vsel %vm330, %v518, 0
        %v563 = vsel %vm330, %v519, 0
        %v566 = vsel %vm330, %v520, 0
        %v569 = vsel %vm330, %v521, 0
        %v572 = vsel %vm330, %v522, 0
        %v575 = vsel %vm330, %v523, 0
        %v578 = vsel %vm330, %v524, 0
        %v581 = vsel %vm330, %v525, 0
        %v584 = vsel %vm330, %v526, 0
        %v587 = vsel %vm330, %v527, 0
        %v590 = vsel %vm330, %v528, 0
        %v593 = vsel %vm330, %v529, 0
        %v596 = vsel %vm330, %v530, 0
        %v599 = vsel %vm330, %v531, 0
        %v602 = vsel %vm330, %v532, 0
        %v605 = vsel %vm330, %v533, 0
        %v608 = vsel %vm330, %v534, 0
        %v611 = vsel %vm330, %v535, 0
        %v614 = vsel %vm330, %v536, 0
        %v617 = vsel %vm330, %v537, 0
        %v620 = vsel %vm330, %v538, 0
        %v623 = vsel %vm330, %v539, 0
        %v626 = vsel %vm330, %v540, 0
        %v629 = vsel %vm330, %v541, 0
        %v632 = vsel %vm330, %v542, 0
        %v635 = vsel %vm330, %v543, 0
        %v638 = vsel %vm330, %v544, 0
        %v641 = vsel %vm330, %v545, 0
        %vm643 = vcmask 1040384
        %v645 = vsel %vm643, %v546, 0
        %647 = vmatprep.subr.mxu0 0.0
        %648 = vmatpush1.msra.mxu0 0.0
        %649 = vmatprep.subr.mxu0 0.0
        %650 = vmatpush1.msra.mxu0 0.0
        %651 = vmatprep.subr.mxu0 0.0
        %652 = vmatpush1.msra.mxu0 0.0
        %653 = vmatprep.subr.mxu0 0.0
        %654 = vmatpush1.msra.mxu0 0.0
        %655 = vmatprep.subr.mxu0 0.0
        %656 = vmatpush1.msra.mxu0 0.0
        %657 = vmatprep.subr.mxu0 0.0
        %658 = vmatpush1.msra.mxu0 0.0
        %659 = vmatprep.subr.mxu0 0.0
        %660 = vmatpush1.msra.mxu0 0.0
        %661 = vmatprep.subr.mxu0 0.0
        %662 = vmatpush1.msra.mxu0 0.0
        %663 = vmatprep.subr.mxu0 0.0
        %664 = vmatpush1.msra.mxu0 0.0
        %665 = vmatprep.subr.mxu0 0.0
        %666 = vmatpush1.msra.mxu0 0.0
        %667 = vmatprep.subr.mxu0 0.0
        %668 = vmatpush1.msra.mxu0 0.0
        %669 = vmatprep.subr.mxu0 0.0
        %670 = vmatpush1.msra.mxu0 0.0
        %671 = vmatprep.subr.mxu0 0.0
        %672 = vmatpush1.msra.mxu0 0.0
        %673 = vmatprep.subr.mxu0 0.0
        %674 = vmatpush1.msra.mxu0 0.0
        %675 = vmatprep.subr.mxu0 0.0
        %676 = vmatpush1.msra.mxu0 0.0
        %677 = vmatprep.subr.mxu0 0.0
        %678 = vmatpush1.msra.mxu0 %v645
        %679 = vmatprep.subr.mxu0 0.0
        %680 = vmatpush2.msra.mxu0 0.0
        %681 = vmatprep.subr.mxu0 0.0
        %682 = vmatpush2.msra.mxu0 0.0
        %683 = vmatprep.subr.mxu0 0.0
        %684 = vmatpush2.msra.mxu0 0.0
        %685 = vmatprep.subr.mxu0 0.0
        %686 = vmatpush2.msra.mxu0 0.0
        %687 = vmatprep.subr.mxu0 0.0
        %688 = vmatpush2.msra.mxu0 0.0
        %689 = vmatprep.subr.mxu0 0.0
        %690 = vmatpush2.msra.mxu0 0.0
        %691 = vmatprep.subr.mxu0 0.0
        %692 = vmatpush2.msra.mxu0 0.0
        %693 = vmatprep.subr.mxu0 0.0
        %694 = vmatpush2.msra.mxu0 0.0
        %695 = vmatprep.subr.mxu0 0.0
        %696 = vmatpush2.msra.mxu0 0.0
        %697 = vmatprep.subr.mxu0 0.0
        %698 = vmatpush2.msra.mxu0 0.0
        %699 = vmatprep.subr.mxu0 0.0
        %700 = vmatpush2.msra.mxu0 0.0
        %701 = vmatprep.subr.mxu0 0.0
        %702 = vmatpush2.msra.mxu0 0.0
        %703 = vmatprep.subr.mxu0 0.0
        %704 = vmatpush2.msra.mxu0 0.0
        %705 = vmatprep.subr.mxu0 0.0
        %706 = vmatpush2.msra.mxu0 0.0
        %707 = vmatprep.subr.mxu0 0.0
        %708 = vmatpush2.msra.mxu0 0.0
        %709 = vmatprep.subr.mxu0 0.0
        %710 = vmatpush2.msra.mxu0 0.0
        %711 = vmatprep.mubr.f32.mxu0 0.0
        %712 = vmatmul.mubr.f32.gmra.mxu0 %v548
        %v713 = vpop.f32.mrf.mxu0
        %v714 = vadd.f32 0.0, %v713
        %v715 = vpop.f32.mrf.mxu0
        %716 = vmatprep.mubr.f32.mxu0 0.0
        %717 = vmatmul.mubr.f32.gmra.mxu0 %v551
        %v718 = vpop.f32.mrf.mxu0
        %v719 = vadd.f32 0.0, %v718
        %v720 = vpop.f32.mrf.mxu0
        %721 = vmatprep.mubr.f32.mxu0 0.0
        %722 = vmatmul.mubr.f32.gmra.mxu0 %v554
        %v723 = vpop.f32.mrf.mxu0
        %v724 = vadd.f32 0.0, %v723
        %v725 = vpop.f32.mrf.mxu0
        %726 = vmatprep.mubr.f32.mxu0 0.0
        %727 = vmatmul.mubr.f32.gmra.mxu0 %v557
        %v728 = vpop.f32.mrf.mxu0
        %v729 = vadd.f32 0.0, %v728
        %v730 = vpop.f32.mrf.mxu0
        %731 = vmatprep.mubr.f32.mxu0 0.0
        %732 = vmatmul.mubr.f32.gmra.mxu0 %v560
        %v733 = vpop.f32.mrf.mxu0
        %v734 = vadd.f32 0.0, %v733
        %v735 = vpop.f32.mrf.mxu0
        %736 = vmatprep.mubr.f32.mxu0 0.0
        %737 = vmatmul.mubr.f32.gmra.mxu0 %v563
        %v738 = vpop.f32.mrf.mxu0
        %v739 = vadd.f32 0.0, %v738
        %v740 = vpop.f32.mrf.mxu0
        %741 = vmatprep.mubr.f32.mxu0 0.0
        %742 = vmatmul.mubr.f32.gmra.mxu0 %v566
        %v743 = vpop.f32.mrf.mxu0
        %v744 = vadd.f32 0.0, %v743
        %v745 = vpop.f32.mrf.mxu0
        %746 = vmatprep.mubr.f32.mxu0 0.0
        %747 = vmatmul.mubr.f32.gmra.mxu0 %v569
        %v748 = vpop.f32.mrf.mxu0
        %v749 = vadd.f32 0.0, %v748
        %v750 = vpop.f32.mrf.mxu0
        %751 = vmatprep.mubr.f32.mxu0 0.0
        %752 = vmatmul.mubr.f32.gmra.mxu0 %v572
        %v753 = vpop.f32.mrf.mxu0
        %v754 = vadd.f32 0.0, %v753
        %v755 = vpop.f32.mrf.mxu0
        %756 = vmatprep.mubr.f32.mxu0 0.0
        %757 = vmatmul.mubr.f32.gmra.mxu0 %v575
        %v758 = vpop.f32.mrf.mxu0
        %v759 = vadd.f32 0.0, %v758
        %v760 = vpop.f32.mrf.mxu0
        %761 = vmatprep.mubr.f32.mxu0 0.0
        %762 = vmatmul.mubr.f32.gmra.mxu0 %v578
        %v763 = vpop.f32.mrf.mxu0
        %v764 = vadd.f32 0.0, %v763
        %v765 = vpop.f32.mrf.mxu0
        %766 = vmatprep.mubr.f32.mxu0 0.0
        %767 = vmatmul.mubr.f32.gmra.mxu0 %v581
        %v768 = vpop.f32.mrf.mxu0
        %v769 = vadd.f32 0.0, %v768
        %v770 = vpop.f32.mrf.mxu0
        %771 = vmatprep.mubr.f32.mxu0 0.0
        %772 = vmatmul.mubr.f32.gmra.mxu0 %v584
        %v773 = vpop.f32.mrf.mxu0
        %v774 = vadd.f32 0.0, %v773
        %v775 = vpop.f32.mrf.mxu0
        %776 = vmatprep.mubr.f32.mxu0 0.0
        %777 = vmatmul.mubr.f32.gmra.mxu0 %v587
        %v778 = vpop.f32.mrf.mxu0
        %v779 = vadd.f32 0.0, %v778
        %v780 = vpop.f32.mrf.mxu0
        %781 = vmatprep.mubr.f32.mxu0 0.0
        %782 = vmatmul.mubr.f32.gmra.mxu0 %v590
        %v783 = vpop.f32.mrf.mxu0
        %v784 = vadd.f32 0.0, %v783
        %v785 = vpop.f32.mrf.mxu0
        %786 = vmatprep.mubr.f32.mxu0 0.0
        %787 = vmatmul.mubr.f32.gmra.mxu0 %v593
        %v788 = vpop.f32.mrf.mxu0
        %v789 = vadd.f32 0.0, %v788
        %v790 = vpop.f32.mrf.mxu0
        %791 = vmatprep.mubr.f32.mxu0 0.0
        %792 = vmatmul.mubr.f32.gmra.mxu0 %v596
        %v793 = vpop.f32.mrf.mxu0
        %v794 = vadd.f32 0.0, %v793
        %v795 = vpop.f32.mrf.mxu0
        %796 = vmatprep.mubr.f32.mxu0 0.0
        %797 = vmatmul.mubr.f32.gmra.mxu0 %v599
        %v798 = vpop.f32.mrf.mxu0
        %v799 = vadd.f32 0.0, %v798
        %v800 = vpop.f32.mrf.mxu0
        %801 = vmatprep.mubr.f32.mxu0 0.0
        %802 = vmatmul.mubr.f32.gmra.mxu0 %v602
        %v803 = vpop.f32.mrf.mxu0
        %v804 = vadd.f32 0.0, %v803
        %v805 = vpop.f32.mrf.mxu0
        %806 = vmatprep.mubr.f32.mxu0 0.0
        %807 = vmatmul.mubr.f32.gmra.mxu0 %v605
        %v808 = vpop.f32.mrf.mxu0
        %v809 = vadd.f32 0.0, %v808
        %v810 = vpop.f32.mrf.mxu0
        %811 = vmatprep.mubr.f32.mxu0 0.0
        %812 = vmatmul.mubr.f32.gmra.mxu0 %v608
        %v813 = vpop.f32.mrf.mxu0
        %v814 = vadd.f32 0.0, %v813
        %v815 = vpop.f32.mrf.mxu0
        %816 = vmatprep.mubr.f32.mxu0 0.0
        %817 = vmatmul.mubr.f32.gmra.mxu0 %v611
        %v818 = vpop.f32.mrf.mxu0
        %v819 = vadd.f32 0.0, %v818
        %v820 = vpop.f32.mrf.mxu0
        %821 = vmatprep.mubr.f32.mxu0 0.0
        %822 = vmatmul.mubr.f32.gmra.mxu0 %v614
        %v823 = vpop.f32.mrf.mxu0
        %v824 = vadd.f32 0.0, %v823
        %v825 = vpop.f32.mrf.mxu0
        %826 = vmatprep.mubr.f32.mxu0 0.0
        %827 = vmatmul.mubr.f32.gmra.mxu0 %v617
        %v828 = vpop.f32.mrf.mxu0
        %v829 = vadd.f32 0.0, %v828
        %v830 = vpop.f32.mrf.mxu0
        %831 = vmatprep.mubr.f32.mxu0 0.0
        %832 = vmatmul.mubr.f32.gmra.mxu0 %v620
        %v833 = vpop.f32.mrf.mxu0
        %v834 = vadd.f32 0.0, %v833
        %v835 = vpop.f32.mrf.mxu0
        %836 = vmatprep.mubr.f32.mxu0 0.0
        %837 = vmatmul.mubr.f32.gmra.mxu0 %v623
        %v838 = vpop.f32.mrf.mxu0
        %v839 = vadd.f32 0.0, %v838
        %v840 = vpop.f32.mrf.mxu0
        %841 = vmatprep.mubr.f32.mxu0 0.0
        %842 = vmatmul.mubr.f32.gmra.mxu0 %v626
        %v843 = vpop.f32.mrf.mxu0
        %v844 = vadd.f32 0.0, %v843
        %v845 = vpop.f32.mrf.mxu0
        %846 = vmatprep.mubr.f32.mxu0 0.0
        %847 = vmatmul.mubr.f32.gmra.mxu0 %v629
        %v848 = vpop.f32.mrf.mxu0
        %v849 = vadd.f32 0.0, %v848
        %v850 = vpop.f32.mrf.mxu0
        %851 = vmatprep.mubr.f32.mxu0 0.0
        %852 = vmatmul.mubr.f32.gmra.mxu0 %v632
        %v853 = vpop.f32.mrf.mxu0
        %v854 = vadd.f32 0.0, %v853
        %v855 = vpop.f32.mrf.mxu0
        %856 = vmatprep.mubr.f32.mxu0 0.0
        %857 = vmatmul.mubr.f32.gmra.mxu0 %v635
        %v858 = vpop.f32.mrf.mxu0
        %v859 = vadd.f32 0.0, %v858
        %v860 = vpop.f32.mrf.mxu0
        %861 = vmatprep.mubr.f32.mxu0 0.0
        %862 = vmatmul.mubr.f32.gmra.mxu0 %v638
        %v863 = vpop.f32.mrf.mxu0
        %v864 = vadd.f32 0.0, %v863
        %v865 = vpop.f32.mrf.mxu0
        %866 = vmatprep.mubr.f32.mxu0 0.0
        %867 = vmatmul.mubr.f32.gmra.mxu0 %v641
        %v868 = vpop.f32.mrf.mxu0
        %v869 = vadd.f32 0.0, %v868
        %v870 = vpop.f32.mrf.mxu0
        %871 = vdwg.mxu0
        %v873 = vsel %vm330, %v481, 0
        %v876 = vsel %vm330, %v482, 0
        %v879 = vsel %vm330, %v483, 0
        %v882 = vsel %vm330, %v484, 0
        %v885 = vsel %vm330, %v485, 0
        %v888 = vsel %vm330, %v486, 0
        %v891 = vsel %vm330, %v487, 0
        %v894 = vsel %vm330, %v488, 0
        %v897 = vsel %vm330, %v489, 0
        %v900 = vsel %vm330, %v490, 0
        %v903 = vsel %vm330, %v491, 0
        %v906 = vsel %vm330, %v492, 0
        %v909 = vsel %vm330, %v493, 0
        %v912 = vsel %vm330, %v494, 0
        %v915 = vsel %vm330, %v495, 0
        %v918 = vsel %vm330, %v496, 0
        %v921 = vsel %vm330, %v497, 0
        %v924 = vsel %vm330, %v498, 0
        %v927 = vsel %vm330, %v499, 0
        %v930 = vsel %vm330, %v500, 0
        %v933 = vsel %vm330, %v501, 0
        %v936 = vsel %vm330, %v502, 0
        %v939 = vsel %vm330, %v503, 0
        %v942 = vsel %vm330, %v504, 0
        %v945 = vsel %vm330, %v505, 0
        %v948 = vsel %vm330, %v506, 0
        %v951 = vsel %vm330, %v507, 0
        %v954 = vsel %vm330, %v508, 0
        %v957 = vsel %vm330, %v509, 0
        %v960 = vsel %vm330, %v510, 0
        %v963 = vsel %vm330, %v511, 0
        %v966 = vsel %vm330, %v512, 0
        %v969 = vsel %vm643, %v513, 0
        %971 = vmatprep.subr.mxu0 0.0
        %972 = vmatpush1.msra.mxu0 0.0
        %973 = vmatprep.subr.mxu0 0.0
        %974 = vmatpush1.msra.mxu0 0.0
        %975 = vmatprep.subr.mxu0 0.0
        %976 = vmatpush1.msra.mxu0 0.0
        %977 = vmatprep.subr.mxu0 0.0
        %978 = vmatpush1.msra.mxu0 0.0
        %979 = vmatprep.subr.mxu0 0.0
        %980 = vmatpush1.msra.mxu0 0.0
        %981 = vmatprep.subr.mxu0 0.0
        %982 = vmatpush1.msra.mxu0 0.0
        %983 = vmatprep.subr.mxu0 0.0
        %984 = vmatpush1.msra.mxu0 0.0
        %985 = vmatprep.subr.mxu0 0.0
        %986 = vmatpush1.msra.mxu0 0.0
        %987 = vmatprep.subr.mxu0 0.0
        %988 = vmatpush1.msra.mxu0 0.0
        %989 = vmatprep.subr.mxu0 0.0
        %990 = vmatpush1.msra.mxu0 0.0
        %991 = vmatprep.subr.mxu0 0.0
        %992 = vmatpush1.msra.mxu0 0.0
        %993 = vmatprep.subr.mxu0 0.0
        %994 = vmatpush1.msra.mxu0 0.0
        %995 = vmatprep.subr.mxu0 0.0
        %996 = vmatpush1.msra.mxu0 0.0
        %997 = vmatprep.subr.mxu0 0.0
        %998 = vmatpush1.msra.mxu0 0.0
        %999 = vmatprep.subr.mxu0 0.0
        %1000 = vmatpush1.msra.mxu0 0.0
        %1001 = vmatprep.subr.mxu0 0.0
        %1002 = vmatpush1.msra.mxu0 %v969
        %1003 = vmatprep.subr.mxu0 0.0
        %1004 = vmatpush2.msra.mxu0 0.0
        %1005 = vmatprep.subr.mxu0 0.0
        %1006 = vmatpush2.msra.mxu0 0.0
        %1007 = vmatprep.subr.mxu0 0.0
        %1008 = vmatpush2.msra.mxu0 0.0
        %1009 = vmatprep.subr.mxu0 0.0
        %1010 = vmatpush2.msra.mxu0 0.0
        %1011 = vmatprep.subr.mxu0 0.0
        %1012 = vmatpush2.msra.mxu0 0.0
        %1013 = vmatprep.subr.mxu0 0.0
        %1014 = vmatpush2.msra.mxu0 0.0
        %1015 = vmatprep.subr.mxu0 0.0
        %1016 = vmatpush2.msra.mxu0 0.0
        %1017 = vmatprep.subr.mxu0 0.0
        %1018 = vmatpush2.msra.mxu0 0.0
        %1019 = vmatprep.subr.mxu0 0.0
        %1020 = vmatpush2.msra.mxu0 0.0
        %1021 = vmatprep.subr.mxu0 0.0
        %1022 = vmatpush2.msra.mxu0 0.0
        %1023 = vmatprep.subr.mxu0 0.0
        %1024 = vmatpush2.msra.mxu0 0.0
        %1025 = vmatprep.subr.mxu0 0.0
        %1026 = vmatpush2.msra.mxu0 0.0
        %1027 = vmatprep.subr.mxu0 0.0
        %1028 = vmatpush2.msra.mxu0 0.0
        %1029 = vmatprep.subr.mxu0 0.0
        %1030 = vmatpush2.msra.mxu0 0.0
        %1031 = vmatprep.subr.mxu0 0.0
        %1032 = vmatpush2.msra.mxu0 0.0
        %1033 = vmatprep.subr.mxu0 0.0
        %1034 = vmatpush2.msra.mxu0 0.0
        %1035 = vmatprep.mubr.f32.mxu0 0.0
        %1036 = vmatmul.mubr.f32.gmra.mxu0 %v873
        %v1037 = vpop.f32.mrf.mxu0
        %v1038 = vadd.f32 %v714, %v1037
        %v1039 = vpop.f32.mrf.mxu0
        %1040 = vmatprep.mubr.f32.mxu0 0.0
        %1041 = vmatmul.mubr.f32.gmra.mxu0 %v876
        %v1042 = vpop.f32.mrf.mxu0
        %v1043 = vadd.f32 %v719, %v1042
        %v1044 = vpop.f32.mrf.mxu0
        %1045 = vmatprep.mubr.f32.mxu0 0.0
        %1046 = vmatmul.mubr.f32.gmra.mxu0 %v879
        %v1047 = vpop.f32.mrf.mxu0
        %v1048 = vadd.f32 %v724, %v1047
        %v1049 = vpop.f32.mrf.mxu0
        %1050 = vmatprep.mubr.f32.mxu0 0.0
        %1051 = vmatmul.mubr.f32.gmra.mxu0 %v882
        %v1052 = vpop.f32.mrf.mxu0
        %v1053 = vadd.f32 %v729, %v1052
        %v1054 = vpop.f32.mrf.mxu0
        %1055 = vmatprep.mubr.f32.mxu0 0.0
        %1056 = vmatmul.mubr.f32.gmra.mxu0 %v885
        %v1057 = vpop.f32.mrf.mxu0
        %v1058 = vadd.f32 %v734, %v1057
        %v1059 = vpop.f32.mrf.mxu0
        %1060 = vmatprep.mubr.f32.mxu0 0.0
        %1061 = vmatmul.mubr.f32.gmra.mxu0 %v888
        %v1062 = vpop.f32.mrf.mxu0
        %v1063 = vadd.f32 %v739, %v1062
        %v1064 = vpop.f32.mrf.mxu0
        %1065 = vmatprep.mubr.f32.mxu0 0.0
        %1066 = vmatmul.mubr.f32.gmra.mxu0 %v891
        %v1067 = vpop.f32.mrf.mxu0
        %v1068 = vadd.f32 %v744, %v1067
        %v1069 = vpop.f32.mrf.mxu0
        %1070 = vmatprep.mubr.f32.mxu0 0.0
        %1071 = vmatmul.mubr.f32.gmra.mxu0 %v894
        %v1072 = vpop.f32.mrf.mxu0
        %v1073 = vadd.f32 %v749, %v1072
        %v1074 = vpop.f32.mrf.mxu0
        %1075 = vmatprep.mubr.f32.mxu0 0.0
        %1076 = vmatmul.mubr.f32.gmra.mxu0 %v897
        %v1077 = vpop.f32.mrf.mxu0
        %v1078 = vadd.f32 %v754, %v1077
        %v1079 = vpop.f32.mrf.mxu0
        %1080 = vmatprep.mubr.f32.mxu0 0.0
        %1081 = vmatmul.mubr.f32.gmra.mxu0 %v900
        %v1082 = vpop.f32.mrf.mxu0
        %v1083 = vadd.f32 %v759, %v1082
        %v1084 = vpop.f32.mrf.mxu0
        %1085 = vmatprep.mubr.f32.mxu0 0.0
        %1086 = vmatmul.mubr.f32.gmra.mxu0 %v903
        %v1087 = vpop.f32.mrf.mxu0
        %v1088 = vadd.f32 %v764, %v1087
        %v1089 = vpop.f32.mrf.mxu0
        %1090 = vmatprep.mubr.f32.mxu0 0.0
        %1091 = vmatmul.mubr.f32.gmra.mxu0 %v906
        %v1092 = vpop.f32.mrf.mxu0
        %v1093 = vadd.f32 %v769, %v1092
        %v1094 = vpop.f32.mrf.mxu0
        %1095 = vmatprep.mubr.f32.mxu0 0.0
        %1096 = vmatmul.mubr.f32.gmra.mxu0 %v909
        %v1097 = vpop.f32.mrf.mxu0
        %v1098 = vadd.f32 %v774, %v1097
        %v1099 = vpop.f32.mrf.mxu0
        %1100 = vmatprep.mubr.f32.mxu0 0.0
        %1101 = vmatmul.mubr.f32.gmra.mxu0 %v912
        %v1102 = vpop.f32.mrf.mxu0
        %v1103 = vadd.f32 %v779, %v1102
        %v1104 = vpop.f32.mrf.mxu0
        %1105 = vmatprep.mubr.f32.mxu0 0.0
        %1106 = vmatmul.mubr.f32.gmra.mxu0 %v915
        %v1107 = vpop.f32.mrf.mxu0
        %v1108 = vadd.f32 %v784, %v1107
        %v1109 = vpop.f32.mrf.mxu0
        %1110 = vmatprep.mubr.f32.mxu0 0.0
        %1111 = vmatmul.mubr.f32.gmra.mxu0 %v918
        %v1112 = vpop.f32.mrf.mxu0
        %v1113 = vadd.f32 %v789, %v1112
        %v1114 = vpop.f32.mrf.mxu0
        %1115 = vmatprep.mubr.f32.mxu0 0.0
        %1116 = vmatmul.mubr.f32.gmra.mxu0 %v921
        %v1117 = vpop.f32.mrf.mxu0
        %v1118 = vadd.f32 %v794, %v1117
        %v1119 = vpop.f32.mrf.mxu0
        %1120 = vmatprep.mubr.f32.mxu0 0.0
        %1121 = vmatmul.mubr.f32.gmra.mxu0 %v924
        %v1122 = vpop.f32.mrf.mxu0
        %v1123 = vadd.f32 %v799, %v1122
        %v1124 = vpop.f32.mrf.mxu0
        %1125 = vmatprep.mubr.f32.mxu0 0.0
        %1126 = vmatmul.mubr.f32.gmra.mxu0 %v927
        %v1127 = vpop.f32.mrf.mxu0
        %v1128 = vadd.f32 %v804, %v1127
        %v1129 = vpop.f32.mrf.mxu0
        %1130 = vmatprep.mubr.f32.mxu0 0.0
        %1131 = vmatmul.mubr.f32.gmra.mxu0 %v930
        %v1132 = vpop.f32.mrf.mxu0
        %v1133 = vadd.f32 %v809, %v1132
        %v1134 = vpop.f32.mrf.mxu0
        %1135 = vmatprep.mubr.f32.mxu0 0.0
        %1136 = vmatmul.mubr.f32.gmra.mxu0 %v933
        %v1137 = vpop.f32.mrf.mxu0
        %v1138 = vadd.f32 %v814, %v1137
        %v1139 = vpop.f32.mrf.mxu0
        %1140 = vmatprep.mubr.f32.mxu0 0.0
        %1141 = vmatmul.mubr.f32.gmra.mxu0 %v936
        %v1142 = vpop.f32.mrf.mxu0
        %v1143 = vadd.f32 %v819, %v1142
        %v1144 = vpop.f32.mrf.mxu0
        %1145 = vmatprep.mubr.f32.mxu0 0.0
        %1146 = vmatmul.mubr.f32.gmra.mxu0 %v939
        %v1147 = vpop.f32.mrf.mxu0
        %v1148 = vadd.f32 %v824, %v1147
        %v1149 = vpop.f32.mrf.mxu0
        %1150 = vmatprep.mubr.f32.mxu0 0.0
        %1151 = vmatmul.mubr.f32.gmra.mxu0 %v942
        %v1152 = vpop.f32.mrf.mxu0
        %v1153 = vadd.f32 %v829, %v1152
        %v1154 = vpop.f32.mrf.mxu0
        %1155 = vmatprep.mubr.f32.mxu0 0.0
        %1156 = vmatmul.mubr.f32.gmra.mxu0 %v945
        %v1157 = vpop.f32.mrf.mxu0
        %v1158 = vadd.f32 %v834, %v1157
        %v1159 = vpop.f32.mrf.mxu0
        %1160 = vmatprep.mubr.f32.mxu0 0.0
        %1161 = vmatmul.mubr.f32.gmra.mxu0 %v948
        %v1162 = vpop.f32.mrf.mxu0
        %v1163 = vadd.f32 %v839, %v1162
        %v1164 = vpop.f32.mrf.mxu0
        %1165 = vmatprep.mubr.f32.mxu0 0.0
        %1166 = vmatmul.mubr.f32.gmra.mxu0 %v951
        %v1167 = vpop.f32.mrf.mxu0
        %v1168 = vadd.f32 %v844, %v1167
        %v1169 = vpop.f32.mrf.mxu0
        %1170 = vmatprep.mubr.f32.mxu0 0.0
        %1171 = vmatmul.mubr.f32.gmra.mxu0 %v954
        %v1172 = vpop.f32.mrf.mxu0
        %v1173 = vadd.f32 %v849, %v1172
        %v1174 = vpop.f32.mrf.mxu0
        %1175 = vmatprep.mubr.f32.mxu0 0.0
        %1176 = vmatmul.mubr.f32.gmra.mxu0 %v957
        %v1177 = vpop.f32.mrf.mxu0
        %v1178 = vadd.f32 %v854, %v1177
        %v1179 = vpop.f32.mrf.mxu0
        %1180 = vmatprep.mubr.f32.mxu0 0.0
        %1181 = vmatmul.mubr.f32.gmra.mxu0 %v960
        %v1182 = vpop.f32.mrf.mxu0
        %v1183 = vadd.f32 %v859, %v1182
        %v1184 = vpop.f32.mrf.mxu0
        %1185 = vmatprep.mubr.f32.mxu0 0.0
        %1186 = vmatmul.mubr.f32.gmra.mxu0 %v963
        %v1187 = vpop.f32.mrf.mxu0
        %v1188 = vadd.f32 %v864, %v1187
        %v1189 = vpop.f32.mrf.mxu0
        %1190 = vmatprep.mubr.f32.mxu0 0.0
        %1191 = vmatmul.mubr.f32.gmra.mxu0 %v966
        %v1192 = vpop.f32.mrf.mxu0
        %v1193 = vadd.f32 %v869, %v1192
        %v1194 = vpop.f32.mrf.mxu0
        %1195 = vdwg.mxu0
        %v1196 = vld [vmem:[#allocation2 + $0x2] sm:$0xff]
        %v1197 = vld [vmem:[#allocation2 + $0xa] sm:$0xff]
        %v1198 = vld [vmem:[#allocation2 + $0x1a] sm:$0xff]
        %v1199 = vld [vmem:[#allocation2 + $0x22] sm:$0xff]
        %v1200 = vld [vmem:[#allocation2 + $0x32] sm:$0xff]
        %v1201 = vld [vmem:[#allocation2 + $0x3a] sm:$0xff]
        %v1202 = vld [vmem:[#allocation2 + $0x4a] sm:$0xff]
        %v1203 = vld [vmem:[#allocation2 + $0x52] sm:$0xff]
        %v1204 = vld [vmem:[#allocation2 + $0x62] sm:$0xff]
        %v1205 = vld [vmem:[#allocation2 + $0x6a] sm:$0xff]
        %v1206 = vld [vmem:[#allocation2 + $0x7a] sm:$0xff]
        %v1207 = vld [vmem:[#allocation2 + $0x82] sm:$0xff]
        %v1208 = vld [vmem:[#allocation2 + $0x92] sm:$0xff]
        %v1209 = vld [vmem:[#allocation2 + $0x9a] sm:$0xff]
        %v1210 = vld [vmem:[#allocation2 + $0xaa] sm:$0xff]
        %v1211 = vld [vmem:[#allocation2 + $0xb2] sm:$0xff]
        %v1212 = vld [vmem:[#allocation2 + $0xc2] sm:$0xff]
        %v1213 = vld [vmem:[#allocation2 + $0xca] sm:$0xff]
        %v1214 = vld [vmem:[#allocation2 + $0xda] sm:$0xff]
        %v1215 = vld [vmem:[#allocation2 + $0xe2] sm:$0xff]
        %v1216 = vld [vmem:[#allocation2 + $0xf2] sm:$0xff]
        %v1217 = vld [vmem:[#allocation2 + $0xfa] sm:$0xff]
        %v1218 = vld [vmem:[#allocation2 + $0x10a] sm:$0xff]
        %v1219 = vld [vmem:[#allocation2 + $0x112] sm:$0xff]
        %v1220 = vld [vmem:[#allocation2 + $0x122] sm:$0xff]
        %v1221 = vld [vmem:[#allocation2 + $0x12a] sm:$0xff]
        %v1222 = vld [vmem:[#allocation2 + $0x13a] sm:$0xff]
        %v1223 = vld [vmem:[#allocation2 + $0x142] sm:$0xff]
        %v1224 = vld [vmem:[#allocation2 + $0x152] sm:$0xff]
        %v1225 = vld [vmem:[#allocation2 + $0x15a] sm:$0xff]
        %v1226 = vld [vmem:[#allocation2 + $0x16a] sm:$0xff]
        %v1227 = vld [vmem:[#allocation2 + $0x172] sm:$0xff]
        %v1228 = vld [vmem:[%s1 + $0x2] sm:$0x1]
        %v1230 = vsel %vm330, %v1196, 0
        %v1233 = vsel %vm330, %v1197, 0
        %v1236 = vsel %vm330, %v1198, 0
        %v1239 = vsel %vm330, %v1199, 0
        %v1242 = vsel %vm330, %v1200, 0
        %v1245 = vsel %vm330, %v1201, 0
        %v1248 = vsel %vm330, %v1202, 0
        %v1251 = vsel %vm330, %v1203, 0
        %v1254 = vsel %vm330, %v1204, 0
        %v1257 = vsel %vm330, %v1205, 0
        %v1260 = vsel %vm330, %v1206, 0
        %v1263 = vsel %vm330, %v1207, 0
        %v1266 = vsel %vm330, %v1208, 0
        %v1269 = vsel %vm330, %v1209, 0
        %v1272 = vsel %vm330, %v1210, 0
        %v1275 = vsel %vm330, %v1211, 0
        %v1278 = vsel %vm330, %v1212, 0
        %v1281 = vsel %vm330, %v1213, 0
        %v1284 = vsel %vm330, %v1214, 0
        %v1287 = vsel %vm330, %v1215, 0
        %v1290 = vsel %vm330, %v1216, 0
        %v1293 = vsel %vm330, %v1217, 0
        %v1296 = vsel %vm330, %v1218, 0
        %v1299 = vsel %vm330, %v1219, 0
        %v1302 = vsel %vm330, %v1220, 0
        %v1305 = vsel %vm330, %v1221, 0
        %v1308 = vsel %vm330, %v1222, 0
        %v1311 = vsel %vm330, %v1223, 0
        %v1314 = vsel %vm330, %v1224, 0
        %v1317 = vsel %vm330, %v1225, 0
        %v1320 = vsel %vm330, %v1226, 0
        %v1323 = vsel %vm330, %v1227, 0
        %v1326 = vsel %vm643, %v1228, 0
        %1328 = vmatprep.subr.mxu0 0.0
        %1329 = vmatpush1.msra.mxu0 0.0
        %1330 = vmatprep.subr.mxu0 0.0
        %1331 = vmatpush1.msra.mxu0 0.0
        %1332 = vmatprep.subr.mxu0 0.0
        %1333 = vmatpush1.msra.mxu0 0.0
        %1334 = vmatprep.subr.mxu0 0.0
        %1335 = vmatpush1.msra.mxu0 0.0
        %1336 = vmatprep.subr.mxu0 0.0
        %1337 = vmatpush1.msra.mxu0 0.0
        %1338 = vmatprep.subr.mxu0 0.0
        %1339 = vmatpush1.msra.mxu0 0.0
        %1340 = vmatprep.subr.mxu0 0.0
        %1341 = vmatpush1.msra.mxu0 0.0
        %1342 = vmatprep.subr.mxu0 0.0
        %1343 = vmatpush1.msra.mxu0 0.0
        %1344 = vmatprep.subr.mxu0 0.0
        %1345 = vmatpush1.msra.mxu0 0.0
        %1346 = vmatprep.subr.mxu0 0.0
        %1347 = vmatpush1.msra.mxu0 0.0
        %1348 = vmatprep.subr.mxu0 0.0
        %1349 = vmatpush1.msra.mxu0 0.0
        %1350 = vmatprep.subr.mxu0 0.0
        %1351 = vmatpush1.msra.mxu0 0.0
        %1352 = vmatprep.subr.mxu0 0.0
        %1353 = vmatpush1.msra.mxu0 0.0
        %1354 = vmatprep.subr.mxu0 0.0
        %1355 = vmatpush1.msra.mxu0 0.0
        %1356 = vmatprep.subr.mxu0 0.0
        %1357 = vmatpush1.msra.mxu0 0.0
        %1358 = vmatprep.subr.mxu0 0.0
        %1359 = vmatpush1.msra.mxu0 %v1326
        %1360 = vmatprep.subr.mxu0 0.0
        %1361 = vmatpush2.msra.mxu0 0.0
        %1362 = vmatprep.subr.mxu0 0.0
        %1363 = vmatpush2.msra.mxu0 0.0
        %1364 = vmatprep.subr.mxu0 0.0
        %1365 = vmatpush2.msra.mxu0 0.0
        %1366 = vmatprep.subr.mxu0 0.0
        %1367 = vmatpush2.msra.mxu0 0.0
        %1368 = vmatprep.subr.mxu0 0.0
        %1369 = vmatpush2.msra.mxu0 0.0
        %1370 = vmatprep.subr.mxu0 0.0
        %1371 = vmatpush2.msra.mxu0 0.0
        %1372 = vmatprep.subr.mxu0 0.0
        %1373 = vmatpush2.msra.mxu0 0.0
        %1374 = vmatprep.subr.mxu0 0.0
        %1375 = vmatpush2.msra.mxu0 0.0
        %1376 = vmatprep.subr.mxu0 0.0
        %1377 = vmatpush2.msra.mxu0 0.0
        %1378 = vmatprep.subr.mxu0 0.0
        %1379 = vmatpush2.msra.mxu0 0.0
        %1380 = vmatprep.subr.mxu0 0.0
        %1381 = vmatpush2.msra.mxu0 0.0
        %1382 = vmatprep.subr.mxu0 0.0
        %1383 = vmatpush2.msra.mxu0 0.0
        %1384 = vmatprep.subr.mxu0 0.0
        %1385 = vmatpush2.msra.mxu0 0.0
        %1386 = vmatprep.subr.mxu0 0.0
        %1387 = vmatpush2.msra.mxu0 0.0
        %1388 = vmatprep.subr.mxu0 0.0
        %1389 = vmatpush2.msra.mxu0 0.0
        %1390 = vmatprep.subr.mxu0 0.0
        %1391 = vmatpush2.msra.mxu0 0.0
        %1392 = vmatprep.mubr.f32.mxu0 0.0
        %1393 = vmatmul.mubr.f32.gmra.mxu0 %v1230
        %v1394 = vpop.f32.mrf.mxu0
        %v1395 = vadd.f32 0.0, %v1394
        %v1396 = vpop.f32.mrf.mxu0
        %1397 = vmatprep.mubr.f32.mxu0 0.0
        %1398 = vmatmul.mubr.f32.gmra.mxu0 %v1233
        %v1399 = vpop.f32.mrf.mxu0
        %v1400 = vadd.f32 0.0, %v1399
        %v1401 = vpop.f32.mrf.mxu0
        %1402 = vmatprep.mubr.f32.mxu0 0.0
        %1403 = vmatmul.mubr.f32.gmra.mxu0 %v1236
        %v1404 = vpop.f32.mrf.mxu0
        %v1405 = vadd.f32 0.0, %v1404
        %v1406 = vpop.f32.mrf.mxu0
        %1407 = vmatprep.mubr.f32.mxu0 0.0
        %1408 = vmatmul.mubr.f32.gmra.mxu0 %v1239
        %v1409 = vpop.f32.mrf.mxu0
        %v1410 = vadd.f32 0.0, %v1409
        %v1411 = vpop.f32.mrf.mxu0
        %1412 = vmatprep.mubr.f32.mxu0 0.0
        %1413 = vmatmul.mubr.f32.gmra.mxu0 %v1242
        %v1414 = vpop.f32.mrf.mxu0
        %v1415 = vadd.f32 0.0, %v1414
        %v1416 = vpop.f32.mrf.mxu0
        %1417 = vmatprep.mubr.f32.mxu0 0.0
        %1418 = vmatmul.mubr.f32.gmra.mxu0 %v1245
        %v1419 = vpop.f32.mrf.mxu0
        %v1420 = vadd.f32 0.0, %v1419
        %v1421 = vpop.f32.mrf.mxu0
        %1422 = vmatprep.mubr.f32.mxu0 0.0
        %1423 = vmatmul.mubr.f32.gmra.mxu0 %v1248
        %v1424 = vpop.f32.mrf.mxu0
        %v1425 = vadd.f32 0.0, %v1424
        %v1426 = vpop.f32.mrf.mxu0
        %1427 = vmatprep.mubr.f32.mxu0 0.0
        %1428 = vmatmul.mubr.f32.gmra.mxu0 %v1251
        %v1429 = vpop.f32.mrf.mxu0
        %v1430 = vadd.f32 0.0, %v1429
        %v1431 = vpop.f32.mrf.mxu0
        %1432 = vmatprep.mubr.f32.mxu0 0.0
        %1433 = vmatmul.mubr.f32.gmra.mxu0 %v1254
        %v1434 = vpop.f32.mrf.mxu0
        %v1435 = vadd.f32 0.0, %v1434
        %v1436 = vpop.f32.mrf.mxu0
        %1437 = vmatprep.mubr.f32.mxu0 0.0
        %1438 = vmatmul.mubr.f32.gmra.mxu0 %v1257
        %v1439 = vpop.f32.mrf.mxu0
        %v1440 = vadd.f32 0.0, %v1439
        %v1441 = vpop.f32.mrf.mxu0
        %1442 = vmatprep.mubr.f32.mxu0 0.0
        %1443 = vmatmul.mubr.f32.gmra.mxu0 %v1260
        %v1444 = vpop.f32.mrf.mxu0
        %v1445 = vadd.f32 0.0, %v1444
        %v1446 = vpop.f32.mrf.mxu0
        %1447 = vmatprep.mubr.f32.mxu0 0.0
        %1448 = vmatmul.mubr.f32.gmra.mxu0 %v1263
        %v1449 = vpop.f32.mrf.mxu0
        %v1450 = vadd.f32 0.0, %v1449
        %v1451 = vpop.f32.mrf.mxu0
        %1452 = vmatprep.mubr.f32.mxu0 0.0
        %1453 = vmatmul.mubr.f32.gmra.mxu0 %v1266
        %v1454 = vpop.f32.mrf.mxu0
        %v1455 = vadd.f32 0.0, %v1454
        %v1456 = vpop.f32.mrf.mxu0
        %1457 = vmatprep.mubr.f32.mxu0 0.0
        %1458 = vmatmul.mubr.f32.gmra.mxu0 %v1269
        %v1459 = vpop.f32.mrf.mxu0
        %v1460 = vadd.f32 0.0, %v1459
        %v1461 = vpop.f32.mrf.mxu0
        %1462 = vmatprep.mubr.f32.mxu0 0.0
        %1463 = vmatmul.mubr.f32.gmra.mxu0 %v1272
        %v1464 = vpop.f32.mrf.mxu0
        %v1465 = vadd.f32 0.0, %v1464
        %v1466 = vpop.f32.mrf.mxu0
        %1467 = vmatprep.mubr.f32.mxu0 0.0
        %1468 = vmatmul.mubr.f32.gmra.mxu0 %v1275
        %v1469 = vpop.f32.mrf.mxu0
        %v1470 = vadd.f32 0.0, %v1469
        %v1471 = vpop.f32.mrf.mxu0
        %1472 = vmatprep.mubr.f32.mxu0 0.0
        %1473 = vmatmul.mubr.f32.gmra.mxu0 %v1278
        %v1474 = vpop.f32.mrf.mxu0
        %v1475 = vadd.f32 0.0, %v1474
        %v1476 = vpop.f32.mrf.mxu0
        %1477 = vmatprep.mubr.f32.mxu0 0.0
        %1478 = vmatmul.mubr.f32.gmra.mxu0 %v1281
        %v1479 = vpop.f32.mrf.mxu0
        %v1480 = vadd.f32 0.0, %v1479
        %v1481 = vpop.f32.mrf.mxu0
        %1482 = vmatprep.mubr.f32.mxu0 0.0
        %1483 = vmatmul.mubr.f32.gmra.mxu0 %v1284
        %v1484 = vpop.f32.mrf.mxu0
        %v1485 = vadd.f32 0.0, %v1484
        %v1486 = vpop.f32.mrf.mxu0
        %1487 = vmatprep.mubr.f32.mxu0 0.0
        %1488 = vmatmul.mubr.f32.gmra.mxu0 %v1287
        %v1489 = vpop.f32.mrf.mxu0
        %v1490 = vadd.f32 0.0, %v1489
        %v1491 = vpop.f32.mrf.mxu0
        %1492 = vmatprep.mubr.f32.mxu0 0.0
        %1493 = vmatmul.mubr.f32.gmra.mxu0 %v1290
        %v1494 = vpop.f32.mrf.mxu0
        %v1495 = vadd.f32 0.0, %v1494
        %v1496 = vpop.f32.mrf.mxu0
        %1497 = vmatprep.mubr.f32.mxu0 0.0
        %1498 = vmatmul.mubr.f32.gmra.mxu0 %v1293
        %v1499 = vpop.f32.mrf.mxu0
        %v1500 = vadd.f32 0.0, %v1499
        %v1501 = vpop.f32.mrf.mxu0
        %1502 = vmatprep.mubr.f32.mxu0 0.0
        %1503 = vmatmul.mubr.f32.gmra.mxu0 %v1296
        %v1504 = vpop.f32.mrf.mxu0
        %v1505 = vadd.f32 0.0, %v1504
        %v1506 = vpop.f32.mrf.mxu0
        %1507 = vmatprep.mubr.f32.mxu0 0.0
        %1508 = vmatmul.mubr.f32.gmra.mxu0 %v1299
        %v1509 = vpop.f32.mrf.mxu0
        %v1510 = vadd.f32 0.0, %v1509
        %v1511 = vpop.f32.mrf.mxu0
        %1512 = vmatprep.mubr.f32.mxu0 0.0
        %1513 = vmatmul.mubr.f32.gmra.mxu0 %v1302
        %v1514 = vpop.f32.mrf.mxu0
        %v1515 = vadd.f32 0.0, %v1514
        %v1516 = vpop.f32.mrf.mxu0
        %1517 = vmatprep.mubr.f32.mxu0 0.0
        %1518 = vmatmul.mubr.f32.gmra.mxu0 %v1305
        %v1519 = vpop.f32.mrf.mxu0
        %v1520 = vadd.f32 0.0, %v1519
        %v1521 = vpop.f32.mrf.mxu0
        %1522 = vmatprep.mubr.f32.mxu0 0.0
        %1523 = vmatmul.mubr.f32.gmra.mxu0 %v1308
        %v1524 = vpop.f32.mrf.mxu0
        %v1525 = vadd.f32 0.0, %v1524
        %v1526 = vpop.f32.mrf.mxu0
        %1527 = vmatprep.mubr.f32.mxu0 0.0
        %1528 = vmatmul.mubr.f32.gmra.mxu0 %v1311
        %v1529 = vpop.f32.mrf.mxu0
        %v1530 = vadd.f32 0.0, %v1529
        %v1531 = vpop.f32.mrf.mxu0
        %1532 = vmatprep.mubr.f32.mxu0 0.0
        %1533 = vmatmul.mubr.f32.gmra.mxu0 %v1314
        %v1534 = vpop.f32.mrf.mxu0
        %v1535 = vadd.f32 0.0, %v1534
        %v1536 = vpop.f32.mrf.mxu0
        %1537 = vmatprep.mubr.f32.mxu0 0.0
        %1538 = vmatmul.mubr.f32.gmra.mxu0 %v1317
        %v1539 = vpop.f32.mrf.mxu0
        %v1540 = vadd.f32 0.0, %v1539
        %v1541 = vpop.f32.mrf.mxu0
        %1542 = vmatprep.mubr.f32.mxu0 0.0
        %1543 = vmatmul.mubr.f32.gmra.mxu0 %v1320
        %v1544 = vpop.f32.mrf.mxu0
        %v1545 = vadd.f32 0.0, %v1544
        %v1546 = vpop.f32.mrf.mxu0
        %1547 = vmatprep.mubr.f32.mxu0 0.0
        %1548 = vmatmul.mubr.f32.gmra.mxu0 %v1323
        %v1549 = vpop.f32.mrf.mxu0
        %v1550 = vadd.f32 0.0, %v1549
        %v1551 = vpop.f32.mrf.mxu0
        %1552 = vdwg.mxu0
        %v1553 = vadd.f32 %v1038, %v1395
        %v1554 = vadd.f32 %v1043, %v1400
        %v1555 = vadd.f32 %v1048, %v1405
        %v1556 = vadd.f32 %v1053, %v1410
        %v1557 = vadd.f32 %v1058, %v1415
        %v1558 = vadd.f32 %v1063, %v1420
        %v1559 = vadd.f32 %v1068, %v1425
        %v1560 = vadd.f32 %v1073, %v1430
        %v1561 = vadd.f32 %v1078, %v1435
        %v1562 = vadd.f32 %v1083, %v1440
        %v1563 = vadd.f32 %v1088, %v1445
        %v1564 = vadd.f32 %v1093, %v1450
        %v1565 = vadd.f32 %v1098, %v1455
        %v1566 = vadd.f32 %v1103, %v1460
        %v1567 = vadd.f32 %v1108, %v1465
        %v1568 = vadd.f32 %v1113, %v1470
        %v1569 = vadd.f32 %v1118, %v1475
        %v1570 = vadd.f32 %v1123, %v1480
        %v1571 = vadd.f32 %v1128, %v1485
        %v1572 = vadd.f32 %v1133, %v1490
        %v1573 = vadd.f32 %v1138, %v1495
        %v1574 = vadd.f32 %v1143, %v1500
        %v1575 = vadd.f32 %v1148, %v1505
        %v1576 = vadd.f32 %v1153, %v1510
        %v1577 = vadd.f32 %v1158, %v1515
        %v1578 = vadd.f32 %v1163, %v1520
        %v1579 = vadd.f32 %v1168, %v1525
        %v1580 = vadd.f32 %v1173, %v1530
        %v1581 = vadd.f32 %v1178, %v1535
        %v1582 = vadd.f32 %v1183, %v1540
        %v1583 = vadd.f32 %v1188, %v1545
        %v1584 = vadd.f32 %v1193, %v1550
        %v1585 = vld [vmem:[%s447] sm:$0xff]
        %v1586 = vld [vmem:[%s447 + $0x8] sm:$0xff]
        %v1587 = vld [vmem:[%s447 + $0x18] sm:$0xff]
        %v1588 = vld [vmem:[%s447 + $0x20] sm:$0xff]
        %v1589 = vld [vmem:[%s447 + $0x30] sm:$0xff]
        %v1590 = vld [vmem:[%s447 + $0x38] sm:$0xff]
        %v1591 = vld [vmem:[%s447 + $0x48] sm:$0xff]
        %v1592 = vld [vmem:[%s447 + $0x50] sm:$0xff]
        %v1593 = vld [vmem:[%s447 + $0x60] sm:$0xff]
        %v1594 = vld [vmem:[%s447 + $0x68] sm:$0xff]
        %v1595 = vld [vmem:[%s447 + $0x78] sm:$0xff]
        %v1596 = vld [vmem:[%s447 + $0x80] sm:$0xff]
        %v1597 = vld [vmem:[%s447 + $0x90] sm:$0xff]
        %v1598 = vld [vmem:[%s447 + $0x98] sm:$0xff]
        %v1599 = vld [vmem:[%s447 + $0xa8] sm:$0xff]
        %v1600 = vld [vmem:[%s447 + $0xb0] sm:$0xff]
        %v1601 = vld [vmem:[%s447 + $0xc0] sm:$0xff]
        %v1602 = vld [vmem:[%s447 + $0xc8] sm:$0xff]
        %v1603 = vld [vmem:[%s447 + $0xd8] sm:$0xff]
        %v1604 = vld [vmem:[%s447 + $0xe0] sm:$0xff]
        %v1605 = vld [vmem:[%s447 + $0xf0] sm:$0xff]
        %v1606 = vld [vmem:[%s447 + $0xf8] sm:$0xff]
        %v1607 = vld [vmem:[%s447 + $0x108] sm:$0xff]
        %v1608 = vld [vmem:[%s447 + $0x110] sm:$0xff]
        %v1609 = vld [vmem:[%s447 + $0x120] sm:$0xff]
        %v1610 = vld [vmem:[%s447 + $0x128] sm:$0xff]
        %v1611 = vld [vmem:[%s447 + $0x138] sm:$0xff]
        %v1612 = vld [vmem:[%s447 + $0x140] sm:$0xff]
        %v1613 = vld [vmem:[%s447 + $0x150] sm:$0xff]
        %v1614 = vld [vmem:[%s447 + $0x158] sm:$0xff]
        %v1615 = vld [vmem:[%s447 + $0x168] sm:$0xff]
        %v1616 = vld [vmem:[%s447 + $0x170] sm:$0xff]
        %v1617 = vld [vmem:[%s1 + $0x3] sm:$0x1]
        %v1619 = vsel %vm330, %v1585, 0
        %v1622 = vsel %vm330, %v1586, 0
        %v1625 = vsel %vm330, %v1587, 0
        %v1628 = vsel %vm330, %v1588, 0
        %v1631 = vsel %vm330, %v1589, 0
        %v1634 = vsel %vm330, %v1590, 0
        %v1637 = vsel %vm330, %v1591, 0
        %v1640 = vsel %vm330, %v1592, 0
        %v1643 = vsel %vm330, %v1593, 0
        %v1646 = vsel %vm330, %v1594, 0
        %v1649 = vsel %vm330, %v1595, 0
        %v1652 = vsel %vm330, %v1596, 0
        %v1655 = vsel %vm330, %v1597, 0
        %v1658 = vsel %vm330, %v1598, 0
        %v1661 = vsel %vm330, %v1599, 0
        %v1664 = vsel %vm330, %v1600, 0
        %v1667 = vsel %vm330, %v1601, 0
        %v1670 = vsel %vm330, %v1602, 0
        %v1673 = vsel %vm330, %v1603, 0
        %v1676 = vsel %vm330, %v1604, 0
        %v1679 = vsel %vm330, %v1605, 0
        %v1682 = vsel %vm330, %v1606, 0
        %v1685 = vsel %vm330, %v1607, 0
        %v1688 = vsel %vm330, %v1608, 0
        %v1691 = vsel %vm330, %v1609, 0
        %v1694 = vsel %vm330, %v1610, 0
        %v1697 = vsel %vm330, %v1611, 0
        %v1700 = vsel %vm330, %v1612, 0
        %v1703 = vsel %vm330, %v1613, 0
        %v1706 = vsel %vm330, %v1614, 0
        %v1709 = vsel %vm330, %v1615, 0
        %v1712 = vsel %vm330, %v1616, 0
        %v1715 = vsel %vm643, %v1617, 0
        %1717 = vmatprep.subr.mxu0 0.0
        %1718 = vmatpush1.msra.mxu0 0.0
        %1719 = vmatprep.subr.mxu0 0.0
        %1720 = vmatpush1.msra.mxu0 0.0
        %1721 = vmatprep.subr.mxu0 0.0
        %1722 = vmatpush1.msra.mxu0 0.0
        %1723 = vmatprep.subr.mxu0 0.0
        %1724 = vmatpush1.msra.mxu0 0.0
        %1725 = vmatprep.subr.mxu0 0.0
        %1726 = vmatpush1.msra.mxu0 0.0
        %1727 = vmatprep.subr.mxu0 0.0
        %1728 = vmatpush1.msra.mxu0 0.0
        %1729 = vmatprep.subr.mxu0 0.0
        %1730 = vmatpush1.msra.mxu0 0.0
        %1731 = vmatprep.subr.mxu0 0.0
        %1732 = vmatpush1.msra.mxu0 0.0
        %1733 = vmatprep.subr.mxu0 0.0
        %1734 = vmatpush1.msra.mxu0 0.0
        %1735 = vmatprep.subr.mxu0 0.0
        %1736 = vmatpush1.msra.mxu0 0.0
        %1737 = vmatprep.subr.mxu0 0.0
        %1738 = vmatpush1.msra.mxu0 0.0
        %1739 = vmatprep.subr.mxu0 0.0
        %1740 = vmatpush1.msra.mxu0 0.0
        %1741 = vmatprep.subr.mxu0 0.0
        %1742 = vmatpush1.msra.mxu0 0.0
        %1743 = vmatprep.subr.mxu0 0.0
        %1744 = vmatpush1.msra.mxu0 0.0
        %1745 = vmatprep.subr.mxu0 0.0
        %1746 = vmatpush1.msra.mxu0 0.0
        %1747 = vmatprep.subr.mxu0 0.0
        %1748 = vmatpush1.msra.mxu0 %v1715
        %1749 = vmatprep.subr.mxu0 0.0
        %1750 = vmatpush2.msra.mxu0 0.0
        %1751 = vmatprep.subr.mxu0 0.0
        %1752 = vmatpush2.msra.mxu0 0.0
        %1753 = vmatprep.subr.mxu0 0.0
        %1754 = vmatpush2.msra.mxu0 0.0
        %1755 = vmatprep.subr.mxu0 0.0
        %1756 = vmatpush2.msra.mxu0 0.0
        %1757 = vmatprep.subr.mxu0 0.0
        %1758 = vmatpush2.msra.mxu0 0.0
        %1759 = vmatprep.subr.mxu0 0.0
        %1760 = vmatpush2.msra.mxu0 0.0
        %1761 = vmatprep.subr.mxu0 0.0
        %1762 = vmatpush2.msra.mxu0 0.0
        %1763 = vmatprep.subr.mxu0 0.0
        %1764 = vmatpush2.msra.mxu0 0.0
        %1765 = vmatprep.subr.mxu0 0.0
        %1766 = vmatpush2.msra.mxu0 0.0
        %1767 = vmatprep.subr.mxu0 0.0
        %1768 = vmatpush2.msra.mxu0 0.0
        %1769 = vmatprep.subr.mxu0 0.0
        %1770 = vmatpush2.msra.mxu0 0.0
        %1771 = vmatprep.subr.mxu0 0.0
        %1772 = vmatpush2.msra.mxu0 0.0
        %1773 = vmatprep.subr.mxu0 0.0
        %1774 = vmatpush2.msra.mxu0 0.0
        %1775 = vmatprep.subr.mxu0 0.0
        %1776 = vmatpush2.msra.mxu0 0.0
        %1777 = vmatprep.subr.mxu0 0.0
        %1778 = vmatpush2.msra.mxu0 0.0
        %1779 = vmatprep.subr.mxu0 0.0
        %1780 = vmatpush2.msra.mxu0 0.0
        %1781 = vmatprep.mubr.f32.mxu0 0.0
        %1782 = vmatmul.mubr.f32.gmra.mxu0 %v1619
        %v1783 = vpop.f32.mrf.mxu0
        %v1784 = vadd.f32 0.0, %v1783
        %v1785 = vpop.f32.mrf.mxu0
        %1786 = vmatprep.mubr.f32.mxu0 0.0
        %1787 = vmatmul.mubr.f32.gmra.mxu0 %v1622
        %v1788 = vpop.f32.mrf.mxu0
        %v1789 = vadd.f32 0.0, %v1788
        %v1790 = vpop.f32.mrf.mxu0
        %1791 = vmatprep.mubr.f32.mxu0 0.0
        %1792 = vmatmul.mubr.f32.gmra.mxu0 %v1625
        %v1793 = vpop.f32.mrf.mxu0
        %v1794 = vadd.f32 0.0, %v1793
        %v1795 = vpop.f32.mrf.mxu0
        %1796 = vmatprep.mubr.f32.mxu0 0.0
        %1797 = vmatmul.mubr.f32.gmra.mxu0 %v1628
        %v1798 = vpop.f32.mrf.mxu0
        %v1799 = vadd.f32 0.0, %v1798
        %v1800 = vpop.f32.mrf.mxu0
        %1801 = vmatprep.mubr.f32.mxu0 0.0
        %1802 = vmatmul.mubr.f32.gmra.mxu0 %v1631
        %v1803 = vpop.f32.mrf.mxu0
        %v1804 = vadd.f32 0.0, %v1803
        %v1805 = vpop.f32.mrf.mxu0
        %1806 = vmatprep.mubr.f32.mxu0 0.0
        %1807 = vmatmul.mubr.f32.gmra.mxu0 %v1634
        %v1808 = vpop.f32.mrf.mxu0
        %v1809 = vadd.f32 0.0, %v1808
        %v1810 = vpop.f32.mrf.mxu0
        %1811 = vmatprep.mubr.f32.mxu0 0.0
        %1812 = vmatmul.mubr.f32.gmra.mxu0 %v1637
        %v1813 = vpop.f32.mrf.mxu0
        %v1814 = vadd.f32 0.0, %v1813
        %v1815 = vpop.f32.mrf.mxu0
        %1816 = vmatprep.mubr.f32.mxu0 0.0
        %1817 = vmatmul.mubr.f32.gmra.mxu0 %v1640
        %v1818 = vpop.f32.mrf.mxu0
        %v1819 = vadd.f32 0.0, %v1818
        %v1820 = vpop.f32.mrf.mxu0
        %1821 = vmatprep.mubr.f32.mxu0 0.0
        %1822 = vmatmul.mubr.f32.gmra.mxu0 %v1643
        %v1823 = vpop.f32.mrf.mxu0
        %v1824 = vadd.f32 0.0, %v1823
        %v1825 = vpop.f32.mrf.mxu0
        %1826 = vmatprep.mubr.f32.mxu0 0.0
        %1827 = vmatmul.mubr.f32.gmra.mxu0 %v1646
        %v1828 = vpop.f32.mrf.mxu0
        %v1829 = vadd.f32 0.0, %v1828
        %v1830 = vpop.f32.mrf.mxu0
        %1831 = vmatprep.mubr.f32.mxu0 0.0
        %1832 = vmatmul.mubr.f32.gmra.mxu0 %v1649
        %v1833 = vpop.f32.mrf.mxu0
        %v1834 = vadd.f32 0.0, %v1833
        %v1835 = vpop.f32.mrf.mxu0
        %1836 = vmatprep.mubr.f32.mxu0 0.0
        %1837 = vmatmul.mubr.f32.gmra.mxu0 %v1652
        %v1838 = vpop.f32.mrf.mxu0
        %v1839 = vadd.f32 0.0, %v1838
        %v1840 = vpop.f32.mrf.mxu0
        %1841 = vmatprep.mubr.f32.mxu0 0.0
        %1842 = vmatmul.mubr.f32.gmra.mxu0 %v1655
        %v1843 = vpop.f32.mrf.mxu0
        %v1844 = vadd.f32 0.0, %v1843
        %v1845 = vpop.f32.mrf.mxu0
        %1846 = vmatprep.mubr.f32.mxu0 0.0
        %1847 = vmatmul.mubr.f32.gmra.mxu0 %v1658
        %v1848 = vpop.f32.mrf.mxu0
        %v1849 = vadd.f32 0.0, %v1848
        %v1850 = vpop.f32.mrf.mxu0
        %1851 = vmatprep.mubr.f32.mxu0 0.0
        %1852 = vmatmul.mubr.f32.gmra.mxu0 %v1661
        %v1853 = vpop.f32.mrf.mxu0
        %v1854 = vadd.f32 0.0, %v1853
        %v1855 = vpop.f32.mrf.mxu0
        %1856 = vmatprep.mubr.f32.mxu0 0.0
        %1857 = vmatmul.mubr.f32.gmra.mxu0 %v1664
        %v1858 = vpop.f32.mrf.mxu0
        %v1859 = vadd.f32 0.0, %v1858
        %v1860 = vpop.f32.mrf.mxu0
        %1861 = vmatprep.mubr.f32.mxu0 0.0
        %1862 = vmatmul.mubr.f32.gmra.mxu0 %v1667
        %v1863 = vpop.f32.mrf.mxu0
        %v1864 = vadd.f32 0.0, %v1863
        %v1865 = vpop.f32.mrf.mxu0
        %1866 = vmatprep.mubr.f32.mxu0 0.0
        %1867 = vmatmul.mubr.f32.gmra.mxu0 %v1670
        %v1868 = vpop.f32.mrf.mxu0
        %v1869 = vadd.f32 0.0, %v1868
        %v1870 = vpop.f32.mrf.mxu0
        %1871 = vmatprep.mubr.f32.mxu0 0.0
        %1872 = vmatmul.mubr.f32.gmra.mxu0 %v1673
        %v1873 = vpop.f32.mrf.mxu0
        %v1874 = vadd.f32 0.0, %v1873
        %v1875 = vpop.f32.mrf.mxu0
        %1876 = vmatprep.mubr.f32.mxu0 0.0
        %1877 = vmatmul.mubr.f32.gmra.mxu0 %v1676
        %v1878 = vpop.f32.mrf.mxu0
        %v1879 = vadd.f32 0.0, %v1878
        %v1880 = vpop.f32.mrf.mxu0
        %1881 = vmatprep.mubr.f32.mxu0 0.0
        %1882 = vmatmul.mubr.f32.gmra.mxu0 %v1679
        %v1883 = vpop.f32.mrf.mxu0
        %v1884 = vadd.f32 0.0, %v1883
        %v1885 = vpop.f32.mrf.mxu0
        %1886 = vmatprep.mubr.f32.mxu0 0.0
        %1887 = vmatmul.mubr.f32.gmra.mxu0 %v1682
        %v1888 = vpop.f32.mrf.mxu0
        %v1889 = vadd.f32 0.0, %v1888
        %v1890 = vpop.f32.mrf.mxu0
        %1891 = vmatprep.mubr.f32.mxu0 0.0
        %1892 = vmatmul.mubr.f32.gmra.mxu0 %v1685
        %v1893 = vpop.f32.mrf.mxu0
        %v1894 = vadd.f32 0.0, %v1893
        %v1895 = vpop.f32.mrf.mxu0
        %1896 = vmatprep.mubr.f32.mxu0 0.0
        %1897 = vmatmul.mubr.f32.gmra.mxu0 %v1688
        %v1898 = vpop.f32.mrf.mxu0
        %v1899 = vadd.f32 0.0, %v1898
        %v1900 = vpop.f32.mrf.mxu0
        %1901 = vmatprep.mubr.f32.mxu0 0.0
        %1902 = vmatmul.mubr.f32.gmra.mxu0 %v1691
        %v1903 = vpop.f32.mrf.mxu0
        %v1904 = vadd.f32 0.0, %v1903
        %v1905 = vpop.f32.mrf.mxu0
        %1906 = vmatprep.mubr.f32.mxu0 0.0
        %1907 = vmatmul.mubr.f32.gmra.mxu0 %v1694
        %v1908 = vpop.f32.mrf.mxu0
        %v1909 = vadd.f32 0.0, %v1908
        %v1910 = vpop.f32.mrf.mxu0
        %1911 = vmatprep.mubr.f32.mxu0 0.0
        %1912 = vmatmul.mubr.f32.gmra.mxu0 %v1697
        %v1913 = vpop.f32.mrf.mxu0
        %v1914 = vadd.f32 0.0, %v1913
        %v1915 = vpop.f32.mrf.mxu0
        %1916 = vmatprep.mubr.f32.mxu0 0.0
        %1917 = vmatmul.mubr.f32.gmra.mxu0 %v1700
        %v1918 = vpop.f32.mrf.mxu0
        %v1919 = vadd.f32 0.0, %v1918
        %v1920 = vpop.f32.mrf.mxu0
        %1921 = vmatprep.mubr.f32.mxu0 0.0
        %1922 = vmatmul.mubr.f32.gmra.mxu0 %v1703
        %v1923 = vpop.f32.mrf.mxu0
        %v1924 = vadd.f32 0.0, %v1923
        %v1925 = vpop.f32.mrf.mxu0
        %1926 = vmatprep.mubr.f32.mxu0 0.0
        %1927 = vmatmul.mubr.f32.gmra.mxu0 %v1706
        %v1928 = vpop.f32.mrf.mxu0
        %v1929 = vadd.f32 0.0, %v1928
        %v1930 = vpop.f32.mrf.mxu0
        %1931 = vmatprep.mubr.f32.mxu0 0.0
        %1932 = vmatmul.mubr.f32.gmra.mxu0 %v1709
        %v1933 = vpop.f32.mrf.mxu0
        %v1934 = vadd.f32 0.0, %v1933
        %v1935 = vpop.f32.mrf.mxu0
        %1936 = vmatprep.mubr.f32.mxu0 0.0
        %1937 = vmatmul.mubr.f32.gmra.mxu0 %v1712
        %v1938 = vpop.f32.mrf.mxu0
        %v1939 = vadd.f32 0.0, %v1938
        %v1940 = vpop.f32.mrf.mxu0
        %1941 = vdwg.mxu0
        %v1942 = vadd.f32 %v1553, %v1784
        %v1943 = vadd.f32 %v1554, %v1789
        %v1944 = vadd.f32 %v1555, %v1794
        %v1945 = vadd.f32 %v1556, %v1799
        %v1946 = vadd.f32 %v1557, %v1804
        %v1947 = vadd.f32 %v1558, %v1809
        %v1948 = vadd.f32 %v1559, %v1814
        %v1949 = vadd.f32 %v1560, %v1819
        %v1950 = vadd.f32 %v1561, %v1824
        %v1951 = vadd.f32 %v1562, %v1829
        %v1952 = vadd.f32 %v1563, %v1834
        %v1953 = vadd.f32 %v1564, %v1839
        %v1954 = vadd.f32 %v1565, %v1844
        %v1955 = vadd.f32 %v1566, %v1849
        %v1956 = vadd.f32 %v1567, %v1854
        %v1957 = vadd.f32 %v1568, %v1859
        %v1958 = vadd.f32 %v1569, %v1864
        %v1959 = vadd.f32 %v1570, %v1869
        %v1960 = vadd.f32 %v1571, %v1874
        %v1961 = vadd.f32 %v1572, %v1879
        %v1962 = vadd.f32 %v1573, %v1884
        %v1963 = vadd.f32 %v1574, %v1889
        %v1964 = vadd.f32 %v1575, %v1894
        %v1965 = vadd.f32 %v1576, %v1899
        %v1966 = vadd.f32 %v1577, %v1904
        %v1967 = vadd.f32 %v1578, %v1909
        %v1968 = vadd.f32 %v1579, %v1914
        %v1969 = vadd.f32 %v1580, %v1919
        %v1970 = vadd.f32 %v1581, %v1924
        %v1971 = vadd.f32 %v1582, %v1929
        %v1972 = vadd.f32 %v1583, %v1934
        %v1973 = vadd.f32 %v1584, %v1939
        %v1974 = vld [vmem:[%s447 + $0x1] sm:$0xff]
        %v1975 = vld [vmem:[%s447 + $0x9] sm:$0xff]
        %v1976 = vld [vmem:[%s447 + $0x19] sm:$0xff]
        %v1977 = vld [vmem:[%s447 + $0x21] sm:$0xff]
        %v1978 = vld [vmem:[%s447 + $0x31] sm:$0xff]
        %v1979 = vld [vmem:[%s447 + $0x39] sm:$0xff]
        %v1980 = vld [vmem:[%s447 + $0x49] sm:$0xff]
        %v1981 = vld [vmem:[%s447 + $0x51] sm:$0xff]
        %v1982 = vld [vmem:[%s447 + $0x61] sm:$0xff]
        %v1983 = vld [vmem:[%s447 + $0x69] sm:$0xff]
        %v1984 = vld [vmem:[%s447 + $0x79] sm:$0xff]
        %v1985 = vld [vmem:[%s447 + $0x81] sm:$0xff]
        %v1986 = vld [vmem:[%s447 + $0x91] sm:$0xff]
        %v1987 = vld [vmem:[%s447 + $0x99] sm:$0xff]
        %v1988 = vld [vmem:[%s447 + $0xa9] sm:$0xff]
        %v1989 = vld [vmem:[%s447 + $0xb1] sm:$0xff]
        %v1990 = vld [vmem:[%s447 + $0xc1] sm:$0xff]
        %v1991 = vld [vmem:[%s447 + $0xc9] sm:$0xff]
        %v1992 = vld [vmem:[%s447 + $0xd9] sm:$0xff]
        %v1993 = vld [vmem:[%s447 + $0xe1] sm:$0xff]
        %v1994 = vld [vmem:[%s447 + $0xf1] sm:$0xff]
        %v1995 = vld [vmem:[%s447 + $0xf9] sm:$0xff]
        %v1996 = vld [vmem:[%s447 + $0x109] sm:$0xff]
        %v1997 = vld [vmem:[%s447 + $0x111] sm:$0xff]
        %v1998 = vld [vmem:[%s447 + $0x121] sm:$0xff]
        %v1999 = vld [vmem:[%s447 + $0x129] sm:$0xff]
        %v2000 = vld [vmem:[%s447 + $0x139] sm:$0xff]
        %v2001 = vld [vmem:[%s447 + $0x141] sm:$0xff]
        %v2002 = vld [vmem:[%s447 + $0x151] sm:$0xff]
        %v2003 = vld [vmem:[%s447 + $0x159] sm:$0xff]
        %v2004 = vld [vmem:[%s447 + $0x169] sm:$0xff]
        %v2005 = vld [vmem:[%s447 + $0x171] sm:$0xff]
        %v2006 = vld [vmem:[%s1 + $0x4] sm:$0x1]
        %v2008 = vsel %vm330, %v1974, 0
        %v2011 = vsel %vm330, %v1975, 0
        %v2014 = vsel %vm330, %v1976, 0
        %v2017 = vsel %vm330, %v1977, 0
        %v2020 = vsel %vm330, %v1978, 0
        %v2023 = vsel %vm330, %v1979, 0
        %v2026 = vsel %vm330, %v1980, 0
        %v2029 = vsel %vm330, %v1981, 0
        %v2032 = vsel %vm330, %v1982, 0
        %v2035 = vsel %vm330, %v1983, 0
        %v2038 = vsel %vm330, %v1984, 0
        %v2041 = vsel %vm330, %v1985, 0
        %v2044 = vsel %vm330, %v1986, 0
        %v2047 = vsel %vm330, %v1987, 0
        %v2050 = vsel %vm330, %v1988, 0
        %v2053 = vsel %vm330, %v1989, 0
        %v2056 = vsel %vm330, %v1990, 0
        %v2059 = vsel %vm330, %v1991, 0
        %v2062 = vsel %vm330, %v1992, 0
        %v2065 = vsel %vm330, %v1993, 0
        %v2068 = vsel %vm330, %v1994, 0
        %v2071 = vsel %vm330, %v1995, 0
        %v2074 = vsel %vm330, %v1996, 0
        %v2077 = vsel %vm330, %v1997, 0
        %v2080 = vsel %vm330, %v1998, 0
        %v2083 = vsel %vm330, %v1999, 0
        %v2086 = vsel %vm330, %v2000, 0
        %v2089 = vsel %vm330, %v2001, 0
        %v2092 = vsel %vm330, %v2002, 0
        %v2095 = vsel %vm330, %v2003, 0
        %v2098 = vsel %vm330, %v2004, 0
        %v2101 = vsel %vm330, %v2005, 0
        %v2104 = vsel %vm643, %v2006, 0
        %2106 = vmatprep.subr.mxu0 0.0
        %2107 = vmatpush1.msra.mxu0 0.0
        %2108 = vmatprep.subr.mxu0 0.0
        %2109 = vmatpush1.msra.mxu0 0.0
        %2110 = vmatprep.subr.mxu0 0.0
        %2111 = vmatpush1.msra.mxu0 0.0
        %2112 = vmatprep.subr.mxu0 0.0
        %2113 = vmatpush1.msra.mxu0 0.0
        %2114 = vmatprep.subr.mxu0 0.0
        %2115 = vmatpush1.msra.mxu0 0.0
        %2116 = vmatprep.subr.mxu0 0.0
        %2117 = vmatpush1.msra.mxu0 0.0
        %2118 = vmatprep.subr.mxu0 0.0
        %2119 = vmatpush1.msra.mxu0 0.0
        %2120 = vmatprep.subr.mxu0 0.0
        %2121 = vmatpush1.msra.mxu0 0.0
        %2122 = vmatprep.subr.mxu0 0.0
        %2123 = vmatpush1.msra.mxu0 0.0
        %2124 = vmatprep.subr.mxu0 0.0
        %2125 = vmatpush1.msra.mxu0 0.0
        %2126 = vmatprep.subr.mxu0 0.0
        %2127 = vmatpush1.msra.mxu0 0.0
        %2128 = vmatprep.subr.mxu0 0.0
        %2129 = vmatpush1.msra.mxu0 0.0
        %2130 = vmatprep.subr.mxu0 0.0
        %2131 = vmatpush1.msra.mxu0 0.0
        %2132 = vmatprep.subr.mxu0 0.0
        %2133 = vmatpush1.msra.mxu0 0.0
        %2134 = vmatprep.subr.mxu0 0.0
        %2135 = vmatpush1.msra.mxu0 0.0
        %2136 = vmatprep.subr.mxu0 0.0
        %2137 = vmatpush1.msra.mxu0 %v2104
        %2138 = vmatprep.subr.mxu0 0.0
        %2139 = vmatpush2.msra.mxu0 0.0
        %2140 = vmatprep.subr.mxu0 0.0
        %2141 = vmatpush2.msra.mxu0 0.0
        %2142 = vmatprep.subr.mxu0 0.0
        %2143 = vmatpush2.msra.mxu0 0.0
        %2144 = vmatprep.subr.mxu0 0.0
        %2145 = vmatpush2.msra.mxu0 0.0
        %2146 = vmatprep.subr.mxu0 0.0
        %2147 = vmatpush2.msra.mxu0 0.0
        %2148 = vmatprep.subr.mxu0 0.0
        %2149 = vmatpush2.msra.mxu0 0.0
        %2150 = vmatprep.subr.mxu0 0.0
        %2151 = vmatpush2.msra.mxu0 0.0
        %2152 = vmatprep.subr.mxu0 0.0
        %2153 = vmatpush2.msra.mxu0 0.0
        %2154 = vmatprep.subr.mxu0 0.0
        %2155 = vmatpush2.msra.mxu0 0.0
        %2156 = vmatprep.subr.mxu0 0.0
        %2157 = vmatpush2.msra.mxu0 0.0
        %2158 = vmatprep.subr.mxu0 0.0
        %2159 = vmatpush2.msra.mxu0 0.0
        %2160 = vmatprep.subr.mxu0 0.0
        %2161 = vmatpush2.msra.mxu0 0.0
        %2162 = vmatprep.subr.mxu0 0.0
        %2163 = vmatpush2.msra.mxu0 0.0
        %2164 = vmatprep.subr.mxu0 0.0
        %2165 = vmatpush2.msra.mxu0 0.0
        %2166 = vmatprep.subr.mxu0 0.0
        %2167 = vmatpush2.msra.mxu0 0.0
        %2168 = vmatprep.subr.mxu0 0.0
        %2169 = vmatpush2.msra.mxu0 0.0
        %2170 = vmatprep.mubr.f32.mxu0 0.0
        %2171 = vmatmul.mubr.f32.gmra.mxu0 %v2008
        %v2172 = vpop.f32.mrf.mxu0
        %v2173 = vadd.f32 0.0, %v2172
        %v2174 = vpop.f32.mrf.mxu0
        %2175 = vmatprep.mubr.f32.mxu0 0.0
        %2176 = vmatmul.mubr.f32.gmra.mxu0 %v2011
        %v2177 = vpop.f32.mrf.mxu0
        %v2178 = vadd.f32 0.0, %v2177
        %v2179 = vpop.f32.mrf.mxu0
        %2180 = vmatprep.mubr.f32.mxu0 0.0
        %2181 = vmatmul.mubr.f32.gmra.mxu0 %v2014
        %v2182 = vpop.f32.mrf.mxu0
        %v2183 = vadd.f32 0.0, %v2182
        %v2184 = vpop.f32.mrf.mxu0
        %2185 = vmatprep.mubr.f32.mxu0 0.0
        %2186 = vmatmul.mubr.f32.gmra.mxu0 %v2017
        %v2187 = vpop.f32.mrf.mxu0
        %v2188 = vadd.f32 0.0, %v2187
        %v2189 = vpop.f32.mrf.mxu0
        %2190 = vmatprep.mubr.f32.mxu0 0.0
        %2191 = vmatmul.mubr.f32.gmra.mxu0 %v2020
        %v2192 = vpop.f32.mrf.mxu0
        %v2193 = vadd.f32 0.0, %v2192
        %v2194 = vpop.f32.mrf.mxu0
        %2195 = vmatprep.mubr.f32.mxu0 0.0
        %2196 = vmatmul.mubr.f32.gmra.mxu0 %v2023
        %v2197 = vpop.f32.mrf.mxu0
        %v2198 = vadd.f32 0.0, %v2197
        %v2199 = vpop.f32.mrf.mxu0
        %2200 = vmatprep.mubr.f32.mxu0 0.0
        %2201 = vmatmul.mubr.f32.gmra.mxu0 %v2026
        %v2202 = vpop.f32.mrf.mxu0
        %v2203 = vadd.f32 0.0, %v2202
        %v2204 = vpop.f32.mrf.mxu0
        %2205 = vmatprep.mubr.f32.mxu0 0.0
        %2206 = vmatmul.mubr.f32.gmra.mxu0 %v2029
        %v2207 = vpop.f32.mrf.mxu0
        %v2208 = vadd.f32 0.0, %v2207
        %v2209 = vpop.f32.mrf.mxu0
        %2210 = vmatprep.mubr.f32.mxu0 0.0
        %2211 = vmatmul.mubr.f32.gmra.mxu0 %v2032
        %v2212 = vpop.f32.mrf.mxu0
        %v2213 = vadd.f32 0.0, %v2212
        %v2214 = vpop.f32.mrf.mxu0
        %2215 = vmatprep.mubr.f32.mxu0 0.0
        %2216 = vmatmul.mubr.f32.gmra.mxu0 %v2035
        %v2217 = vpop.f32.mrf.mxu0
        %v2218 = vadd.f32 0.0, %v2217
        %v2219 = vpop.f32.mrf.mxu0
        %2220 = vmatprep.mubr.f32.mxu0 0.0
        %2221 = vmatmul.mubr.f32.gmra.mxu0 %v2038
        %v2222 = vpop.f32.mrf.mxu0
        %v2223 = vadd.f32 0.0, %v2222
        %v2224 = vpop.f32.mrf.mxu0
        %2225 = vmatprep.mubr.f32.mxu0 0.0
        %2226 = vmatmul.mubr.f32.gmra.mxu0 %v2041
        %v2227 = vpop.f32.mrf.mxu0
        %v2228 = vadd.f32 0.0, %v2227
        %v2229 = vpop.f32.mrf.mxu0
        %2230 = vmatprep.mubr.f32.mxu0 0.0
        %2231 = vmatmul.mubr.f32.gmra.mxu0 %v2044
        %v2232 = vpop.f32.mrf.mxu0
        %v2233 = vadd.f32 0.0, %v2232
        %v2234 = vpop.f32.mrf.mxu0
        %2235 = vmatprep.mubr.f32.mxu0 0.0
        %2236 = vmatmul.mubr.f32.gmra.mxu0 %v2047
        %v2237 = vpop.f32.mrf.mxu0
        %v2238 = vadd.f32 0.0, %v2237
        %v2239 = vpop.f32.mrf.mxu0
        %2240 = vmatprep.mubr.f32.mxu0 0.0
        %2241 = vmatmul.mubr.f32.gmra.mxu0 %v2050
        %v2242 = vpop.f32.mrf.mxu0
        %v2243 = vadd.f32 0.0, %v2242
        %v2244 = vpop.f32.mrf.mxu0
        %2245 = vmatprep.mubr.f32.mxu0 0.0
        %2246 = vmatmul.mubr.f32.gmra.mxu0 %v2053
        %v2247 = vpop.f32.mrf.mxu0
        %v2248 = vadd.f32 0.0, %v2247
        %v2249 = vpop.f32.mrf.mxu0
        %2250 = vmatprep.mubr.f32.mxu0 0.0
        %2251 = vmatmul.mubr.f32.gmra.mxu0 %v2056
        %v2252 = vpop.f32.mrf.mxu0
        %v2253 = vadd.f32 0.0, %v2252
        %v2254 = vpop.f32.mrf.mxu0
        %2255 = vmatprep.mubr.f32.mxu0 0.0
        %2256 = vmatmul.mubr.f32.gmra.mxu0 %v2059
        %v2257 = vpop.f32.mrf.mxu0
        %v2258 = vadd.f32 0.0, %v2257
        %v2259 = vpop.f32.mrf.mxu0
        %2260 = vmatprep.mubr.f32.mxu0 0.0
        %2261 = vmatmul.mubr.f32.gmra.mxu0 %v2062
        %v2262 = vpop.f32.mrf.mxu0
        %v2263 = vadd.f32 0.0, %v2262
        %v2264 = vpop.f32.mrf.mxu0
        %2265 = vmatprep.mubr.f32.mxu0 0.0
        %2266 = vmatmul.mubr.f32.gmra.mxu0 %v2065
        %v2267 = vpop.f32.mrf.mxu0
        %v2268 = vadd.f32 0.0, %v2267
        %v2269 = vpop.f32.mrf.mxu0
        %2270 = vmatprep.mubr.f32.mxu0 0.0
        %2271 = vmatmul.mubr.f32.gmra.mxu0 %v2068
        %v2272 = vpop.f32.mrf.mxu0
        %v2273 = vadd.f32 0.0, %v2272
        %v2274 = vpop.f32.mrf.mxu0
        %2275 = vmatprep.mubr.f32.mxu0 0.0
        %2276 = vmatmul.mubr.f32.gmra.mxu0 %v2071
        %v2277 = vpop.f32.mrf.mxu0
        %v2278 = vadd.f32 0.0, %v2277
        %v2279 = vpop.f32.mrf.mxu0
        %2280 = vmatprep.mubr.f32.mxu0 0.0
        %2281 = vmatmul.mubr.f32.gmra.mxu0 %v2074
        %v2282 = vpop.f32.mrf.mxu0
        %v2283 = vadd.f32 0.0, %v2282
        %v2284 = vpop.f32.mrf.mxu0
        %2285 = vmatprep.mubr.f32.mxu0 0.0
        %2286 = vmatmul.mubr.f32.gmra.mxu0 %v2077
        %v2287 = vpop.f32.mrf.mxu0
        %v2288 = vadd.f32 0.0, %v2287
        %v2289 = vpop.f32.mrf.mxu0
        %2290 = vmatprep.mubr.f32.mxu0 0.0
        %2291 = vmatmul.mubr.f32.gmra.mxu0 %v2080
        %v2292 = vpop.f32.mrf.mxu0
        %v2293 = vadd.f32 0.0, %v2292
        %v2294 = vpop.f32.mrf.mxu0
        %2295 = vmatprep.mubr.f32.mxu0 0.0
        %2296 = vmatmul.mubr.f32.gmra.mxu0 %v2083
        %v2297 = vpop.f32.mrf.mxu0
        %v2298 = vadd.f32 0.0, %v2297
        %v2299 = vpop.f32.mrf.mxu0
        %2300 = vmatprep.mubr.f32.mxu0 0.0
        %2301 = vmatmul.mubr.f32.gmra.mxu0 %v2086
        %v2302 = vpop.f32.mrf.mxu0
        %v2303 = vadd.f32 0.0, %v2302
        %v2304 = vpop.f32.mrf.mxu0
        %2305 = vmatprep.mubr.f32.mxu0 0.0
        %2306 = vmatmul.mubr.f32.gmra.mxu0 %v2089
        %v2307 = vpop.f32.mrf.mxu0
        %v2308 = vadd.f32 0.0, %v2307
        %v2309 = vpop.f32.mrf.mxu0
        %2310 = vmatprep.mubr.f32.mxu0 0.0
        %2311 = vmatmul.mubr.f32.gmra.mxu0 %v2092
        %v2312 = vpop.f32.mrf.mxu0
        %v2313 = vadd.f32 0.0, %v2312
        %v2314 = vpop.f32.mrf.mxu0
        %2315 = vmatprep.mubr.f32.mxu0 0.0
        %2316 = vmatmul.mubr.f32.gmra.mxu0 %v2095
        %v2317 = vpop.f32.mrf.mxu0
        %v2318 = vadd.f32 0.0, %v2317
        %v2319 = vpop.f32.mrf.mxu0
        %2320 = vmatprep.mubr.f32.mxu0 0.0
        %2321 = vmatmul.mubr.f32.gmra.mxu0 %v2098
        %v2322 = vpop.f32.mrf.mxu0
        %v2323 = vadd.f32 0.0, %v2322
        %v2324 = vpop.f32.mrf.mxu0
        %2325 = vmatprep.mubr.f32.mxu0 0.0
        %2326 = vmatmul.mubr.f32.gmra.mxu0 %v2101
        %v2327 = vpop.f32.mrf.mxu0
        %v2328 = vadd.f32 0.0, %v2327
        %v2329 = vpop.f32.mrf.mxu0
        %2330 = vdwg.mxu0
        %v2331 = vadd.f32 %v1942, %v2173
        %v2332 = vadd.f32 %v1943, %v2178
        %v2333 = vadd.f32 %v1944, %v2183
        %v2334 = vadd.f32 %v1945, %v2188
        %v2335 = vadd.f32 %v1946, %v2193
        %v2336 = vadd.f32 %v1947, %v2198
        %v2337 = vadd.f32 %v1948, %v2203
        %v2338 = vadd.f32 %v1949, %v2208
        %v2339 = vadd.f32 %v1950, %v2213
        %v2340 = vadd.f32 %v1951, %v2218
        %v2341 = vadd.f32 %v1952, %v2223
        %v2342 = vadd.f32 %v1953, %v2228
        %v2343 = vadd.f32 %v1954, %v2233
        %v2344 = vadd.f32 %v1955, %v2238
        %v2345 = vadd.f32 %v1956, %v2243
        %v2346 = vadd.f32 %v1957, %v2248
        %v2347 = vadd.f32 %v1958, %v2253
        %v2348 = vadd.f32 %v1959, %v2258
        %v2349 = vadd.f32 %v1960, %v2263
        %v2350 = vadd.f32 %v1961, %v2268
        %v2351 = vadd.f32 %v1962, %v2273
        %v2352 = vadd.f32 %v1963, %v2278
        %v2353 = vadd.f32 %v1964, %v2283
        %v2354 = vadd.f32 %v1965, %v2288
        %v2355 = vadd.f32 %v1966, %v2293
        %v2356 = vadd.f32 %v1967, %v2298
        %v2357 = vadd.f32 %v1968, %v2303
        %v2358 = vadd.f32 %v1969, %v2308
        %v2359 = vadd.f32 %v1970, %v2313
        %v2360 = vadd.f32 %v1971, %v2318
        %v2361 = vadd.f32 %v1972, %v2323
        %v2362 = vadd.f32 %v1973, %v2328
        %v2363 = vld [vmem:[%s447 + $0x2] sm:$0xff]
        %v2364 = vld [vmem:[%s447 + $0xa] sm:$0xff]
        %v2365 = vld [vmem:[%s447 + $0x1a] sm:$0xff]
        %v2366 = vld [vmem:[%s447 + $0x22] sm:$0xff]
        %v2367 = vld [vmem:[%s447 + $0x32] sm:$0xff]
        %v2368 = vld [vmem:[%s447 + $0x3a] sm:$0xff]
        %v2369 = vld [vmem:[%s447 + $0x4a] sm:$0xff]
        %v2370 = vld [vmem:[%s447 + $0x52] sm:$0xff]
        %v2371 = vld [vmem:[%s447 + $0x62] sm:$0xff]
        %v2372 = vld [vmem:[%s447 + $0x6a] sm:$0xff]
        %v2373 = vld [vmem:[%s447 + $0x7a] sm:$0xff]
        %v2374 = vld [vmem:[%s447 + $0x82] sm:$0xff]
        %v2375 = vld [vmem:[%s447 + $0x92] sm:$0xff]
        %v2376 = vld [vmem:[%s447 + $0x9a] sm:$0xff]
        %v2377 = vld [vmem:[%s447 + $0xaa] sm:$0xff]
        %v2378 = vld [vmem:[%s447 + $0xb2] sm:$0xff]
        %v2379 = vld [vmem:[%s447 + $0xc2] sm:$0xff]
        %v2380 = vld [vmem:[%s447 + $0xca] sm:$0xff]
        %v2381 = vld [vmem:[%s447 + $0xda] sm:$0xff]
        %v2382 = vld [vmem:[%s447 + $0xe2] sm:$0xff]
        %v2383 = vld [vmem:[%s447 + $0xf2] sm:$0xff]
        %v2384 = vld [vmem:[%s447 + $0xfa] sm:$0xff]
        %v2385 = vld [vmem:[%s447 + $0x10a] sm:$0xff]
        %v2386 = vld [vmem:[%s447 + $0x112] sm:$0xff]
        %v2387 = vld [vmem:[%s447 + $0x122] sm:$0xff]
        %v2388 = vld [vmem:[%s447 + $0x12a] sm:$0xff]
        %v2389 = vld [vmem:[%s447 + $0x13a] sm:$0xff]
        %v2390 = vld [vmem:[%s447 + $0x142] sm:$0xff]
        %v2391 = vld [vmem:[%s447 + $0x152] sm:$0xff]
        %v2392 = vld [vmem:[%s447 + $0x15a] sm:$0xff]
        %v2393 = vld [vmem:[%s447 + $0x16a] sm:$0xff]
        %v2394 = vld [vmem:[%s447 + $0x172] sm:$0xff]
        %v2395 = vld [vmem:[%s1 + $0x5] sm:$0x1]
        %v2397 = vsel %vm330, %v2363, 0
        %v2400 = vsel %vm330, %v2364, 0
        %v2403 = vsel %vm330, %v2365, 0
        %v2406 = vsel %vm330, %v2366, 0
        %v2409 = vsel %vm330, %v2367, 0
        %v2412 = vsel %vm330, %v2368, 0
        %v2415 = vsel %vm330, %v2369, 0
        %v2418 = vsel %vm330, %v2370, 0
        %v2421 = vsel %vm330, %v2371, 0
        %v2424 = vsel %vm330, %v2372, 0
        %v2427 = vsel %vm330, %v2373, 0
        %v2430 = vsel %vm330, %v2374, 0
        %v2433 = vsel %vm330, %v2375, 0
        %v2436 = vsel %vm330, %v2376, 0
        %v2439 = vsel %vm330, %v2377, 0
        %v2442 = vsel %vm330, %v2378, 0
        %v2445 = vsel %vm330, %v2379, 0
        %v2448 = vsel %vm330, %v2380, 0
        %v2451 = vsel %vm330, %v2381, 0
        %v2454 = vsel %vm330, %v2382, 0
        %v2457 = vsel %vm330, %v2383, 0
        %v2460 = vsel %vm330, %v2384, 0
        %v2463 = vsel %vm330, %v2385, 0
        %v2466 = vsel %vm330, %v2386, 0
        %v2469 = vsel %vm330, %v2387, 0
        %v2472 = vsel %vm330, %v2388, 0
        %v2475 = vsel %vm330, %v2389, 0
        %v2478 = vsel %vm330, %v2390, 0
        %v2481 = vsel %vm330, %v2391, 0
        %v2484 = vsel %vm330, %v2392, 0
        %v2487 = vsel %vm330, %v2393, 0
        %v2490 = vsel %vm330, %v2394, 0
        %v2493 = vsel %vm643, %v2395, 0
        %2495 = vmatprep.subr.mxu0 0.0
        %2496 = vmatpush1.msra.mxu0 0.0
        %2497 = vmatprep.subr.mxu0 0.0
        %2498 = vmatpush1.msra.mxu0 0.0
        %2499 = vmatprep.subr.mxu0 0.0
        %2500 = vmatpush1.msra.mxu0 0.0
        %2501 = vmatprep.subr.mxu0 0.0
        %2502 = vmatpush1.msra.mxu0 0.0
        %2503 = vmatprep.subr.mxu0 0.0
        %2504 = vmatpush1.msra.mxu0 0.0
        %2505 = vmatprep.subr.mxu0 0.0
        %2506 = vmatpush1.msra.mxu0 0.0
        %2507 = vmatprep.subr.mxu0 0.0
        %2508 = vmatpush1.msra.mxu0 0.0
        %2509 = vmatprep.subr.mxu0 0.0
        %2510 = vmatpush1.msra.mxu0 0.0
        %2511 = vmatprep.subr.mxu0 0.0
        %2512 = vmatpush1.msra.mxu0 0.0
        %2513 = vmatprep.subr.mxu0 0.0
        %2514 = vmatpush1.msra.mxu0 0.0
        %2515 = vmatprep.subr.mxu0 0.0
        %2516 = vmatpush1.msra.mxu0 0.0
        %2517 = vmatprep.subr.mxu0 0.0
        %2518 = vmatpush1.msra.mxu0 0.0
        %2519 = vmatprep.subr.mxu0 0.0
        %2520 = vmatpush1.msra.mxu0 0.0
        %2521 = vmatprep.subr.mxu0 0.0
        %2522 = vmatpush1.msra.mxu0 0.0
        %2523 = vmatprep.subr.mxu0 0.0
        %2524 = vmatpush1.msra.mxu0 0.0
        %2525 = vmatprep.subr.mxu0 0.0
        %2526 = vmatpush1.msra.mxu0 %v2493
        %2527 = vmatprep.subr.mxu0 0.0
        %2528 = vmatpush2.msra.mxu0 0.0
        %2529 = vmatprep.subr.mxu0 0.0
        %2530 = vmatpush2.msra.mxu0 0.0
        %2531 = vmatprep.subr.mxu0 0.0
        %2532 = vmatpush2.msra.mxu0 0.0
        %2533 = vmatprep.subr.mxu0 0.0
        %2534 = vmatpush2.msra.mxu0 0.0
        %2535 = vmatprep.subr.mxu0 0.0
        %2536 = vmatpush2.msra.mxu0 0.0
        %2537 = vmatprep.subr.mxu0 0.0
        %2538 = vmatpush2.msra.mxu0 0.0
        %2539 = vmatprep.subr.mxu0 0.0
        %2540 = vmatpush2.msra.mxu0 0.0
        %2541 = vmatprep.subr.mxu0 0.0
        %2542 = vmatpush2.msra.mxu0 0.0
        %2543 = vmatprep.subr.mxu0 0.0
        %2544 = vmatpush2.msra.mxu0 0.0
        %2545 = vmatprep.subr.mxu0 0.0
        %2546 = vmatpush2.msra.mxu0 0.0
        %2547 = vmatprep.subr.mxu0 0.0
        %2548 = vmatpush2.msra.mxu0 0.0
        %2549 = vmatprep.subr.mxu0 0.0
        %2550 = vmatpush2.msra.mxu0 0.0
        %2551 = vmatprep.subr.mxu0 0.0
        %2552 = vmatpush2.msra.mxu0 0.0
        %2553 = vmatprep.subr.mxu0 0.0
        %2554 = vmatpush2.msra.mxu0 0.0
        %2555 = vmatprep.subr.mxu0 0.0
        %2556 = vmatpush2.msra.mxu0 0.0
        %2557 = vmatprep.subr.mxu0 0.0
        %2558 = vmatpush2.msra.mxu0 0.0
        %2559 = vmatprep.mubr.f32.mxu0 0.0
        %2560 = vmatmul.mubr.f32.gmra.mxu0 %v2397
        %v2561 = vpop.f32.mrf.mxu0
        %v2562 = vadd.f32 0.0, %v2561
        %v2563 = vpop.f32.mrf.mxu0
        %2564 = vmatprep.mubr.f32.mxu0 0.0
        %2565 = vmatmul.mubr.f32.gmra.mxu0 %v2400
        %v2566 = vpop.f32.mrf.mxu0
        %v2567 = vadd.f32 0.0, %v2566
        %v2568 = vpop.f32.mrf.mxu0
        %2569 = vmatprep.mubr.f32.mxu0 0.0
        %2570 = vmatmul.mubr.f32.gmra.mxu0 %v2403
        %v2571 = vpop.f32.mrf.mxu0
        %v2572 = vadd.f32 0.0, %v2571
        %v2573 = vpop.f32.mrf.mxu0
        %2574 = vmatprep.mubr.f32.mxu0 0.0
        %2575 = vmatmul.mubr.f32.gmra.mxu0 %v2406
        %v2576 = vpop.f32.mrf.mxu0
        %v2577 = vadd.f32 0.0, %v2576
        %v2578 = vpop.f32.mrf.mxu0
        %2579 = vmatprep.mubr.f32.mxu0 0.0
        %2580 = vmatmul.mubr.f32.gmra.mxu0 %v2409
        %v2581 = vpop.f32.mrf.mxu0
        %v2582 = vadd.f32 0.0, %v2581
        %v2583 = vpop.f32.mrf.mxu0
        %2584 = vmatprep.mubr.f32.mxu0 0.0
        %2585 = vmatmul.mubr.f32.gmra.mxu0 %v2412
        %v2586 = vpop.f32.mrf.mxu0
        %v2587 = vadd.f32 0.0, %v2586
        %v2588 = vpop.f32.mrf.mxu0
        %2589 = vmatprep.mubr.f32.mxu0 0.0
        %2590 = vmatmul.mubr.f32.gmra.mxu0 %v2415
        %v2591 = vpop.f32.mrf.mxu0
        %v2592 = vadd.f32 0.0, %v2591
        %v2593 = vpop.f32.mrf.mxu0
        %2594 = vmatprep.mubr.f32.mxu0 0.0
        %2595 = vmatmul.mubr.f32.gmra.mxu0 %v2418
        %v2596 = vpop.f32.mrf.mxu0
        %v2597 = vadd.f32 0.0, %v2596
        %v2598 = vpop.f32.mrf.mxu0
        %2599 = vmatprep.mubr.f32.mxu0 0.0
        %2600 = vmatmul.mubr.f32.gmra.mxu0 %v2421
        %v2601 = vpop.f32.mrf.mxu0
        %v2602 = vadd.f32 0.0, %v2601
        %v2603 = vpop.f32.mrf.mxu0
        %2604 = vmatprep.mubr.f32.mxu0 0.0
        %2605 = vmatmul.mubr.f32.gmra.mxu0 %v2424
        %v2606 = vpop.f32.mrf.mxu0
        %v2607 = vadd.f32 0.0, %v2606
        %v2608 = vpop.f32.mrf.mxu0
        %2609 = vmatprep.mubr.f32.mxu0 0.0
        %2610 = vmatmul.mubr.f32.gmra.mxu0 %v2427
        %v2611 = vpop.f32.mrf.mxu0
        %v2612 = vadd.f32 0.0, %v2611
        %v2613 = vpop.f32.mrf.mxu0
        %2614 = vmatprep.mubr.f32.mxu0 0.0
        %2615 = vmatmul.mubr.f32.gmra.mxu0 %v2430
        %v2616 = vpop.f32.mrf.mxu0
        %v2617 = vadd.f32 0.0, %v2616
        %v2618 = vpop.f32.mrf.mxu0
        %2619 = vmatprep.mubr.f32.mxu0 0.0
        %2620 = vmatmul.mubr.f32.gmra.mxu0 %v2433
        %v2621 = vpop.f32.mrf.mxu0
        %v2622 = vadd.f32 0.0, %v2621
        %v2623 = vpop.f32.mrf.mxu0
        %2624 = vmatprep.mubr.f32.mxu0 0.0
        %2625 = vmatmul.mubr.f32.gmra.mxu0 %v2436
        %v2626 = vpop.f32.mrf.mxu0
        %v2627 = vadd.f32 0.0, %v2626
        %v2628 = vpop.f32.mrf.mxu0
        %2629 = vmatprep.mubr.f32.mxu0 0.0
        %2630 = vmatmul.mubr.f32.gmra.mxu0 %v2439
        %v2631 = vpop.f32.mrf.mxu0
        %v2632 = vadd.f32 0.0, %v2631
        %v2633 = vpop.f32.mrf.mxu0
        %2634 = vmatprep.mubr.f32.mxu0 0.0
        %2635 = vmatmul.mubr.f32.gmra.mxu0 %v2442
        %v2636 = vpop.f32.mrf.mxu0
        %v2637 = vadd.f32 0.0, %v2636
        %v2638 = vpop.f32.mrf.mxu0
        %2639 = vmatprep.mubr.f32.mxu0 0.0
        %2640 = vmatmul.mubr.f32.gmra.mxu0 %v2445
        %v2641 = vpop.f32.mrf.mxu0
        %v2642 = vadd.f32 0.0, %v2641
        %v2643 = vpop.f32.mrf.mxu0
        %2644 = vmatprep.mubr.f32.mxu0 0.0
        %2645 = vmatmul.mubr.f32.gmra.mxu0 %v2448
        %v2646 = vpop.f32.mrf.mxu0
        %v2647 = vadd.f32 0.0, %v2646
        %v2648 = vpop.f32.mrf.mxu0
        %2649 = vmatprep.mubr.f32.mxu0 0.0
        %2650 = vmatmul.mubr.f32.gmra.mxu0 %v2451
        %v2651 = vpop.f32.mrf.mxu0
        %v2652 = vadd.f32 0.0, %v2651
        %v2653 = vpop.f32.mrf.mxu0
        %2654 = vmatprep.mubr.f32.mxu0 0.0
        %2655 = vmatmul.mubr.f32.gmra.mxu0 %v2454
        %v2656 = vpop.f32.mrf.mxu0
        %v2657 = vadd.f32 0.0, %v2656
        %v2658 = vpop.f32.mrf.mxu0
        %2659 = vmatprep.mubr.f32.mxu0 0.0
        %2660 = vmatmul.mubr.f32.gmra.mxu0 %v2457
        %v2661 = vpop.f32.mrf.mxu0
        %v2662 = vadd.f32 0.0, %v2661
        %v2663 = vpop.f32.mrf.mxu0
        %2664 = vmatprep.mubr.f32.mxu0 0.0
        %2665 = vmatmul.mubr.f32.gmra.mxu0 %v2460
        %v2666 = vpop.f32.mrf.mxu0
        %v2667 = vadd.f32 0.0, %v2666
        %v2668 = vpop.f32.mrf.mxu0
        %2669 = vmatprep.mubr.f32.mxu0 0.0
        %2670 = vmatmul.mubr.f32.gmra.mxu0 %v2463
        %v2671 = vpop.f32.mrf.mxu0
        %v2672 = vadd.f32 0.0, %v2671
        %v2673 = vpop.f32.mrf.mxu0
        %2674 = vmatprep.mubr.f32.mxu0 0.0
        %2675 = vmatmul.mubr.f32.gmra.mxu0 %v2466
        %v2676 = vpop.f32.mrf.mxu0
        %v2677 = vadd.f32 0.0, %v2676
        %v2678 = vpop.f32.mrf.mxu0
        %2679 = vmatprep.mubr.f32.mxu0 0.0
        %2680 = vmatmul.mubr.f32.gmra.mxu0 %v2469
        %v2681 = vpop.f32.mrf.mxu0
        %v2682 = vadd.f32 0.0, %v2681
        %v2683 = vpop.f32.mrf.mxu0
        %2684 = vmatprep.mubr.f32.mxu0 0.0
        %2685 = vmatmul.mubr.f32.gmra.mxu0 %v2472
        %v2686 = vpop.f32.mrf.mxu0
        %v2687 = vadd.f32 0.0, %v2686
        %v2688 = vpop.f32.mrf.mxu0
        %2689 = vmatprep.mubr.f32.mxu0 0.0
        %2690 = vmatmul.mubr.f32.gmra.mxu0 %v2475
        %v2691 = vpop.f32.mrf.mxu0
        %v2692 = vadd.f32 0.0, %v2691
        %v2693 = vpop.f32.mrf.mxu0
        %2694 = vmatprep.mubr.f32.mxu0 0.0
        %2695 = vmatmul.mubr.f32.gmra.mxu0 %v2478
        %v2696 = vpop.f32.mrf.mxu0
        %v2697 = vadd.f32 0.0, %v2696
        %v2698 = vpop.f32.mrf.mxu0
        %2699 = vmatprep.mubr.f32.mxu0 0.0
        %2700 = vmatmul.mubr.f32.gmra.mxu0 %v2481
        %v2701 = vpop.f32.mrf.mxu0
        %v2702 = vadd.f32 0.0, %v2701
        %v2703 = vpop.f32.mrf.mxu0
        %2704 = vmatprep.mubr.f32.mxu0 0.0
        %2705 = vmatmul.mubr.f32.gmra.mxu0 %v2484
        %v2706 = vpop.f32.mrf.mxu0
        %v2707 = vadd.f32 0.0, %v2706
        %v2708 = vpop.f32.mrf.mxu0
        %2709 = vmatprep.mubr.f32.mxu0 0.0
        %2710 = vmatmul.mubr.f32.gmra.mxu0 %v2487
        %v2711 = vpop.f32.mrf.mxu0
        %v2712 = vadd.f32 0.0, %v2711
        %v2713 = vpop.f32.mrf.mxu0
        %2714 = vmatprep.mubr.f32.mxu0 0.0
        %2715 = vmatmul.mubr.f32.gmra.mxu0 %v2490
        %v2716 = vpop.f32.mrf.mxu0
        %v2717 = vadd.f32 0.0, %v2716
        %v2718 = vpop.f32.mrf.mxu0
        %2719 = vdwg.mxu0
        %v2720 = vadd.f32 %v2331, %v2562
        %v2721 = vadd.f32 %v2332, %v2567
        %v2722 = vadd.f32 %v2333, %v2572
        %v2723 = vadd.f32 %v2334, %v2577
        %v2724 = vadd.f32 %v2335, %v2582
        %v2725 = vadd.f32 %v2336, %v2587
        %v2726 = vadd.f32 %v2337, %v2592
        %v2727 = vadd.f32 %v2338, %v2597
        %v2728 = vadd.f32 %v2339, %v2602
        %v2729 = vadd.f32 %v2340, %v2607
        %v2730 = vadd.f32 %v2341, %v2612
        %v2731 = vadd.f32 %v2342, %v2617
        %v2732 = vadd.f32 %v2343, %v2622
        %v2733 = vadd.f32 %v2344, %v2627
        %v2734 = vadd.f32 %v2345, %v2632
        %v2735 = vadd.f32 %v2346, %v2637
        %v2736 = vadd.f32 %v2347, %v2642
        %v2737 = vadd.f32 %v2348, %v2647
        %v2738 = vadd.f32 %v2349, %v2652
        %v2739 = vadd.f32 %v2350, %v2657
        %v2740 = vadd.f32 %v2351, %v2662
        %v2741 = vadd.f32 %v2352, %v2667
        %v2742 = vadd.f32 %v2353, %v2672
        %v2743 = vadd.f32 %v2354, %v2677
        %v2744 = vadd.f32 %v2355, %v2682
        %v2745 = vadd.f32 %v2356, %v2687
        %v2746 = vadd.f32 %v2357, %v2692
        %v2747 = vadd.f32 %v2358, %v2697
        %v2748 = vadd.f32 %v2359, %v2702
        %v2749 = vadd.f32 %v2360, %v2707
        %v2750 = vadd.f32 %v2361, %v2712
        %v2751 = vadd.f32 %v2362, %v2717
        %s2752 = scalar_lea.vmem [#allocation2], 48
        %v2753 = vld [vmem:[%s2752] sm:$0xff]
        %v2754 = vld [vmem:[%s2752 + $0x8] sm:$0xff]
        %v2755 = vld [vmem:[%s2752 + $0x18] sm:$0xff]
        %v2756 = vld [vmem:[%s2752 + $0x20] sm:$0xff]
        %v2757 = vld [vmem:[%s2752 + $0x30] sm:$0xff]
        %v2758 = vld [vmem:[%s2752 + $0x38] sm:$0xff]
        %v2759 = vld [vmem:[%s2752 + $0x48] sm:$0xff]
        %v2760 = vld [vmem:[%s2752 + $0x50] sm:$0xff]
        %v2761 = vld [vmem:[%s2752 + $0x60] sm:$0xff]
        %v2762 = vld [vmem:[%s2752 + $0x68] sm:$0xff]
        %v2763 = vld [vmem:[%s2752 + $0x78] sm:$0xff]
        %v2764 = vld [vmem:[%s2752 + $0x80] sm:$0xff]
        %v2765 = vld [vmem:[%s2752 + $0x90] sm:$0xff]
        %v2766 = vld [vmem:[%s2752 + $0x98] sm:$0xff]
        %v2767 = vld [vmem:[%s2752 + $0xa8] sm:$0xff]
        %v2768 = vld [vmem:[%s2752 + $0xb0] sm:$0xff]
        %v2769 = vld [vmem:[%s2752 + $0xc0] sm:$0xff]
        %v2770 = vld [vmem:[%s2752 + $0xc8] sm:$0xff]
        %v2771 = vld [vmem:[%s2752 + $0xd8] sm:$0xff]
        %v2772 = vld [vmem:[%s2752 + $0xe0] sm:$0xff]
        %v2773 = vld [vmem:[%s2752 + $0xf0] sm:$0xff]
        %v2774 = vld [vmem:[%s2752 + $0xf8] sm:$0xff]
        %v2775 = vld [vmem:[%s2752 + $0x108] sm:$0xff]
        %v2776 = vld [vmem:[%s2752 + $0x110] sm:$0xff]
        %v2777 = vld [vmem:[%s2752 + $0x120] sm:$0xff]
        %v2778 = vld [vmem:[%s2752 + $0x128] sm:$0xff]
        %v2779 = vld [vmem:[%s2752 + $0x138] sm:$0xff]
        %v2780 = vld [vmem:[%s2752 + $0x140] sm:$0xff]
        %v2781 = vld [vmem:[%s2752 + $0x150] sm:$0xff]
        %v2782 = vld [vmem:[%s2752 + $0x158] sm:$0xff]
        %v2783 = vld [vmem:[%s2752 + $0x168] sm:$0xff]
        %v2784 = vld [vmem:[%s2752 + $0x170] sm:$0xff]
        %v2785 = vld [vmem:[%s1 + $0x6] sm:$0x1]
        %v2787 = vsel %vm330, %v2753, 0
        %v2790 = vsel %vm330, %v2754, 0
        %v2793 = vsel %vm330, %v2755, 0
        %v2796 = vsel %vm330, %v2756, 0
        %v2799 = vsel %vm330, %v2757, 0
        %v2802 = vsel %vm330, %v2758, 0
        %v2805 = vsel %vm330, %v2759, 0
        %v2808 = vsel %vm330, %v2760, 0
        %v2811 = vsel %vm330, %v2761, 0
        %v2814 = vsel %vm330, %v2762, 0
        %v2817 = vsel %vm330, %v2763, 0
        %v2820 = vsel %vm330, %v2764, 0
        %v2823 = vsel %vm330, %v2765, 0
        %v2826 = vsel %vm330, %v2766, 0
        %v2829 = vsel %vm330, %v2767, 0
        %v2832 = vsel %vm330, %v2768, 0
        %v2835 = vsel %vm330, %v2769, 0
        %v2838 = vsel %vm330, %v2770, 0
        %v2841 = vsel %vm330, %v2771, 0
        %v2844 = vsel %vm330, %v2772, 0
        %v2847 = vsel %vm330, %v2773, 0
        %v2850 = vsel %vm330, %v2774, 0
        %v2853 = vsel %vm330, %v2775, 0
        %v2856 = vsel %vm330, %v2776, 0
        %v2859 = vsel %vm330, %v2777, 0
        %v2862 = vsel %vm330, %v2778, 0
        %v2865 = vsel %vm330, %v2779, 0
        %v2868 = vsel %vm330, %v2780, 0
        %v2871 = vsel %vm330, %v2781, 0
        %v2874 = vsel %vm330, %v2782, 0
        %v2877 = vsel %vm330, %v2783, 0
        %v2880 = vsel %vm330, %v2784, 0
        %v2883 = vsel %vm643, %v2785, 0
        %2885 = vmatprep.subr.mxu0 0.0
        %2886 = vmatpush1.msra.mxu0 0.0
        %2887 = vmatprep.subr.mxu0 0.0
        %2888 = vmatpush1.msra.mxu0 0.0
        %2889 = vmatprep.subr.mxu0 0.0
        %2890 = vmatpush1.msra.mxu0 0.0
        %2891 = vmatprep.subr.mxu0 0.0
        %2892 = vmatpush1.msra.mxu0 0.0
        %2893 = vmatprep.subr.mxu0 0.0
        %2894 = vmatpush1.msra.mxu0 0.0
        %2895 = vmatprep.subr.mxu0 0.0
        %2896 = vmatpush1.msra.mxu0 0.0
        %2897 = vmatprep.subr.mxu0 0.0
        %2898 = vmatpush1.msra.mxu0 0.0
        %2899 = vmatprep.subr.mxu0 0.0
        %2900 = vmatpush1.msra.mxu0 0.0
        %2901 = vmatprep.subr.mxu0 0.0
        %2902 = vmatpush1.msra.mxu0 0.0
        %2903 = vmatprep.subr.mxu0 0.0
        %2904 = vmatpush1.msra.mxu0 0.0
        %2905 = vmatprep.subr.mxu0 0.0
        %2906 = vmatpush1.msra.mxu0 0.0
        %2907 = vmatprep.subr.mxu0 0.0
        %2908 = vmatpush1.msra.mxu0 0.0
        %2909 = vmatprep.subr.mxu0 0.0
        %2910 = vmatpush1.msra.mxu0 0.0
        %2911 = vmatprep.subr.mxu0 0.0
        %2912 = vmatpush1.msra.mxu0 0.0
        %2913 = vmatprep.subr.mxu0 0.0
        %2914 = vmatpush1.msra.mxu0 0.0
        %2915 = vmatprep.subr.mxu0 0.0
        %2916 = vmatpush1.msra.mxu0 %v2883
        %2917 = vmatprep.subr.mxu0 0.0
        %2918 = vmatpush2.msra.mxu0 0.0
        %2919 = vmatprep.subr.mxu0 0.0
        %2920 = vmatpush2.msra.mxu0 0.0
        %2921 = vmatprep.subr.mxu0 0.0
        %2922 = vmatpush2.msra.mxu0 0.0
        %2923 = vmatprep.subr.mxu0 0.0
        %2924 = vmatpush2.msra.mxu0 0.0
        %2925 = vmatprep.subr.mxu0 0.0
        %2926 = vmatpush2.msra.mxu0 0.0
        %2927 = vmatprep.subr.mxu0 0.0
        %2928 = vmatpush2.msra.mxu0 0.0
        %2929 = vmatprep.subr.mxu0 0.0
        %2930 = vmatpush2.msra.mxu0 0.0
        %2931 = vmatprep.subr.mxu0 0.0
        %2932 = vmatpush2.msra.mxu0 0.0
        %2933 = vmatprep.subr.mxu0 0.0
        %2934 = vmatpush2.msra.mxu0 0.0
        %2935 = vmatprep.subr.mxu0 0.0
        %2936 = vmatpush2.msra.mxu0 0.0
        %2937 = vmatprep.subr.mxu0 0.0
        %2938 = vmatpush2.msra.mxu0 0.0
        %2939 = vmatprep.subr.mxu0 0.0
        %2940 = vmatpush2.msra.mxu0 0.0
        %2941 = vmatprep.subr.mxu0 0.0
        %2942 = vmatpush2.msra.mxu0 0.0
        %2943 = vmatprep.subr.mxu0 0.0
        %2944 = vmatpush2.msra.mxu0 0.0
        %2945 = vmatprep.subr.mxu0 0.0
        %2946 = vmatpush2.msra.mxu0 0.0
        %2947 = vmatprep.subr.mxu0 0.0
        %2948 = vmatpush2.msra.mxu0 0.0
        %2949 = vmatprep.mubr.f32.mxu0 0.0
        %2950 = vmatmul.mubr.f32.gmra.mxu0 %v2787
        %v2951 = vpop.f32.mrf.mxu0
        %v2952 = vadd.f32 0.0, %v2951
        %v2953 = vpop.f32.mrf.mxu0
        %2954 = vmatprep.mubr.f32.mxu0 0.0
        %2955 = vmatmul.mubr.f32.gmra.mxu0 %v2790
        %v2956 = vpop.f32.mrf.mxu0
        %v2957 = vadd.f32 0.0, %v2956
        %v2958 = vpop.f32.mrf.mxu0
        %2959 = vmatprep.mubr.f32.mxu0 0.0
        %2960 = vmatmul.mubr.f32.gmra.mxu0 %v2793
        %v2961 = vpop.f32.mrf.mxu0
        %v2962 = vadd.f32 0.0, %v2961
        %v2963 = vpop.f32.mrf.mxu0
        %2964 = vmatprep.mubr.f32.mxu0 0.0
        %2965 = vmatmul.mubr.f32.gmra.mxu0 %v2796
        %v2966 = vpop.f32.mrf.mxu0
        %v2967 = vadd.f32 0.0, %v2966
        %v2968 = vpop.f32.mrf.mxu0
        %2969 = vmatprep.mubr.f32.mxu0 0.0
        %2970 = vmatmul.mubr.f32.gmra.mxu0 %v2799
        %v2971 = vpop.f32.mrf.mxu0
        %v2972 = vadd.f32 0.0, %v2971
        %v2973 = vpop.f32.mrf.mxu0
        %2974 = vmatprep.mubr.f32.mxu0 0.0
        %2975 = vmatmul.mubr.f32.gmra.mxu0 %v2802
        %v2976 = vpop.f32.mrf.mxu0
        %v2977 = vadd.f32 0.0, %v2976
        %v2978 = vpop.f32.mrf.mxu0
        %2979 = vmatprep.mubr.f32.mxu0 0.0
        %2980 = vmatmul.mubr.f32.gmra.mxu0 %v2805
        %v2981 = vpop.f32.mrf.mxu0
        %v2982 = vadd.f32 0.0, %v2981
        %v2983 = vpop.f32.mrf.mxu0
        %2984 = vmatprep.mubr.f32.mxu0 0.0
        %2985 = vmatmul.mubr.f32.gmra.mxu0 %v2808
        %v2986 = vpop.f32.mrf.mxu0
        %v2987 = vadd.f32 0.0, %v2986
        %v2988 = vpop.f32.mrf.mxu0
        %2989 = vmatprep.mubr.f32.mxu0 0.0
        %2990 = vmatmul.mubr.f32.gmra.mxu0 %v2811
        %v2991 = vpop.f32.mrf.mxu0
        %v2992 = vadd.f32 0.0, %v2991
        %v2993 = vpop.f32.mrf.mxu0
        %2994 = vmatprep.mubr.f32.mxu0 0.0
        %2995 = vmatmul.mubr.f32.gmra.mxu0 %v2814
        %v2996 = vpop.f32.mrf.mxu0
        %v2997 = vadd.f32 0.0, %v2996
        %v2998 = vpop.f32.mrf.mxu0
        %2999 = vmatprep.mubr.f32.mxu0 0.0
        %3000 = vmatmul.mubr.f32.gmra.mxu0 %v2817
        %v3001 = vpop.f32.mrf.mxu0
        %v3002 = vadd.f32 0.0, %v3001
        %v3003 = vpop.f32.mrf.mxu0
        %3004 = vmatprep.mubr.f32.mxu0 0.0
        %3005 = vmatmul.mubr.f32.gmra.mxu0 %v2820
        %v3006 = vpop.f32.mrf.mxu0
        %v3007 = vadd.f32 0.0, %v3006
        %v3008 = vpop.f32.mrf.mxu0
        %3009 = vmatprep.mubr.f32.mxu0 0.0
        %3010 = vmatmul.mubr.f32.gmra.mxu0 %v2823
        %v3011 = vpop.f32.mrf.mxu0
        %v3012 = vadd.f32 0.0, %v3011
        %v3013 = vpop.f32.mrf.mxu0
        %3014 = vmatprep.mubr.f32.mxu0 0.0
        %3015 = vmatmul.mubr.f32.gmra.mxu0 %v2826
        %v3016 = vpop.f32.mrf.mxu0
        %v3017 = vadd.f32 0.0, %v3016
        %v3018 = vpop.f32.mrf.mxu0
        %3019 = vmatprep.mubr.f32.mxu0 0.0
        %3020 = vmatmul.mubr.f32.gmra.mxu0 %v2829
        %v3021 = vpop.f32.mrf.mxu0
        %v3022 = vadd.f32 0.0, %v3021
        %v3023 = vpop.f32.mrf.mxu0
        %3024 = vmatprep.mubr.f32.mxu0 0.0
        %3025 = vmatmul.mubr.f32.gmra.mxu0 %v2832
        %v3026 = vpop.f32.mrf.mxu0
        %v3027 = vadd.f32 0.0, %v3026
        %v3028 = vpop.f32.mrf.mxu0
        %3029 = vmatprep.mubr.f32.mxu0 0.0
        %3030 = vmatmul.mubr.f32.gmra.mxu0 %v2835
        %v3031 = vpop.f32.mrf.mxu0
        %v3032 = vadd.f32 0.0, %v3031
        %v3033 = vpop.f32.mrf.mxu0
        %3034 = vmatprep.mubr.f32.mxu0 0.0
        %3035 = vmatmul.mubr.f32.gmra.mxu0 %v2838
        %v3036 = vpop.f32.mrf.mxu0
        %v3037 = vadd.f32 0.0, %v3036
        %v3038 = vpop.f32.mrf.mxu0
        %3039 = vmatprep.mubr.f32.mxu0 0.0
        %3040 = vmatmul.mubr.f32.gmra.mxu0 %v2841
        %v3041 = vpop.f32.mrf.mxu0
        %v3042 = vadd.f32 0.0, %v3041
        %v3043 = vpop.f32.mrf.mxu0
        %3044 = vmatprep.mubr.f32.mxu0 0.0
        %3045 = vmatmul.mubr.f32.gmra.mxu0 %v2844
        %v3046 = vpop.f32.mrf.mxu0
        %v3047 = vadd.f32 0.0, %v3046
        %v3048 = vpop.f32.mrf.mxu0
        %3049 = vmatprep.mubr.f32.mxu0 0.0
        %3050 = vmatmul.mubr.f32.gmra.mxu0 %v2847
        %v3051 = vpop.f32.mrf.mxu0
        %v3052 = vadd.f32 0.0, %v3051
        %v3053 = vpop.f32.mrf.mxu0
        %3054 = vmatprep.mubr.f32.mxu0 0.0
        %3055 = vmatmul.mubr.f32.gmra.mxu0 %v2850
        %v3056 = vpop.f32.mrf.mxu0
        %v3057 = vadd.f32 0.0, %v3056
        %v3058 = vpop.f32.mrf.mxu0
        %3059 = vmatprep.mubr.f32.mxu0 0.0
        %3060 = vmatmul.mubr.f32.gmra.mxu0 %v2853
        %v3061 = vpop.f32.mrf.mxu0
        %v3062 = vadd.f32 0.0, %v3061
        %v3063 = vpop.f32.mrf.mxu0
        %3064 = vmatprep.mubr.f32.mxu0 0.0
        %3065 = vmatmul.mubr.f32.gmra.mxu0 %v2856
        %v3066 = vpop.f32.mrf.mxu0
        %v3067 = vadd.f32 0.0, %v3066
        %v3068 = vpop.f32.mrf.mxu0
        %3069 = vmatprep.mubr.f32.mxu0 0.0
        %3070 = vmatmul.mubr.f32.gmra.mxu0 %v2859
        %v3071 = vpop.f32.mrf.mxu0
        %v3072 = vadd.f32 0.0, %v3071
        %v3073 = vpop.f32.mrf.mxu0
        %3074 = vmatprep.mubr.f32.mxu0 0.0
        %3075 = vmatmul.mubr.f32.gmra.mxu0 %v2862
        %v3076 = vpop.f32.mrf.mxu0
        %v3077 = vadd.f32 0.0, %v3076
        %v3078 = vpop.f32.mrf.mxu0
        %3079 = vmatprep.mubr.f32.mxu0 0.0
        %3080 = vmatmul.mubr.f32.gmra.mxu0 %v2865
        %v3081 = vpop.f32.mrf.mxu0
        %v3082 = vadd.f32 0.0, %v3081
        %v3083 = vpop.f32.mrf.mxu0
        %3084 = vmatprep.mubr.f32.mxu0 0.0
        %3085 = vmatmul.mubr.f32.gmra.mxu0 %v2868
        %v3086 = vpop.f32.mrf.mxu0
        %v3087 = vadd.f32 0.0, %v3086
        %v3088 = vpop.f32.mrf.mxu0
        %3089 = vmatprep.mubr.f32.mxu0 0.0
        %3090 = vmatmul.mubr.f32.gmra.mxu0 %v2871
        %v3091 = vpop.f32.mrf.mxu0
        %v3092 = vadd.f32 0.0, %v3091
        %v3093 = vpop.f32.mrf.mxu0
        %3094 = vmatprep.mubr.f32.mxu0 0.0
        %3095 = vmatmul.mubr.f32.gmra.mxu0 %v2874
        %v3096 = vpop.f32.mrf.mxu0
        %v3097 = vadd.f32 0.0, %v3096
        %v3098 = vpop.f32.mrf.mxu0
        %3099 = vmatprep.mubr.f32.mxu0 0.0
        %3100 = vmatmul.mubr.f32.gmra.mxu0 %v2877
        %v3101 = vpop.f32.mrf.mxu0
        %v3102 = vadd.f32 0.0, %v3101
        %v3103 = vpop.f32.mrf.mxu0
        %3104 = vmatprep.mubr.f32.mxu0 0.0
        %3105 = vmatmul.mubr.f32.gmra.mxu0 %v2880
        %v3106 = vpop.f32.mrf.mxu0
        %v3107 = vadd.f32 0.0, %v3106
        %v3108 = vpop.f32.mrf.mxu0
        %3109 = vdwg.mxu0
        %v3110 = vadd.f32 %v2720, %v2952
        %v3111 = vadd.f32 %v2721, %v2957
        %v3112 = vadd.f32 %v2722, %v2962
        %v3113 = vadd.f32 %v2723, %v2967
        %v3114 = vadd.f32 %v2724, %v2972
        %v3115 = vadd.f32 %v2725, %v2977
        %v3116 = vadd.f32 %v2726, %v2982
        %v3117 = vadd.f32 %v2727, %v2987
        %v3118 = vadd.f32 %v2728, %v2992
        %v3119 = vadd.f32 %v2729, %v2997
        %v3120 = vadd.f32 %v2730, %v3002
        %v3121 = vadd.f32 %v2731, %v3007
        %v3122 = vadd.f32 %v2732, %v3012
        %v3123 = vadd.f32 %v2733, %v3017
        %v3124 = vadd.f32 %v2734, %v3022
        %v3125 = vadd.f32 %v2735, %v3027
        %v3126 = vadd.f32 %v2736, %v3032
        %v3127 = vadd.f32 %v2737, %v3037
        %v3128 = vadd.f32 %v2738, %v3042
        %v3129 = vadd.f32 %v2739, %v3047
        %v3130 = vadd.f32 %v2740, %v3052
        %v3131 = vadd.f32 %v2741, %v3057
        %v3132 = vadd.f32 %v2742, %v3062
        %v3133 = vadd.f32 %v2743, %v3067
        %v3134 = vadd.f32 %v2744, %v3072
        %v3135 = vadd.f32 %v2745, %v3077
        %v3136 = vadd.f32 %v2746, %v3082
        %v3137 = vadd.f32 %v2747, %v3087
        %v3138 = vadd.f32 %v2748, %v3092
        %v3139 = vadd.f32 %v2749, %v3097
        %v3140 = vadd.f32 %v2750, %v3102
        %v3141 = vadd.f32 %v2751, %v3107
        %v3142 = vld [vmem:[%s2752 + $0x1] sm:$0xff]
        %v3143 = vld [vmem:[%s2752 + $0x9] sm:$0xff]
        %v3144 = vld [vmem:[%s2752 + $0x19] sm:$0xff]
        %v3145 = vld [vmem:[%s2752 + $0x21] sm:$0xff]
        %v3146 = vld [vmem:[%s2752 + $0x31] sm:$0xff]
        %v3147 = vld [vmem:[%s2752 + $0x39] sm:$0xff]
        %v3148 = vld [vmem:[%s2752 + $0x49] sm:$0xff]
        %v3149 = vld [vmem:[%s2752 + $0x51] sm:$0xff]
        %v3150 = vld [vmem:[%s2752 + $0x61] sm:$0xff]
        %v3151 = vld [vmem:[%s2752 + $0x69] sm:$0xff]
        %v3152 = vld [vmem:[%s2752 + $0x79] sm:$0xff]
        %v3153 = vld [vmem:[%s2752 + $0x81] sm:$0xff]
        %v3154 = vld [vmem:[%s2752 + $0x91] sm:$0xff]
        %v3155 = vld [vmem:[%s2752 + $0x99] sm:$0xff]
        %v3156 = vld [vmem:[%s2752 + $0xa9] sm:$0xff]
        %v3157 = vld [vmem:[%s2752 + $0xb1] sm:$0xff]
        %v3158 = vld [vmem:[%s2752 + $0xc1] sm:$0xff]
        %v3159 = vld [vmem:[%s2752 + $0xc9] sm:$0xff]
        %v3160 = vld [vmem:[%s2752 + $0xd9] sm:$0xff]
        %v3161 = vld [vmem:[%s2752 + $0xe1] sm:$0xff]
        %v3162 = vld [vmem:[%s2752 + $0xf1] sm:$0xff]
        %v3163 = vld [vmem:[%s2752 + $0xf9] sm:$0xff]
        %v3164 = vld [vmem:[%s2752 + $0x109] sm:$0xff]
        %v3165 = vld [vmem:[%s2752 + $0x111] sm:$0xff]
        %v3166 = vld [vmem:[%s2752 + $0x121] sm:$0xff]
        %v3167 = vld [vmem:[%s2752 + $0x129] sm:$0xff]
        %v3168 = vld [vmem:[%s2752 + $0x139] sm:$0xff]
        %v3169 = vld [vmem:[%s2752 + $0x141] sm:$0xff]
        %v3170 = vld [vmem:[%s2752 + $0x151] sm:$0xff]
        %v3171 = vld [vmem:[%s2752 + $0x159] sm:$0xff]
        %v3172 = vld [vmem:[%s2752 + $0x169] sm:$0xff]
        %v3173 = vld [vmem:[%s2752 + $0x171] sm:$0xff]
        %v3174 = vld [vmem:[%s1 + $0x7] sm:$0x1]
        %v3176 = vsel %vm330, %v3142, 0
        %v3179 = vsel %vm330, %v3143, 0
        %v3182 = vsel %vm330, %v3144, 0
        %v3185 = vsel %vm330, %v3145, 0
        %v3188 = vsel %vm330, %v3146, 0
        %v3191 = vsel %vm330, %v3147, 0
        %v3194 = vsel %vm330, %v3148, 0
        %v3197 = vsel %vm330, %v3149, 0
        %v3200 = vsel %vm330, %v3150, 0
        %v3203 = vsel %vm330, %v3151, 0
        %v3206 = vsel %vm330, %v3152, 0
        %v3209 = vsel %vm330, %v3153, 0
        %v3212 = vsel %vm330, %v3154, 0
        %v3215 = vsel %vm330, %v3155, 0
        %v3218 = vsel %vm330, %v3156, 0
        %v3221 = vsel %vm330, %v3157, 0
        %v3224 = vsel %vm330, %v3158, 0
        %v3227 = vsel %vm330, %v3159, 0
        %v3230 = vsel %vm330, %v3160, 0
        %v3233 = vsel %vm330, %v3161, 0
        %v3236 = vsel %vm330, %v3162, 0
        %v3239 = vsel %vm330, %v3163, 0
        %v3242 = vsel %vm330, %v3164, 0
        %v3245 = vsel %vm330, %v3165, 0
        %v3248 = vsel %vm330, %v3166, 0
        %v3251 = vsel %vm330, %v3167, 0
        %v3254 = vsel %vm330, %v3168, 0
        %v3257 = vsel %vm330, %v3169, 0
        %v3260 = vsel %vm330, %v3170, 0
        %v3263 = vsel %vm330, %v3171, 0
        %v3266 = vsel %vm330, %v3172, 0
        %v3269 = vsel %vm330, %v3173, 0
        %v3272 = vsel %vm643, %v3174, 0
        %3274 = vmatprep.subr.mxu0 0.0
        %3275 = vmatpush1.msra.mxu0 0.0
        %3276 = vmatprep.subr.mxu0 0.0
        %3277 = vmatpush1.msra.mxu0 0.0
        %3278 = vmatprep.subr.mxu0 0.0
        %3279 = vmatpush1.msra.mxu0 0.0
        %3280 = vmatprep.subr.mxu0 0.0
        %3281 = vmatpush1.msra.mxu0 0.0
        %3282 = vmatprep.subr.mxu0 0.0
        %3283 = vmatpush1.msra.mxu0 0.0
        %3284 = vmatprep.subr.mxu0 0.0
        %3285 = vmatpush1.msra.mxu0 0.0
        %3286 = vmatprep.subr.mxu0 0.0
        %3287 = vmatpush1.msra.mxu0 0.0
        %3288 = vmatprep.subr.mxu0 0.0
        %3289 = vmatpush1.msra.mxu0 0.0
        %3290 = vmatprep.subr.mxu0 0.0
        %3291 = vmatpush1.msra.mxu0 0.0
        %3292 = vmatprep.subr.mxu0 0.0
        %3293 = vmatpush1.msra.mxu0 0.0
        %3294 = vmatprep.subr.mxu0 0.0
        %3295 = vmatpush1.msra.mxu0 0.0
        %3296 = vmatprep.subr.mxu0 0.0
        %3297 = vmatpush1.msra.mxu0 0.0
        %3298 = vmatprep.subr.mxu0 0.0
        %3299 = vmatpush1.msra.mxu0 0.0
        %3300 = vmatprep.subr.mxu0 0.0
        %3301 = vmatpush1.msra.mxu0 0.0
        %3302 = vmatprep.subr.mxu0 0.0
        %3303 = vmatpush1.msra.mxu0 0.0
        %3304 = vmatprep.subr.mxu0 0.0
        %3305 = vmatpush1.msra.mxu0 %v3272
        %3306 = vmatprep.subr.mxu0 0.0
        %3307 = vmatpush2.msra.mxu0 0.0
        %3308 = vmatprep.subr.mxu0 0.0
        %3309 = vmatpush2.msra.mxu0 0.0
        %3310 = vmatprep.subr.mxu0 0.0
        %3311 = vmatpush2.msra.mxu0 0.0
        %3312 = vmatprep.subr.mxu0 0.0
        %3313 = vmatpush2.msra.mxu0 0.0
        %3314 = vmatprep.subr.mxu0 0.0
        %3315 = vmatpush2.msra.mxu0 0.0
        %3316 = vmatprep.subr.mxu0 0.0
        %3317 = vmatpush2.msra.mxu0 0.0
        %3318 = vmatprep.subr.mxu0 0.0
        %3319 = vmatpush2.msra.mxu0 0.0
        %3320 = vmatprep.subr.mxu0 0.0
        %3321 = vmatpush2.msra.mxu0 0.0
        %3322 = vmatprep.subr.mxu0 0.0
        %3323 = vmatpush2.msra.mxu0 0.0
        %3324 = vmatprep.subr.mxu0 0.0
        %3325 = vmatpush2.msra.mxu0 0.0
        %3326 = vmatprep.subr.mxu0 0.0
        %3327 = vmatpush2.msra.mxu0 0.0
        %3328 = vmatprep.subr.mxu0 0.0
        %3329 = vmatpush2.msra.mxu0 0.0
        %3330 = vmatprep.subr.mxu0 0.0
        %3331 = vmatpush2.msra.mxu0 0.0
        %3332 = vmatprep.subr.mxu0 0.0
        %3333 = vmatpush2.msra.mxu0 0.0
        %3334 = vmatprep.subr.mxu0 0.0
        %3335 = vmatpush2.msra.mxu0 0.0
        %3336 = vmatprep.subr.mxu0 0.0
        %3337 = vmatpush2.msra.mxu0 0.0
        %3338 = vmatprep.mubr.f32.mxu0 0.0
        %3339 = vmatmul.mubr.f32.gmra.mxu0 %v3176
        %v3340 = vpop.f32.mrf.mxu0
        %v3341 = vadd.f32 0.0, %v3340
        %v3342 = vpop.f32.mrf.mxu0
        %3343 = vmatprep.mubr.f32.mxu0 0.0
        %3344 = vmatmul.mubr.f32.gmra.mxu0 %v3179
        %v3345 = vpop.f32.mrf.mxu0
        %v3346 = vadd.f32 0.0, %v3345
        %v3347 = vpop.f32.mrf.mxu0
        %3348 = vmatprep.mubr.f32.mxu0 0.0
        %3349 = vmatmul.mubr.f32.gmra.mxu0 %v3182
        %v3350 = vpop.f32.mrf.mxu0
        %v3351 = vadd.f32 0.0, %v3350
        %v3352 = vpop.f32.mrf.mxu0
        %3353 = vmatprep.mubr.f32.mxu0 0.0
        %3354 = vmatmul.mubr.f32.gmra.mxu0 %v3185
        %v3355 = vpop.f32.mrf.mxu0
        %v3356 = vadd.f32 0.0, %v3355
        %v3357 = vpop.f32.mrf.mxu0
        %3358 = vmatprep.mubr.f32.mxu0 0.0
        %3359 = vmatmul.mubr.f32.gmra.mxu0 %v3188
        %v3360 = vpop.f32.mrf.mxu0
        %v3361 = vadd.f32 0.0, %v3360
        %v3362 = vpop.f32.mrf.mxu0
        %3363 = vmatprep.mubr.f32.mxu0 0.0
        %3364 = vmatmul.mubr.f32.gmra.mxu0 %v3191
        %v3365 = vpop.f32.mrf.mxu0
        %v3366 = vadd.f32 0.0, %v3365
        %v3367 = vpop.f32.mrf.mxu0
        %3368 = vmatprep.mubr.f32.mxu0 0.0
        %3369 = vmatmul.mubr.f32.gmra.mxu0 %v3194
        %v3370 = vpop.f32.mrf.mxu0
        %v3371 = vadd.f32 0.0, %v3370
        %v3372 = vpop.f32.mrf.mxu0
        %3373 = vmatprep.mubr.f32.mxu0 0.0
        %3374 = vmatmul.mubr.f32.gmra.mxu0 %v3197
        %v3375 = vpop.f32.mrf.mxu0
        %v3376 = vadd.f32 0.0, %v3375
        %v3377 = vpop.f32.mrf.mxu0
        %3378 = vmatprep.mubr.f32.mxu0 0.0
        %3379 = vmatmul.mubr.f32.gmra.mxu0 %v3200
        %v3380 = vpop.f32.mrf.mxu0
        %v3381 = vadd.f32 0.0, %v3380
        %v3382 = vpop.f32.mrf.mxu0
        %3383 = vmatprep.mubr.f32.mxu0 0.0
        %3384 = vmatmul.mubr.f32.gmra.mxu0 %v3203
        %v3385 = vpop.f32.mrf.mxu0
        %v3386 = vadd.f32 0.0, %v3385
        %v3387 = vpop.f32.mrf.mxu0
        %3388 = vmatprep.mubr.f32.mxu0 0.0
        %3389 = vmatmul.mubr.f32.gmra.mxu0 %v3206
        %v3390 = vpop.f32.mrf.mxu0
        %v3391 = vadd.f32 0.0, %v3390
        %v3392 = vpop.f32.mrf.mxu0
        %3393 = vmatprep.mubr.f32.mxu0 0.0
        %3394 = vmatmul.mubr.f32.gmra.mxu0 %v3209
        %v3395 = vpop.f32.mrf.mxu0
        %v3396 = vadd.f32 0.0, %v3395
        %v3397 = vpop.f32.mrf.mxu0
        %3398 = vmatprep.mubr.f32.mxu0 0.0
        %3399 = vmatmul.mubr.f32.gmra.mxu0 %v3212
        %v3400 = vpop.f32.mrf.mxu0
        %v3401 = vadd.f32 0.0, %v3400
        %v3402 = vpop.f32.mrf.mxu0
        %3403 = vmatprep.mubr.f32.mxu0 0.0
        %3404 = vmatmul.mubr.f32.gmra.mxu0 %v3215
        %v3405 = vpop.f32.mrf.mxu0
        %v3406 = vadd.f32 0.0, %v3405
        %v3407 = vpop.f32.mrf.mxu0
        %3408 = vmatprep.mubr.f32.mxu0 0.0
        %3409 = vmatmul.mubr.f32.gmra.mxu0 %v3218
        %v3410 = vpop.f32.mrf.mxu0
        %v3411 = vadd.f32 0.0, %v3410
        %v3412 = vpop.f32.mrf.mxu0
        %3413 = vmatprep.mubr.f32.mxu0 0.0
        %3414 = vmatmul.mubr.f32.gmra.mxu0 %v3221
        %v3415 = vpop.f32.mrf.mxu0
        %v3416 = vadd.f32 0.0, %v3415
        %v3417 = vpop.f32.mrf.mxu0
        %3418 = vmatprep.mubr.f32.mxu0 0.0
        %3419 = vmatmul.mubr.f32.gmra.mxu0 %v3224
        %v3420 = vpop.f32.mrf.mxu0
        %v3421 = vadd.f32 0.0, %v3420
        %v3422 = vpop.f32.mrf.mxu0
        %3423 = vmatprep.mubr.f32.mxu0 0.0
        %3424 = vmatmul.mubr.f32.gmra.mxu0 %v3227
        %v3425 = vpop.f32.mrf.mxu0
        %v3426 = vadd.f32 0.0, %v3425
        %v3427 = vpop.f32.mrf.mxu0
        %3428 = vmatprep.mubr.f32.mxu0 0.0
        %3429 = vmatmul.mubr.f32.gmra.mxu0 %v3230
        %v3430 = vpop.f32.mrf.mxu0
        %v3431 = vadd.f32 0.0, %v3430
        %v3432 = vpop.f32.mrf.mxu0
        %3433 = vmatprep.mubr.f32.mxu0 0.0
        %3434 = vmatmul.mubr.f32.gmra.mxu0 %v3233
        %v3435 = vpop.f32.mrf.mxu0
        %v3436 = vadd.f32 0.0, %v3435
        %v3437 = vpop.f32.mrf.mxu0
        %3438 = vmatprep.mubr.f32.mxu0 0.0
        %3439 = vmatmul.mubr.f32.gmra.mxu0 %v3236
        %v3440 = vpop.f32.mrf.mxu0
        %v3441 = vadd.f32 0.0, %v3440
        %v3442 = vpop.f32.mrf.mxu0
        %3443 = vmatprep.mubr.f32.mxu0 0.0
        %3444 = vmatmul.mubr.f32.gmra.mxu0 %v3239
        %v3445 = vpop.f32.mrf.mxu0
        %v3446 = vadd.f32 0.0, %v3445
        %v3447 = vpop.f32.mrf.mxu0
        %3448 = vmatprep.mubr.f32.mxu0 0.0
        %3449 = vmatmul.mubr.f32.gmra.mxu0 %v3242
        %v3450 = vpop.f32.mrf.mxu0
        %v3451 = vadd.f32 0.0, %v3450
        %v3452 = vpop.f32.mrf.mxu0
        %3453 = vmatprep.mubr.f32.mxu0 0.0
        %3454 = vmatmul.mubr.f32.gmra.mxu0 %v3245
        %v3455 = vpop.f32.mrf.mxu0
        %v3456 = vadd.f32 0.0, %v3455
        %v3457 = vpop.f32.mrf.mxu0
        %3458 = vmatprep.mubr.f32.mxu0 0.0
        %3459 = vmatmul.mubr.f32.gmra.mxu0 %v3248
        %v3460 = vpop.f32.mrf.mxu0
        %v3461 = vadd.f32 0.0, %v3460
        %v3462 = vpop.f32.mrf.mxu0
        %3463 = vmatprep.mubr.f32.mxu0 0.0
        %3464 = vmatmul.mubr.f32.gmra.mxu0 %v3251
        %v3465 = vpop.f32.mrf.mxu0
        %v3466 = vadd.f32 0.0, %v3465
        %v3467 = vpop.f32.mrf.mxu0
        %3468 = vmatprep.mubr.f32.mxu0 0.0
        %3469 = vmatmul.mubr.f32.gmra.mxu0 %v3254
        %v3470 = vpop.f32.mrf.mxu0
        %v3471 = vadd.f32 0.0, %v3470
        %v3472 = vpop.f32.mrf.mxu0
        %3473 = vmatprep.mubr.f32.mxu0 0.0
        %3474 = vmatmul.mubr.f32.gmra.mxu0 %v3257
        %v3475 = vpop.f32.mrf.mxu0
        %v3476 = vadd.f32 0.0, %v3475
        %v3477 = vpop.f32.mrf.mxu0
        %3478 = vmatprep.mubr.f32.mxu0 0.0
        %3479 = vmatmul.mubr.f32.gmra.mxu0 %v3260
        %v3480 = vpop.f32.mrf.mxu0
        %v3481 = vadd.f32 0.0, %v3480
        %v3482 = vpop.f32.mrf.mxu0
        %3483 = vmatprep.mubr.f32.mxu0 0.0
        %3484 = vmatmul.mubr.f32.gmra.mxu0 %v3263
        %v3485 = vpop.f32.mrf.mxu0
        %v3486 = vadd.f32 0.0, %v3485
        %v3487 = vpop.f32.mrf.mxu0
        %3488 = vmatprep.mubr.f32.mxu0 0.0
        %3489 = vmatmul.mubr.f32.gmra.mxu0 %v3266
        %v3490 = vpop.f32.mrf.mxu0
        %v3491 = vadd.f32 0.0, %v3490
        %v3492 = vpop.f32.mrf.mxu0
        %3493 = vmatprep.mubr.f32.mxu0 0.0
        %3494 = vmatmul.mubr.f32.gmra.mxu0 %v3269
        %v3495 = vpop.f32.mrf.mxu0
        %v3496 = vadd.f32 0.0, %v3495
        %v3497 = vpop.f32.mrf.mxu0
        %3498 = vdwg.mxu0
        %v3499 = vadd.f32 %v3110, %v3341
        %v3500 = vadd.f32 %v3111, %v3346
        %v3501 = vadd.f32 %v3112, %v3351
        %v3502 = vadd.f32 %v3113, %v3356
        %v3503 = vadd.f32 %v3114, %v3361
        %v3504 = vadd.f32 %v3115, %v3366
        %v3505 = vadd.f32 %v3116, %v3371
        %v3506 = vadd.f32 %v3117, %v3376
        %v3507 = vadd.f32 %v3118, %v3381
        %v3508 = vadd.f32 %v3119, %v3386
        %v3509 = vadd.f32 %v3120, %v3391
        %v3510 = vadd.f32 %v3121, %v3396
        %v3511 = vadd.f32 %v3122, %v3401
        %v3512 = vadd.f32 %v3123, %v3406
        %v3513 = vadd.f32 %v3124, %v3411
        %v3514 = vadd.f32 %v3125, %v3416
        %v3515 = vadd.f32 %v3126, %v3421
        %v3516 = vadd.f32 %v3127, %v3426
        %v3517 = vadd.f32 %v3128, %v3431
        %v3518 = vadd.f32 %v3129, %v3436
        %v3519 = vadd.f32 %v3130, %v3441
        %v3520 = vadd.f32 %v3131, %v3446
        %v3521 = vadd.f32 %v3132, %v3451
        %v3522 = vadd.f32 %v3133, %v3456
        %v3523 = vadd.f32 %v3134, %v3461
        %v3524 = vadd.f32 %v3135, %v3466
        %v3525 = vadd.f32 %v3136, %v3471
        %v3526 = vadd.f32 %v3137, %v3476
        %v3527 = vadd.f32 %v3138, %v3481
        %v3528 = vadd.f32 %v3139, %v3486
        %v3529 = vadd.f32 %v3140, %v3491
        %v3530 = vadd.f32 %v3141, %v3496
        %v3531 = vld [vmem:[%s2752 + $0x2] sm:$0xff]
        %v3532 = vld [vmem:[%s2752 + $0xa] sm:$0xff]
        %v3533 = vld [vmem:[%s2752 + $0x1a] sm:$0xff]
        %v3534 = vld [vmem:[%s2752 + $0x22] sm:$0xff]
        %v3535 = vld [vmem:[%s2752 + $0x32] sm:$0xff]
        %v3536 = vld [vmem:[%s2752 + $0x3a] sm:$0xff]
        %v3537 = vld [vmem:[%s2752 + $0x4a] sm:$0xff]
        %v3538 = vld [vmem:[%s2752 + $0x52] sm:$0xff]
        %v3539 = vld [vmem:[%s2752 + $0x62] sm:$0xff]
        %v3540 = vld [vmem:[%s2752 + $0x6a] sm:$0xff]
        %v3541 = vld [vmem:[%s2752 + $0x7a] sm:$0xff]
        %v3542 = vld [vmem:[%s2752 + $0x82] sm:$0xff]
        %v3543 = vld [vmem:[%s2752 + $0x92] sm:$0xff]
        %v3544 = vld [vmem:[%s2752 + $0x9a] sm:$0xff]
        %v3545 = vld [vmem:[%s2752 + $0xaa] sm:$0xff]
        %v3546 = vld [vmem:[%s2752 + $0xb2] sm:$0xff]
        %v3547 = vld [vmem:[%s2752 + $0xc2] sm:$0xff]
        %v3548 = vld [vmem:[%s2752 + $0xca] sm:$0xff]
        %v3549 = vld [vmem:[%s2752 + $0xda] sm:$0xff]
        %v3550 = vld [vmem:[%s2752 + $0xe2] sm:$0xff]
        %v3551 = vld [vmem:[%s2752 + $0xf2] sm:$0xff]
        %v3552 = vld [vmem:[%s2752 + $0xfa] sm:$0xff]
        %v3553 = vld [vmem:[%s2752 + $0x10a] sm:$0xff]
        %v3554 = vld [vmem:[%s2752 + $0x112] sm:$0xff]
        %v3555 = vld [vmem:[%s2752 + $0x122] sm:$0xff]
        %v3556 = vld [vmem:[%s2752 + $0x12a] sm:$0xff]
        %v3557 = vld [vmem:[%s2752 + $0x13a] sm:$0xff]
        %v3558 = vld [vmem:[%s2752 + $0x142] sm:$0xff]
        %v3559 = vld [vmem:[%s2752 + $0x152] sm:$0xff]
        %v3560 = vld [vmem:[%s2752 + $0x15a] sm:$0xff]
        %v3561 = vld [vmem:[%s2752 + $0x16a] sm:$0xff]
        %v3562 = vld [vmem:[%s2752 + $0x172] sm:$0xff]
        %v3563 = vld [vmem:[%s1 + $0x8] sm:$0x1]
        %v3565 = vsel %vm330, %v3531, 0
        %v3568 = vsel %vm330, %v3532, 0
        %v3571 = vsel %vm330, %v3533, 0
        %v3574 = vsel %vm330, %v3534, 0
        %v3577 = vsel %vm330, %v3535, 0
        %v3580 = vsel %vm330, %v3536, 0
        %v3583 = vsel %vm330, %v3537, 0
        %v3586 = vsel %vm330, %v3538, 0
        %v3589 = vsel %vm330, %v3539, 0
        %v3592 = vsel %vm330, %v3540, 0
        %v3595 = vsel %vm330, %v3541, 0
        %v3598 = vsel %vm330, %v3542, 0
        %v3601 = vsel %vm330, %v3543, 0
        %v3604 = vsel %vm330, %v3544, 0
        %v3607 = vsel %vm330, %v3545, 0
        %v3610 = vsel %vm330, %v3546, 0
        %v3613 = vsel %vm330, %v3547, 0
        %v3616 = vsel %vm330, %v3548, 0
        %v3619 = vsel %vm330, %v3549, 0
        %v3622 = vsel %vm330, %v3550, 0
        %v3625 = vsel %vm330, %v3551, 0
        %v3628 = vsel %vm330, %v3552, 0
        %v3631 = vsel %vm330, %v3553, 0
        %v3634 = vsel %vm330, %v3554, 0
        %v3637 = vsel %vm330, %v3555, 0
        %v3640 = vsel %vm330, %v3556, 0
        %v3643 = vsel %vm330, %v3557, 0
        %v3646 = vsel %vm330, %v3558, 0
        %v3649 = vsel %vm330, %v3559, 0
        %v3652 = vsel %vm330, %v3560, 0
        %v3655 = vsel %vm330, %v3561, 0
        %v3658 = vsel %vm330, %v3562, 0
        %v3661 = vsel %vm643, %v3563, 0
        %3663 = vmatprep.subr.mxu0 0.0
        %3664 = vmatpush1.msra.mxu0 0.0
        %3665 = vmatprep.subr.mxu0 0.0
        %3666 = vmatpush1.msra.mxu0 0.0
        %3667 = vmatprep.subr.mxu0 0.0
        %3668 = vmatpush1.msra.mxu0 0.0
        %3669 = vmatprep.subr.mxu0 0.0
        %3670 = vmatpush1.msra.mxu0 0.0
        %3671 = vmatprep.subr.mxu0 0.0
        %3672 = vmatpush1.msra.mxu0 0.0
        %3673 = vmatprep.subr.mxu0 0.0
        %3674 = vmatpush1.msra.mxu0 0.0
        %3675 = vmatprep.subr.mxu0 0.0
        %3676 = vmatpush1.msra.mxu0 0.0
        %3677 = vmatprep.subr.mxu0 0.0
        %3678 = vmatpush1.msra.mxu0 0.0
        %3679 = vmatprep.subr.mxu0 0.0
        %3680 = vmatpush1.msra.mxu0 0.0
        %3681 = vmatprep.subr.mxu0 0.0
        %3682 = vmatpush1.msra.mxu0 0.0
        %3683 = vmatprep.subr.mxu0 0.0
        %3684 = vmatpush1.msra.mxu0 0.0
        %3685 = vmatprep.subr.mxu0 0.0
        %3686 = vmatpush1.msra.mxu0 0.0
        %3687 = vmatprep.subr.mxu0 0.0
        %3688 = vmatpush1.msra.mxu0 0.0
        %3689 = vmatprep.subr.mxu0 0.0
        %3690 = vmatpush1.msra.mxu0 0.0
        %3691 = vmatprep.subr.mxu0 0.0
        %3692 = vmatpush1.msra.mxu0 0.0
        %3693 = vmatprep.subr.mxu0 0.0
        %3694 = vmatpush1.msra.mxu0 %v3661
        %3695 = vmatprep.subr.mxu0 0.0
        %3696 = vmatpush2.msra.mxu0 0.0
        %3697 = vmatprep.subr.mxu0 0.0
        %3698 = vmatpush2.msra.mxu0 0.0
        %3699 = vmatprep.subr.mxu0 0.0
        %3700 = vmatpush2.msra.mxu0 0.0
        %3701 = vmatprep.subr.mxu0 0.0
        %3702 = vmatpush2.msra.mxu0 0.0
        %3703 = vmatprep.subr.mxu0 0.0
        %3704 = vmatpush2.msra.mxu0 0.0
        %3705 = vmatprep.subr.mxu0 0.0
        %3706 = vmatpush2.msra.mxu0 0.0
        %3707 = vmatprep.subr.mxu0 0.0
        %3708 = vmatpush2.msra.mxu0 0.0
        %3709 = vmatprep.subr.mxu0 0.0
        %3710 = vmatpush2.msra.mxu0 0.0
        %3711 = vmatprep.subr.mxu0 0.0
        %3712 = vmatpush2.msra.mxu0 0.0
        %3713 = vmatprep.subr.mxu0 0.0
        %3714 = vmatpush2.msra.mxu0 0.0
        %3715 = vmatprep.subr.mxu0 0.0
        %3716 = vmatpush2.msra.mxu0 0.0
        %3717 = vmatprep.subr.mxu0 0.0
        %3718 = vmatpush2.msra.mxu0 0.0
        %3719 = vmatprep.subr.mxu0 0.0
        %3720 = vmatpush2.msra.mxu0 0.0
        %3721 = vmatprep.subr.mxu0 0.0
        %3722 = vmatpush2.msra.mxu0 0.0
        %3723 = vmatprep.subr.mxu0 0.0
        %3724 = vmatpush2.msra.mxu0 0.0
        %3725 = vmatprep.subr.mxu0 0.0
        %3726 = vmatpush2.msra.mxu0 0.0
        %3727 = vmatprep.mubr.f32.mxu0 0.0
        %3728 = vmatmul.mubr.f32.gmra.mxu0 %v3565
        %v3729 = vpop.f32.mrf.mxu0
        %v3730 = vadd.f32 0.0, %v3729
        %v3731 = vpop.f32.mrf.mxu0
        %3732 = vmatprep.mubr.f32.mxu0 0.0
        %3733 = vmatmul.mubr.f32.gmra.mxu0 %v3568
        %v3734 = vpop.f32.mrf.mxu0
        %v3735 = vadd.f32 0.0, %v3734
        %v3736 = vpop.f32.mrf.mxu0
        %3737 = vmatprep.mubr.f32.mxu0 0.0
        %3738 = vmatmul.mubr.f32.gmra.mxu0 %v3571
        %v3739 = vpop.f32.mrf.mxu0
        %v3740 = vadd.f32 0.0, %v3739
        %v3741 = vpop.f32.mrf.mxu0
        %3742 = vmatprep.mubr.f32.mxu0 0.0
        %3743 = vmatmul.mubr.f32.gmra.mxu0 %v3574
        %v3744 = vpop.f32.mrf.mxu0
        %v3745 = vadd.f32 0.0, %v3744
        %v3746 = vpop.f32.mrf.mxu0
        %3747 = vmatprep.mubr.f32.mxu0 0.0
        %3748 = vmatmul.mubr.f32.gmra.mxu0 %v3577
        %v3749 = vpop.f32.mrf.mxu0
        %v3750 = vadd.f32 0.0, %v3749
        %v3751 = vpop.f32.mrf.mxu0
        %3752 = vmatprep.mubr.f32.mxu0 0.0
        %3753 = vmatmul.mubr.f32.gmra.mxu0 %v3580
        %v3754 = vpop.f32.mrf.mxu0
        %v3755 = vadd.f32 0.0, %v3754
        %v3756 = vpop.f32.mrf.mxu0
        %3757 = vmatprep.mubr.f32.mxu0 0.0
        %3758 = vmatmul.mubr.f32.gmra.mxu0 %v3583
        %v3759 = vpop.f32.mrf.mxu0
        %v3760 = vadd.f32 0.0, %v3759
        %v3761 = vpop.f32.mrf.mxu0
        %3762 = vmatprep.mubr.f32.mxu0 0.0
        %3763 = vmatmul.mubr.f32.gmra.mxu0 %v3586
        %v3764 = vpop.f32.mrf.mxu0
        %v3765 = vadd.f32 0.0, %v3764
        %v3766 = vpop.f32.mrf.mxu0
        %3767 = vmatprep.mubr.f32.mxu0 0.0
        %3768 = vmatmul.mubr.f32.gmra.mxu0 %v3589
        %v3769 = vpop.f32.mrf.mxu0
        %v3770 = vadd.f32 0.0, %v3769
        %v3771 = vpop.f32.mrf.mxu0
        %3772 = vmatprep.mubr.f32.mxu0 0.0
        %3773 = vmatmul.mubr.f32.gmra.mxu0 %v3592
        %v3774 = vpop.f32.mrf.mxu0
        %v3775 = vadd.f32 0.0, %v3774
        %v3776 = vpop.f32.mrf.mxu0
        %3777 = vmatprep.mubr.f32.mxu0 0.0
        %3778 = vmatmul.mubr.f32.gmra.mxu0 %v3595
        %v3779 = vpop.f32.mrf.mxu0
        %v3780 = vadd.f32 0.0, %v3779
        %v3781 = vpop.f32.mrf.mxu0
        %3782 = vmatprep.mubr.f32.mxu0 0.0
        %3783 = vmatmul.mubr.f32.gmra.mxu0 %v3598
        %v3784 = vpop.f32.mrf.mxu0
        %v3785 = vadd.f32 0.0, %v3784
        %v3786 = vpop.f32.mrf.mxu0
        %3787 = vmatprep.mubr.f32.mxu0 0.0
        %3788 = vmatmul.mubr.f32.gmra.mxu0 %v3601
        %v3789 = vpop.f32.mrf.mxu0
        %v3790 = vadd.f32 0.0, %v3789
        %v3791 = vpop.f32.mrf.mxu0
        %3792 = vmatprep.mubr.f32.mxu0 0.0
        %3793 = vmatmul.mubr.f32.gmra.mxu0 %v3604
        %v3794 = vpop.f32.mrf.mxu0
        %v3795 = vadd.f32 0.0, %v3794
        %v3796 = vpop.f32.mrf.mxu0
        %3797 = vmatprep.mubr.f32.mxu0 0.0
        %3798 = vmatmul.mubr.f32.gmra.mxu0 %v3607
        %v3799 = vpop.f32.mrf.mxu0
        %v3800 = vadd.f32 0.0, %v3799
        %v3801 = vpop.f32.mrf.mxu0
        %3802 = vmatprep.mubr.f32.mxu0 0.0
        %3803 = vmatmul.mubr.f32.gmra.mxu0 %v3610
        %v3804 = vpop.f32.mrf.mxu0
        %v3805 = vadd.f32 0.0, %v3804
        %v3806 = vpop.f32.mrf.mxu0
        %3807 = vmatprep.mubr.f32.mxu0 0.0
        %3808 = vmatmul.mubr.f32.gmra.mxu0 %v3613
        %v3809 = vpop.f32.mrf.mxu0
        %v3810 = vadd.f32 0.0, %v3809
        %v3811 = vpop.f32.mrf.mxu0
        %3812 = vmatprep.mubr.f32.mxu0 0.0
        %3813 = vmatmul.mubr.f32.gmra.mxu0 %v3616
        %v3814 = vpop.f32.mrf.mxu0
        %v3815 = vadd.f32 0.0, %v3814
        %v3816 = vpop.f32.mrf.mxu0
        %3817 = vmatprep.mubr.f32.mxu0 0.0
        %3818 = vmatmul.mubr.f32.gmra.mxu0 %v3619
        %v3819 = vpop.f32.mrf.mxu0
        %v3820 = vadd.f32 0.0, %v3819
        %v3821 = vpop.f32.mrf.mxu0
        %3822 = vmatprep.mubr.f32.mxu0 0.0
        %3823 = vmatmul.mubr.f32.gmra.mxu0 %v3622
        %v3824 = vpop.f32.mrf.mxu0
        %v3825 = vadd.f32 0.0, %v3824
        %v3826 = vpop.f32.mrf.mxu0
        %3827 = vmatprep.mubr.f32.mxu0 0.0
        %3828 = vmatmul.mubr.f32.gmra.mxu0 %v3625
        %v3829 = vpop.f32.mrf.mxu0
        %v3830 = vadd.f32 0.0, %v3829
        %v3831 = vpop.f32.mrf.mxu0
        %3832 = vmatprep.mubr.f32.mxu0 0.0
        %3833 = vmatmul.mubr.f32.gmra.mxu0 %v3628
        %v3834 = vpop.f32.mrf.mxu0
        %v3835 = vadd.f32 0.0, %v3834
        %v3836 = vpop.f32.mrf.mxu0
        %3837 = vmatprep.mubr.f32.mxu0 0.0
        %3838 = vmatmul.mubr.f32.gmra.mxu0 %v3631
        %v3839 = vpop.f32.mrf.mxu0
        %v3840 = vadd.f32 0.0, %v3839
        %v3841 = vpop.f32.mrf.mxu0
        %3842 = vmatprep.mubr.f32.mxu0 0.0
        %3843 = vmatmul.mubr.f32.gmra.mxu0 %v3634
        %v3844 = vpop.f32.mrf.mxu0
        %v3845 = vadd.f32 0.0, %v3844
        %v3846 = vpop.f32.mrf.mxu0
        %3847 = vmatprep.mubr.f32.mxu0 0.0
        %3848 = vmatmul.mubr.f32.gmra.mxu0 %v3637
        %v3849 = vpop.f32.mrf.mxu0
        %v3850 = vadd.f32 0.0, %v3849
        %v3851 = vpop.f32.mrf.mxu0
        %3852 = vmatprep.mubr.f32.mxu0 0.0
        %3853 = vmatmul.mubr.f32.gmra.mxu0 %v3640
        %v3854 = vpop.f32.mrf.mxu0
        %v3855 = vadd.f32 0.0, %v3854
        %v3856 = vpop.f32.mrf.mxu0
        %3857 = vmatprep.mubr.f32.mxu0 0.0
        %3858 = vmatmul.mubr.f32.gmra.mxu0 %v3643
        %v3859 = vpop.f32.mrf.mxu0
        %v3860 = vadd.f32 0.0, %v3859
        %v3861 = vpop.f32.mrf.mxu0
        %3862 = vmatprep.mubr.f32.mxu0 0.0
        %3863 = vmatmul.mubr.f32.gmra.mxu0 %v3646
        %v3864 = vpop.f32.mrf.mxu0
        %v3865 = vadd.f32 0.0, %v3864
        %v3866 = vpop.f32.mrf.mxu0
        %3867 = vmatprep.mubr.f32.mxu0 0.0
        %3868 = vmatmul.mubr.f32.gmra.mxu0 %v3649
        %v3869 = vpop.f32.mrf.mxu0
        %v3870 = vadd.f32 0.0, %v3869
        %v3871 = vpop.f32.mrf.mxu0
        %3872 = vmatprep.mubr.f32.mxu0 0.0
        %3873 = vmatmul.mubr.f32.gmra.mxu0 %v3652
        %v3874 = vpop.f32.mrf.mxu0
        %v3875 = vadd.f32 0.0, %v3874
        %v3876 = vpop.f32.mrf.mxu0
        %3877 = vmatprep.mubr.f32.mxu0 0.0
        %3878 = vmatmul.mubr.f32.gmra.mxu0 %v3655
        %v3879 = vpop.f32.mrf.mxu0
        %v3880 = vadd.f32 0.0, %v3879
        %v3881 = vpop.f32.mrf.mxu0
        %3882 = vmatprep.mubr.f32.mxu0 0.0
        %3883 = vmatmul.mubr.f32.gmra.mxu0 %v3658
        %v3884 = vpop.f32.mrf.mxu0
        %v3885 = vadd.f32 0.0, %v3884
        %v3886 = vpop.f32.mrf.mxu0
        %3887 = vdwg.mxu0
        %v3888 = vadd.f32 %v3499, %v3730
        %v3889 = vadd.f32 %v3500, %v3735
        %v3890 = vadd.f32 %v3501, %v3740
        %v3891 = vadd.f32 %v3502, %v3745
        %v3892 = vadd.f32 %v3503, %v3750
        %v3893 = vadd.f32 %v3504, %v3755
        %v3894 = vadd.f32 %v3505, %v3760
        %v3895 = vadd.f32 %v3506, %v3765
        %v3896 = vadd.f32 %v3507, %v3770
        %v3897 = vadd.f32 %v3508, %v3775
        %v3898 = vadd.f32 %v3509, %v3780
        %v3899 = vadd.f32 %v3510, %v3785
        %v3900 = vadd.f32 %v3511, %v3790
        %v3901 = vadd.f32 %v3512, %v3795
        %v3902 = vadd.f32 %v3513, %v3800
        %v3903 = vadd.f32 %v3514, %v3805
        %v3904 = vadd.f32 %v3515, %v3810
        %v3905 = vadd.f32 %v3516, %v3815
        %v3906 = vadd.f32 %v3517, %v3820
        %v3907 = vadd.f32 %v3518, %v3825
        %v3908 = vadd.f32 %v3519, %v3830
        %v3909 = vadd.f32 %v3520, %v3835
        %v3910 = vadd.f32 %v3521, %v3840
        %v3911 = vadd.f32 %v3522, %v3845
        %v3912 = vadd.f32 %v3523, %v3850
        %v3913 = vadd.f32 %v3524, %v3855
        %v3914 = vadd.f32 %v3525, %v3860
        %v3915 = vadd.f32 %v3526, %v3865
        %v3916 = vadd.f32 %v3527, %v3870
        %v3917 = vadd.f32 %v3528, %v3875
        %v3918 = vadd.f32 %v3529, %v3880
        %v3919 = vadd.f32 %v3530, %v3885
        %v3921 = vlaneseq
        %v3922 = vshrl.u32 %v3921, 7
        %v3923 = vsub.s32 0, %v3922
        %v3924 = vrot.slane %v480, %v3923
        %v3926 = vadd.f32 %v3888, %v3924
        %v3927 = vadd.f32 %v3889, %v3924
        %v3928 = vadd.f32 %v3890, %v3924
        %v3929 = vadd.f32 %v3891, %v3924
        %v3930 = vadd.f32 %v3892, %v3924
        %v3931 = vadd.f32 %v3893, %v3924
        %v3932 = vadd.f32 %v3894, %v3924
        %v3933 = vadd.f32 %v3895, %v3924
        %v3934 = vadd.f32 %v3896, %v3924
        %v3935 = vadd.f32 %v3897, %v3924
        %v3936 = vadd.f32 %v3898, %v3924
        %v3937 = vadd.f32 %v3899, %v3924
        %v3938 = vadd.f32 %v3900, %v3924
        %v3939 = vadd.f32 %v3901, %v3924
        %v3940 = vadd.f32 %v3902, %v3924
        %v3941 = vadd.f32 %v3903, %v3924
        %v3942 = vadd.f32 %v3904, %v3924
        %v3943 = vadd.f32 %v3905, %v3924
        %v3944 = vadd.f32 %v3906, %v3924
        %v3945 = vadd.f32 %v3907, %v3924
        %v3946 = vadd.f32 %v3908, %v3924
        %v3947 = vadd.f32 %v3909, %v3924
        %v3948 = vadd.f32 %v3910, %v3924
        %v3949 = vadd.f32 %v3911, %v3924
        %v3950 = vadd.f32 %v3912, %v3924
        %v3951 = vadd.f32 %v3913, %v3924
        %v3952 = vadd.f32 %v3914, %v3924
        %v3953 = vadd.f32 %v3915, %v3924
        %v3954 = vadd.f32 %v3916, %v3924
        %v3955 = vadd.f32 %v3917, %v3924
        %v3956 = vadd.f32 %v3918, %v3924
        %v3957 = vadd.f32 %v3919, %v3924
        %v3958 = vmax.f32 %v3926, 0.0
        %v3959 = vmax.f32 %v3927, 0.0
        %v3960 = vmax.f32 %v3928, 0.0
        %v3961 = vmax.f32 %v3929, 0.0
        %v3962 = vmax.f32 %v3930, 0.0
        %v3963 = vmax.f32 %v3931, 0.0
        %v3964 = vmax.f32 %v3932, 0.0
        %v3965 = vmax.f32 %v3933, 0.0
        %v3966 = vmax.f32 %v3934, 0.0
        %v3967 = vmax.f32 %v3935, 0.0
        %v3968 = vmax.f32 %v3936, 0.0
        %v3969 = vmax.f32 %v3937, 0.0
        %v3970 = vmax.f32 %v3938, 0.0
        %v3971 = vmax.f32 %v3939, 0.0
        %v3972 = vmax.f32 %v3940, 0.0
        %v3973 = vmax.f32 %v3941, 0.0
        %v3974 = vmax.f32 %v3942, 0.0
        %v3975 = vmax.f32 %v3943, 0.0
        %v3976 = vmax.f32 %v3944, 0.0
        %v3977 = vmax.f32 %v3945, 0.0
        %v3978 = vmax.f32 %v3946, 0.0
        %v3979 = vmax.f32 %v3947, 0.0
        %v3980 = vmax.f32 %v3948, 0.0
        %v3981 = vmax.f32 %v3949, 0.0
        %v3982 = vmax.f32 %v3950, 0.0
        %v3983 = vmax.f32 %v3951, 0.0
        %v3984 = vmax.f32 %v3952, 0.0
        %v3985 = vmax.f32 %v3953, 0.0
        %v3986 = vmax.f32 %v3954, 0.0
        %v3987 = vmax.f32 %v3955, 0.0
        %v3988 = vmax.f32 %v3956, 0.0
        %v3989 = vmax.f32 %v3957, 0.0
        %3990 = vst.msk [vmem:[#allocation5] sm:$0xff] %vm386, %v3958
        %3991 = vst.msk [vmem:[#allocation5 + $0x8] sm:$0xff] %vm386, %v3959
        %3992 = vst.msk [vmem:[#allocation5 + $0x10] sm:$0xff] %vm386, %v3960
        %3993 = vst.msk [vmem:[#allocation5 + $0x18] sm:$0xff] %vm386, %v3961
        %3994 = vst.msk [vmem:[#allocation5 + $0x20] sm:$0xff] %vm386, %v3962
        %3995 = vst.msk [vmem:[#allocation5 + $0x28] sm:$0xff] %vm386, %v3963
        %3996 = vst.msk [vmem:[#allocation5 + $0x30] sm:$0xff] %vm386, %v3964
        %3997 = vst.msk [vmem:[#allocation5 + $0x38] sm:$0xff] %vm386, %v3965
        %3998 = vst.msk [vmem:[#allocation5 + $0x40] sm:$0xff] %vm386, %v3966
        %3999 = vst.msk [vmem:[#allocation5 + $0x48] sm:$0xff] %vm386, %v3967
        %4000 = vst.msk [vmem:[#allocation5 + $0x50] sm:$0xff] %vm386, %v3968
        %4001 = vst.msk [vmem:[#allocation5 + $0x58] sm:$0xff] %vm386, %v3969
        %4002 = vst.msk [vmem:[#allocation5 + $0x60] sm:$0xff] %vm386, %v3970
        %4003 = vst.msk [vmem:[#allocation5 + $0x68] sm:$0xff] %vm386, %v3971
        %4004 = vst.msk [vmem:[#allocation5 + $0x70] sm:$0xff] %vm386, %v3972
        %4005 = vst.msk [vmem:[#allocation5 + $0x78] sm:$0xff] %vm386, %v3973
        %4006 = vst.msk [vmem:[#allocation5 + $0x80] sm:$0xff] %vm386, %v3974
        %4007 = vst.msk [vmem:[#allocation5 + $0x88] sm:$0xff] %vm386, %v3975
        %4008 = vst.msk [vmem:[#allocation5 + $0x90] sm:$0xff] %vm386, %v3976
        %4009 = vst.msk [vmem:[#allocation5 + $0x98] sm:$0xff] %vm386, %v3977
        %4010 = vst.msk [vmem:[#allocation5 + $0xa0] sm:$0xff] %vm386, %v3978
        %4011 = vst.msk [vmem:[#allocation5 + $0xa8] sm:$0xff] %vm386, %v3979
        %4012 = vst.msk [vmem:[#allocation5 + $0xb0] sm:$0xff] %vm386, %v3980
        %4013 = vst.msk [vmem:[#allocation5 + $0xb8] sm:$0xff] %vm386, %v3981
        %4014 = vst.msk [vmem:[#allocation5 + $0xc0] sm:$0xff] %vm386, %v3982
        %4015 = vst.msk [vmem:[#allocation5 + $0xc8] sm:$0xff] %vm386, %v3983
        %4016 = vst.msk [vmem:[#allocation5 + $0xd0] sm:$0xff] %vm386, %v3984
        %4017 = vst.msk [vmem:[#allocation5 + $0xd8] sm:$0xff] %vm386, %v3985
        %4018 = vst.msk [vmem:[#allocation5 + $0xe0] sm:$0xff] %vm386, %v3986
        %4019 = vst.msk [vmem:[#allocation5 + $0xe8] sm:$0xff] %vm386, %v3987
        %4020 = vst.msk [vmem:[#allocation5 + $0xf0] sm:$0xff] %vm386, %v3988
        %4021 = vst.msk [vmem:[#allocation5 + $0xf8] sm:$0xff] %vm386, %v3989
        %v4022 = vld [vmem:[#allocation5] sm:$0xff]
        %v4023 = vld [vmem:[#allocation5 + $0x8] sm:$0xff]
        %v4024 = vld [vmem:[#allocation5 + $0x20] sm:$0xff]
        %v4025 = vld [vmem:[#allocation5 + $0x28] sm:$0xff]
        %v4026 = vld [vmem:[#allocation5 + $0x40] sm:$0xff]
        %v4027 = vld [vmem:[#allocation5 + $0x48] sm:$0xff]
        %v4028 = vld [vmem:[#allocation5 + $0x60] sm:$0xff]
        %v4029 = vld [vmem:[#allocation5 + $0x68] sm:$0xff]
        %v4030 = vld [vmem:[#allocation5 + $0x80] sm:$0xff]
        %v4031 = vld [vmem:[#allocation5 + $0x88] sm:$0xff]
        %v4032 = vld [vmem:[#allocation5 + $0xa0] sm:$0xff]
        %v4033 = vld [vmem:[#allocation5 + $0xa8] sm:$0xff]
        %v4034 = vld [vmem:[#allocation5 + $0xc0] sm:$0xff]
        %v4035 = vld [vmem:[#allocation5 + $0xc8] sm:$0xff]
        %v4036 = vld [vmem:[#allocation5 + $0xe0] sm:$0xff]
        %v4037 = vld [vmem:[#allocation5 + $0xe8] sm:$0xff]
        %s4038 = scalar_lea.vmem [#allocation5], 16
        %v4039 = vld [vmem:[%s4038] sm:$0xff]
        %v4040 = vld [vmem:[%s4038 + $0x8] sm:$0xff]
        %v4041 = vld [vmem:[%s4038 + $0x20] sm:$0xff]
        %v4042 = vld [vmem:[%s4038 + $0x28] sm:$0xff]
        %v4043 = vld [vmem:[%s4038 + $0x40] sm:$0xff]
        %v4044 = vld [vmem:[%s4038 + $0x48] sm:$0xff]
        %v4045 = vld [vmem:[%s4038 + $0x60] sm:$0xff]
        %v4046 = vld [vmem:[%s4038 + $0x68] sm:$0xff]
        %v4047 = vld [vmem:[%s4038 + $0x80] sm:$0xff]
        %v4048 = vld [vmem:[%s4038 + $0x88] sm:$0xff]
        %v4049 = vld [vmem:[%s4038 + $0xa0] sm:$0xff]
        %v4050 = vld [vmem:[%s4038 + $0xa8] sm:$0xff]
        %v4051 = vld [vmem:[%s4038 + $0xc0] sm:$0xff]
        %v4052 = vld [vmem:[%s4038 + $0xc8] sm:$0xff]
        %v4053 = vld [vmem:[%s4038 + $0xe0] sm:$0xff]
        %v4054 = vld [vmem:[%s4038 + $0xe8] sm:$0xff]
        %v4055 = vmax.f32 %v4022, %v4039
        %v4056 = vmax.f32 %v4023, %v4040
        %v4057 = vmax.f32 %v4024, %v4041
        %v4058 = vmax.f32 %v4025, %v4042
        %v4059 = vmax.f32 %v4026, %v4043
        %v4060 = vmax.f32 %v4027, %v4044
        %v4061 = vmax.f32 %v4028, %v4045
        %v4062 = vmax.f32 %v4029, %v4046
        %v4063 = vmax.f32 %v4030, %v4047
        %v4064 = vmax.f32 %v4031, %v4048
        %v4065 = vmax.f32 %v4032, %v4049
        %v4066 = vmax.f32 %v4033, %v4050
        %v4067 = vmax.f32 %v4034, %v4051
        %v4068 = vmax.f32 %v4035, %v4052
        %v4069 = vmax.f32 %v4036, %v4053
        %v4070 = vmax.f32 %v4037, %v4054
        %4071 = vst.msk [vmem:[#allocation6] sm:$0xff] %vm386, %v4055
        %4072 = vst.msk [vmem:[#allocation6 + $0x8] sm:$0xff] %vm386, %v4056
        %4073 = vst.msk [vmem:[#allocation6 + $0x10] sm:$0xff] %vm386, %v4057
        %4074 = vst.msk [vmem:[#allocation6 + $0x18] sm:$0xff] %vm386, %v4058
        %4075 = vst.msk [vmem:[#allocation6 + $0x20] sm:$0xff] %vm386, %v4059
        %4076 = vst.msk [vmem:[#allocation6 + $0x28] sm:$0xff] %vm386, %v4060
        %4077 = vst.msk [vmem:[#allocation6 + $0x30] sm:$0xff] %vm386, %v4061
        %4078 = vst.msk [vmem:[#allocation6 + $0x38] sm:$0xff] %vm386, %v4062
        %4079 = vst.msk [vmem:[#allocation6 + $0x40] sm:$0xff] %vm386, %v4063
        %4080 = vst.msk [vmem:[#allocation6 + $0x48] sm:$0xff] %vm386, %v4064
        %4081 = vst.msk [vmem:[#allocation6 + $0x50] sm:$0xff] %vm386, %v4065
        %4082 = vst.msk [vmem:[#allocation6 + $0x58] sm:$0xff] %vm386, %v4066
        %4083 = vst.msk [vmem:[#allocation6 + $0x60] sm:$0xff] %vm386, %v4067
        %4084 = vst.msk [vmem:[#allocation6 + $0x68] sm:$0xff] %vm386, %v4068
        %4085 = vst.msk [vmem:[#allocation6 + $0x70] sm:$0xff] %vm386, %v4069
        %4086 = vst.msk [vmem:[#allocation6 + $0x78] sm:$0xff] %vm386, %v4070
        %v4087 = vld [vmem:[#allocation6] ss:$2 sm:$0xff]
        %s4088 = scalar_lea.vmem [#allocation6], 16
        %v4089 = vld [vmem:[%s4088] ss:$2 sm:$0xff]
        %s4090 = scalar_lea.vmem [#allocation6], 32
        %v4091 = vld [vmem:[%s4090] ss:$2 sm:$0xff]
        %s4092 = scalar_lea.vmem [#allocation6], 48
        %v4093 = vld [vmem:[%s4092] ss:$2 sm:$0xff]
        %s4094 = scalar_lea.vmem [#allocation6], 64
        %v4095 = vld [vmem:[%s4094] ss:$2 sm:$0xff]
        %s4096 = scalar_lea.vmem [#allocation6], 80
        %v4097 = vld [vmem:[%s4096] ss:$2 sm:$0xff]
        %s4098 = scalar_lea.vmem [#allocation6], 96
        %v4099 = vld [vmem:[%s4098] ss:$2 sm:$0xff]
        %s4100 = scalar_lea.vmem [#allocation6], 112
        %v4101 = vld [vmem:[%s4100] ss:$2 sm:$0xff]
        %s4102 = scalar_lea.vmem [#allocation6], 1
        %v4103 = vld [vmem:[%s4102] ss:$2 sm:$0xff]
        %s4104 = scalar_lea.vmem [#allocation6], 17
        %v4105 = vld [vmem:[%s4104] ss:$2 sm:$0xff]
        %s4106 = scalar_lea.vmem [#allocation6], 33
        %v4107 = vld [vmem:[%s4106] ss:$2 sm:$0xff]
        %s4108 = scalar_lea.vmem [#allocation6], 49
        %v4109 = vld [vmem:[%s4108] ss:$2 sm:$0xff]
        %s4110 = scalar_lea.vmem [#allocation6], 65
        %v4111 = vld [vmem:[%s4110] ss:$2 sm:$0xff]
        %s4112 = scalar_lea.vmem [#allocation6], 81
        %v4113 = vld [vmem:[%s4112] ss:$2 sm:$0xff]
        %s4114 = scalar_lea.vmem [#allocation6], 97
        %v4115 = vld [vmem:[%s4114] ss:$2 sm:$0xff]
        %s4116 = scalar_lea.vmem [#allocation6], 113
        %v4117 = vld [vmem:[%s4116] ss:$2 sm:$0xff]
        %v4118 = vmax.f32 %v4087, %v4103
        %v4119 = vmax.f32 %v4089, %v4105
        %v4120 = vmax.f32 %v4091, %v4107
        %v4121 = vmax.f32 %v4093, %v4109
        %v4122 = vmax.f32 %v4095, %v4111
        %v4123 = vmax.f32 %v4097, %v4113
        %v4124 = vmax.f32 %v4099, %v4115
        %v4125 = vmax.f32 %v4101, %v4117
        %s4126 = scalar_lea.vmem [#allocation3], 16
        %4127 = vst.msk [vmem:[%s4126 + $0x1] sm:$0xff] %vm386, %v4118
        %4128 = vst.msk [vmem:[%s4126 + $0x11] sm:$0xff] %vm386, %v4119
        %4129 = vst.msk [vmem:[%s4126 + $0x21] sm:$0xff] %vm386, %v4120
        %4130 = vst.msk [vmem:[%s4126 + $0x31] sm:$0xff] %vm386, %v4121
        %4131 = vst.msk [vmem:[%s4126 + $0x41] sm:$0xff] %vm386, %v4122
        %4132 = vst.msk [vmem:[%s4126 + $0x51] sm:$0xff] %vm386, %v4123
        %4133 = vst.msk [vmem:[%s4126 + $0x61] sm:$0xff] %vm386, %v4124
        %4134 = vst.msk [vmem:[%s4126 + $0x71] sm:$0xff] %vm386, %v4125
        %v4135 = vld [vmem:[#allocation3] sm:$0xff]
        %v4136 = vld [vmem:[#allocation3 + $0x10] sm:$0xff]
        %v4137 = vld [vmem:[#allocation3 + $0x20] sm:$0xff]
        %v4138 = vld [vmem:[#allocation3 + $0x30] sm:$0xff]
        %v4139 = vld [vmem:[#allocation3 + $0x40] sm:$0xff]
        %v4140 = vld [vmem:[#allocation3 + $0x50] sm:$0xff]
        %v4141 = vld [vmem:[#allocation3 + $0x60] sm:$0xff]
        %v4142 = vld [vmem:[#allocation3 + $0x70] sm:$0xff]
        %v4143 = vld [vmem:[#allocation3 + $0x1] sm:$0xff]
        %v4144 = vld [vmem:[#allocation3 + $0x11] sm:$0xff]
        %v4145 = vld [vmem:[#allocation3 + $0x21] sm:$0xff]
        %v4146 = vld [vmem:[#allocation3 + $0x31] sm:$0xff]
        %v4147 = vld [vmem:[#allocation3 + $0x41] sm:$0xff]
        %v4148 = vld [vmem:[#allocation3 + $0x51] sm:$0xff]
        %v4149 = vld [vmem:[#allocation3 + $0x61] sm:$0xff]
        %v4150 = vld [vmem:[#allocation3 + $0x71] sm:$0xff]
        %v4151 = vld [vmem:[#allocation3 + $0x2] sm:$0xff]
        %v4152 = vld [vmem:[#allocation3 + $0x12] sm:$0xff]
        %v4153 = vld [vmem:[#allocation3 + $0x22] sm:$0xff]
        %v4154 = vld [vmem:[#allocation3 + $0x32] sm:$0xff]
        %v4155 = vld [vmem:[#allocation3 + $0x42] sm:$0xff]
        %v4156 = vld [vmem:[#allocation3 + $0x52] sm:$0xff]
        %v4157 = vld [vmem:[#allocation3 + $0x62] sm:$0xff]
        %v4158 = vld [vmem:[#allocation3 + $0x72] sm:$0xff]
        %v4159 = vld [vmem:[%s4126] sm:$0xff]
        %v4160 = vld [vmem:[%s4126 + $0x10] sm:$0xff]
        %v4161 = vld [vmem:[%s4126 + $0x20] sm:$0xff]
        %v4162 = vld [vmem:[%s4126 + $0x30] sm:$0xff]
        %v4163 = vld [vmem:[%s4126 + $0x40] sm:$0xff]
        %v4164 = vld [vmem:[%s4126 + $0x50] sm:$0xff]
        %v4165 = vld [vmem:[%s4126 + $0x60] sm:$0xff]
        %v4166 = vld [vmem:[%s4126 + $0x70] sm:$0xff]
        %v4167 = vld [vmem:[%s4126 + $0x1] sm:$0xff]
        %v4168 = vld [vmem:[%s4126 + $0x11] sm:$0xff]
        %v4169 = vld [vmem:[%s4126 + $0x21] sm:$0xff]
        %v4170 = vld [vmem:[%s4126 + $0x31] sm:$0xff]
        %v4171 = vld [vmem:[%s4126 + $0x41] sm:$0xff]
        %v4172 = vld [vmem:[%s4126 + $0x51] sm:$0xff]
        %v4173 = vld [vmem:[%s4126 + $0x61] sm:$0xff]
        %v4174 = vld [vmem:[%s4126 + $0x71] sm:$0xff]
        %v4175 = vld [vmem:[%s4126 + $0x2] sm:$0xff]
        %v4176 = vld [vmem:[%s4126 + $0x12] sm:$0xff]
        %v4177 = vld [vmem:[%s4126 + $0x22] sm:$0xff]
        %v4178 = vld [vmem:[%s4126 + $0x32] sm:$0xff]
        %v4179 = vld [vmem:[%s4126 + $0x42] sm:$0xff]
        %v4180 = vld [vmem:[%s4126 + $0x52] sm:$0xff]
        %v4181 = vld [vmem:[%s4126 + $0x62] sm:$0xff]
        %v4182 = vld [vmem:[%s4126 + $0x72] sm:$0xff]
        %s4183 = scalar_lea.vmem [#allocation3], 32
        %v4184 = vld [vmem:[%s4183] sm:$0xff]
        %v4185 = vld [vmem:[%s4183 + $0x10] sm:$0xff]
        %v4186 = vld [vmem:[%s4183 + $0x20] sm:$0xff]
        %v4187 = vld [vmem:[%s4183 + $0x30] sm:$0xff]
        %v4188 = vld [vmem:[%s4183 + $0x40] sm:$0xff]
        %v4189 = vld [vmem:[%s4183 + $0x50] sm:$0xff]
        %v4190 = vld [vmem:[%s4183 + $0x60] sm:$0xff]
        %v4191 = vld [vmem:[%s4183 + $0x70] sm:$0xff]
        %v4192 = vld [vmem:[%s4183 + $0x1] sm:$0xff]
        %v4193 = vld [vmem:[%s4183 + $0x11] sm:$0xff]
        %v4194 = vld [vmem:[%s4183 + $0x21] sm:$0xff]
        %v4195 = vld [vmem:[%s4183 + $0x31] sm:$0xff]
        %v4196 = vld [vmem:[%s4183 + $0x41] sm:$0xff]
        %v4197 = vld [vmem:[%s4183 + $0x51] sm:$0xff]
        %v4198 = vld [vmem:[%s4183 + $0x61] sm:$0xff]
        %v4199 = vld [vmem:[%s4183 + $0x71] sm:$0xff]
        %v4200 = vld [vmem:[%s4183 + $0x2] sm:$0xff]
        %v4201 = vld [vmem:[%s4183 + $0x12] sm:$0xff]
        %v4202 = vld [vmem:[%s4183 + $0x22] sm:$0xff]
        %v4203 = vld [vmem:[%s4183 + $0x32] sm:$0xff]
        %v4204 = vld [vmem:[%s4183 + $0x42] sm:$0xff]
        %v4205 = vld [vmem:[%s4183 + $0x52] sm:$0xff]
        %v4206 = vld [vmem:[%s4183 + $0x62] sm:$0xff]
        %v4207 = vld [vmem:[%s4183 + $0x72] sm:$0xff]
        %4216 = vrot.lane.b32.xlu0 %v4143, 16
        %v4217 = vpop.permute.xlu0 %4216
        %4218 = vrot.lane.b32.xlu0 %v4144, 16
        %v4219 = vpop.permute.xlu0 %4218
        %4220 = vrot.lane.b32.xlu0 %v4145, 16
        %v4221 = vpop.permute.xlu0 %4220
        %4222 = vrot.lane.b32.xlu0 %v4146, 16
        %v4223 = vpop.permute.xlu0 %4222
        %4224 = vrot.lane.b32.xlu0 %v4147, 16
        %v4225 = vpop.permute.xlu0 %4224
        %4226 = vrot.lane.b32.xlu0 %v4148, 16
        %v4227 = vpop.permute.xlu0 %4226
        %4228 = vrot.lane.b32.xlu0 %v4149, 16
        %v4229 = vpop.permute.xlu0 %4228
        %4230 = vrot.lane.b32.xlu0 %v4150, 16
        %v4231 = vpop.permute.xlu0 %4230
        %4248 = vrot.lane.b32.xlu0 %v4151, 32
        %v4249 = vpop.permute.xlu0 %4248
        %4250 = vrot.lane.b32.xlu0 %v4152, 32
        %v4251 = vpop.permute.xlu0 %4250
        %4252 = vrot.lane.b32.xlu0 %v4153, 32
        %v4253 = vpop.permute.xlu0 %4252
        %4254 = vrot.lane.b32.xlu0 %v4154, 32
        %v4255 = vpop.permute.xlu0 %4254
        %4256 = vrot.lane.b32.xlu0 %v4155, 32
        %v4257 = vpop.permute.xlu0 %4256
        %4258 = vrot.lane.b32.xlu0 %v4156, 32
        %v4259 = vpop.permute.xlu0 %4258
        %4260 = vrot.lane.b32.xlu0 %v4157, 32
        %v4261 = vpop.permute.xlu0 %4260
        %4262 = vrot.lane.b32.xlu0 %v4158, 32
        %v4263 = vpop.permute.xlu0 %4262
        %4280 = vrot.lane.b32.xlu0 %v4159, 48
        %v4281 = vpop.permute.xlu0 %4280
        %4282 = vrot.lane.b32.xlu0 %v4160, 48
        %v4283 = vpop.permute.xlu0 %4282
        %4284 = vrot.lane.b32.xlu0 %v4161, 48
        %v4285 = vpop.permute.xlu0 %4284
        %4286 = vrot.lane.b32.xlu0 %v4162, 48
        %v4287 = vpop.permute.xlu0 %4286
        %4288 = vrot.lane.b32.xlu0 %v4163, 48
        %v4289 = vpop.permute.xlu0 %4288
        %4290 = vrot.lane.b32.xlu0 %v4164, 48
        %v4291 = vpop.permute.xlu0 %4290
        %4292 = vrot.lane.b32.xlu0 %v4165, 48
        %v4293 = vpop.permute.xlu0 %4292
        %4294 = vrot.lane.b32.xlu0 %v4166, 48
        %v4295 = vpop.permute.xlu0 %4294
        %4312 = vrot.lane.b32.xlu0 %v4167, 64
        %v4313 = vpop.permute.xlu0 %4312
        %4314 = vrot.lane.b32.xlu0 %v4168, 64
        %v4315 = vpop.permute.xlu0 %4314
        %4316 = vrot.lane.b32.xlu0 %v4169, 64
        %v4317 = vpop.permute.xlu0 %4316
        %4318 = vrot.lane.b32.xlu0 %v4170, 64
        %v4319 = vpop.permute.xlu0 %4318
        %4320 = vrot.lane.b32.xlu0 %v4171, 64
        %v4321 = vpop.permute.xlu0 %4320
        %4322 = vrot.lane.b32.xlu0 %v4172, 64
        %v4323 = vpop.permute.xlu0 %4322
        %4324 = vrot.lane.b32.xlu0 %v4173, 64
        %v4325 = vpop.permute.xlu0 %4324
        %4326 = vrot.lane.b32.xlu0 %v4174, 64
        %v4327 = vpop.permute.xlu0 %4326
        %4344 = vrot.lane.b32.xlu0 %v4175, 80
        %v4345 = vpop.permute.xlu0 %4344
        %4346 = vrot.lane.b32.xlu0 %v4176, 80
        %v4347 = vpop.permute.xlu0 %4346
        %4348 = vrot.lane.b32.xlu0 %v4177, 80
        %v4349 = vpop.permute.xlu0 %4348
        %4350 = vrot.lane.b32.xlu0 %v4178, 80
        %v4351 = vpop.permute.xlu0 %4350
        %4352 = vrot.lane.b32.xlu0 %v4179, 80
        %v4353 = vpop.permute.xlu0 %4352
        %4354 = vrot.lane.b32.xlu0 %v4180, 80
        %v4355 = vpop.permute.xlu0 %4354
        %4356 = vrot.lane.b32.xlu0 %v4181, 80
        %v4357 = vpop.permute.xlu0 %4356
        %4358 = vrot.lane.b32.xlu0 %v4182, 80
        %v4359 = vpop.permute.xlu0 %4358
        %4376 = vrot.lane.b32.xlu0 %v4184, 96
        %v4377 = vpop.permute.xlu0 %4376
        %4378 = vrot.lane.b32.xlu0 %v4185, 96
        %v4379 = vpop.permute.xlu0 %4378
        %4380 = vrot.lane.b32.xlu0 %v4186, 96
        %v4381 = vpop.permute.xlu0 %4380
        %4382 = vrot.lane.b32.xlu0 %v4187, 96
        %v4383 = vpop.permute.xlu0 %4382
        %4384 = vrot.lane.b32.xlu0 %v4188, 96
        %v4385 = vpop.permute.xlu0 %4384
        %4386 = vrot.lane.b32.xlu0 %v4189, 96
        %v4387 = vpop.permute.xlu0 %4386
        %4388 = vrot.lane.b32.xlu0 %v4190, 96
        %v4389 = vpop.permute.xlu0 %4388
        %4390 = vrot.lane.b32.xlu0 %v4191, 96
        %v4391 = vpop.permute.xlu0 %4390
        %4408 = vrot.lane.b32.xlu0 %v4192, 112
        %v4409 = vpop.permute.xlu0 %4408
        %4410 = vrot.lane.b32.xlu0 %v4193, 112
        %v4411 = vpop.permute.xlu0 %4410
        %4412 = vrot.lane.b32.xlu0 %v4194, 112
        %v4413 = vpop.permute.xlu0 %4412
        %4414 = vrot.lane.b32.xlu0 %v4195, 112
        %v4415 = vpop.permute.xlu0 %4414
        %4416 = vrot.lane.b32.xlu0 %v4196, 112
        %v4417 = vpop.permute.xlu0 %4416
        %4418 = vrot.lane.b32.xlu0 %v4197, 112
        %v4419 = vpop.permute.xlu0 %4418
        %4420 = vrot.lane.b32.xlu0 %v4198, 112
        %v4421 = vpop.permute.xlu0 %4420
        %4422 = vrot.lane.b32.xlu0 %v4199, 112
        %v4423 = vpop.permute.xlu0 %4422
        %v4432 = vsel %vm386, %v4135, %v4217
        %v4433 = vsel %vm386, %v4136, %v4219
        %v4434 = vsel %vm386, %v4137, %v4221
        %v4435 = vsel %vm386, %v4138, %v4223
        %v4436 = vsel %vm386, %v4139, %v4225
        %v4437 = vsel %vm386, %v4140, %v4227
        %v4438 = vsel %vm386, %v4141, %v4229
        %v4439 = vsel %vm386, %v4142, %v4231
        %vm4440 = vcmask 261120
        %v4441 = vsel %vm4440, %v4432, %v4249
        %v4442 = vsel %vm4440, %v4433, %v4251
        %v4443 = vsel %vm4440, %v4434, %v4253
        %v4444 = vsel %vm4440, %v4435, %v4255
        %v4445 = vsel %vm4440, %v4436, %v4257
        %v4446 = vsel %vm4440, %v4437, %v4259
        %v4447 = vsel %vm4440, %v4438, %v4261
        %v4448 = vsel %vm4440, %v4439, %v4263
        %vm4449 = vcmask 392192
        %v4450 = vsel %vm4449, %v4441, %v4281
        %v4451 = vsel %vm4449, %v4442, %v4283
        %v4452 = vsel %vm4449, %v4443, %v4285
        %v4453 = vsel %vm4449, %v4444, %v4287
        %v4454 = vsel %vm4449, %v4445, %v4289
        %v4455 = vsel %vm4449, %v4446, %v4291
        %v4456 = vsel %vm4449, %v4447, %v4293
        %v4457 = vsel %vm4449, %v4448, %v4295
        %vm4458 = vcmask 523264
        %v4459 = vsel %vm4458, %v4450, %v4313
        %v4460 = vsel %vm4458, %v4451, %v4315
        %v4461 = vsel %vm4458, %v4452, %v4317
        %v4462 = vsel %vm4458, %v4453, %v4319
        %v4463 = vsel %vm4458, %v4454, %v4321
        %v4464 = vsel %vm4458, %v4455, %v4323
        %v4465 = vsel %vm4458, %v4456, %v4325
        %v4466 = vsel %vm4458, %v4457, %v4327
        %vm4467 = vcmask 654336
        %v4468 = vsel %vm4467, %v4459, %v4345
        %v4469 = vsel %vm4467, %v4460, %v4347
        %v4470 = vsel %vm4467, %v4461, %v4349
        %v4471 = vsel %vm4467, %v4462, %v4351
        %v4472 = vsel %vm4467, %v4463, %v4353
        %v4473 = vsel %vm4467, %v4464, %v4355
        %v4474 = vsel %vm4467, %v4465, %v4357
        %v4475 = vsel %vm4467, %v4466, %v4359
        %vm4476 = vcmask 785408
        %v4477 = vsel %vm4476, %v4468, %v4377
        %v4478 = vsel %vm4476, %v4469, %v4379
        %v4479 = vsel %vm4476, %v4470, %v4381
        %v4480 = vsel %vm4476, %v4471, %v4383
        %v4481 = vsel %vm4476, %v4472, %v4385
        %v4482 = vsel %vm4476, %v4473, %v4387
        %v4483 = vsel %vm4476, %v4474, %v4389
        %v4484 = vsel %vm4476, %v4475, %v4391
        %vm4485 = vcmask 916480
        %v4486 = vsel %vm4485, %v4477, %v4409
        %v4487 = vsel %vm4485, %v4478, %v4411
        %v4488 = vsel %vm4485, %v4479, %v4413
        %v4489 = vsel %vm4485, %v4480, %v4415
        %v4490 = vsel %vm4485, %v4481, %v4417
        %v4491 = vsel %vm4485, %v4482, %v4419
        %v4492 = vsel %vm4485, %v4483, %v4421
        %v4493 = vsel %vm4485, %v4484, %v4423
        %v4494 = vld [vmem:[%s3] sm:$0xff]
        %v4495 = vld [vmem:[%s3 + $0x8] sm:$0xff]
        %v4496 = vld [vmem:[%s3 + $0x10] sm:$0xff]
        %v4497 = vld [vmem:[%s3 + $0x18] sm:$0xff]
        %v4498 = vld [vmem:[%s3 + $0x20] sm:$0xff]
        %v4499 = vld [vmem:[%s3 + $0x28] sm:$0xff]
        %v4500 = vld [vmem:[%s3 + $0x30] sm:$0xff]
        %v4501 = vld [vmem:[%s3 + $0x38] sm:$0xff]
        %v4502 = vld [vmem:[%s3 + $0x40] sm:$0xff]
        %v4503 = vld [vmem:[%s3 + $0x48] sm:$0xff]
        %v4504 = vld [vmem:[%s3 + $0x50] sm:$0xff]
        %v4505 = vld [vmem:[%s3 + $0x58] sm:$0xff]
        %v4506 = vld [vmem:[%s3 + $0x60] sm:$0xff]
        %v4507 = vld [vmem:[%s3 + $0x68] sm:$0xff]
        %v4508 = vld [vmem:[%s3 + $0x70] sm:$0xff]
        %v4509 = vld [vmem:[%s3 + $0x78] sm:$0xff]
        %v4510 = vld [vmem:[%s3 + $0x80] sm:$0xff]
        %v4511 = vld [vmem:[%s3 + $0x88] sm:$0xff]
        %v4512 = vld [vmem:[%s4] sm:$0x1]
        %v4514 = vlaneseq
        %v4515 = vshrl.u32 %v4514, 7
        %v4516 = vsub.s32 0, %v4515
        %v4517 = vrot.slane %v4512, %v4516
        %v4520 = vsel %vm386, %v4200, 0
        %v4523 = vsel %vm386, %v4201, 0
        %v4526 = vsel %vm386, %v4202, 0
        %v4529 = vsel %vm386, %v4203, 0
        %v4532 = vsel %vm386, %v4204, 0
        %v4535 = vsel %vm386, %v4205, 0
        %v4538 = vsel %vm386, %v4206, 0
        %v4541 = vsel %vm386, %v4207, 0
        %4543 = vmatprep.subr.mxu0 0.0
        %4544 = vmatpush1.msra.mxu0 %v4509
        %4545 = vmatprep.subr.mxu0 0.0
        %4546 = vmatpush1.msra.mxu0 %v4508
        %4547 = vmatprep.subr.mxu0 0.0
        %4548 = vmatpush1.msra.mxu0 %v4507
        %4549 = vmatprep.subr.mxu0 0.0
        %4550 = vmatpush1.msra.mxu0 %v4506
        %4551 = vmatprep.subr.mxu0 0.0
        %4552 = vmatpush1.msra.mxu0 %v4505
        %4553 = vmatprep.subr.mxu0 0.0
        %4554 = vmatpush1.msra.mxu0 %v4504
        %4555 = vmatprep.subr.mxu0 0.0
        %4556 = vmatpush1.msra.mxu0 %v4503
        %4557 = vmatprep.subr.mxu0 0.0
        %4558 = vmatpush1.msra.mxu0 %v4502
        %4559 = vmatprep.subr.mxu0 0.0
        %4560 = vmatpush1.msra.mxu0 %v4501
        %4561 = vmatprep.subr.mxu0 0.0
        %4562 = vmatpush1.msra.mxu0 %v4500
        %4563 = vmatprep.subr.mxu0 0.0
        %4564 = vmatpush1.msra.mxu0 %v4499
        %4565 = vmatprep.subr.mxu0 0.0
        %4566 = vmatpush1.msra.mxu0 %v4498
        %4567 = vmatprep.subr.mxu0 0.0
        %4568 = vmatpush1.msra.mxu0 %v4497
        %4569 = vmatprep.subr.mxu0 0.0
        %4570 = vmatpush1.msra.mxu0 %v4496
        %4571 = vmatprep.subr.mxu0 0.0
        %4572 = vmatpush1.msra.mxu0 %v4495
        %4573 = vmatprep.subr.mxu0 0.0
        %4574 = vmatpush1.msra.mxu0 %v4494
        %4575 = vmatprep.subr.mxu0 0.0
        %4576 = vmatpush2.msra.mxu0 0.0
        %4577 = vmatprep.subr.mxu0 0.0
        %4578 = vmatpush2.msra.mxu0 0.0
        %4579 = vmatprep.subr.mxu0 0.0
        %4580 = vmatpush2.msra.mxu0 0.0
        %4581 = vmatprep.subr.mxu0 0.0
        %4582 = vmatpush2.msra.mxu0 0.0
        %4583 = vmatprep.subr.mxu0 0.0
        %4584 = vmatpush2.msra.mxu0 0.0
        %4585 = vmatprep.subr.mxu0 0.0
        %4586 = vmatpush2.msra.mxu0 0.0
        %4587 = vmatprep.subr.mxu0 0.0
        %4588 = vmatpush2.msra.mxu0 0.0
        %4589 = vmatprep.subr.mxu0 0.0
        %4590 = vmatpush2.msra.mxu0 0.0
        %4591 = vmatprep.subr.mxu0 0.0
        %4592 = vmatpush2.msra.mxu0 0.0
        %4593 = vmatprep.subr.mxu0 0.0
        %4594 = vmatpush2.msra.mxu0 0.0
        %4595 = vmatprep.subr.mxu0 0.0
        %4596 = vmatpush2.msra.mxu0 0.0
        %4597 = vmatprep.subr.mxu0 0.0
        %4598 = vmatpush2.msra.mxu0 0.0
        %4599 = vmatprep.subr.mxu0 0.0
        %4600 = vmatpush2.msra.mxu0 0.0
        %4601 = vmatprep.subr.mxu0 0.0
        %4602 = vmatpush2.msra.mxu0 0.0
        %4603 = vmatprep.subr.mxu0 0.0
        %4604 = vmatpush2.msra.mxu0 %v4511
        %4605 = vmatprep.subr.mxu0 0.0
        %4606 = vmatpush2.msra.mxu0 %v4510
        %4607 = vmatprep.mubr.f32.mxu0 %v4520
        %4608 = vmatmul.mubr.f32.gmra.mxu0 %v4486
        %v4609 = vpop.f32.mrf.mxu0
        %v4610 = vadd.f32 %v4517, %v4609
        %v4611 = vpop.f32.mrf.mxu0
        %4612 = vmatprep.mubr.f32.mxu0 %v4523
        %4613 = vmatmul.mubr.f32.gmra.mxu0 %v4487
        %v4614 = vpop.f32.mrf.mxu0
        %v4615 = vadd.f32 %v4517, %v4614
        %v4616 = vpop.f32.mrf.mxu0
        %4617 = vmatprep.mubr.f32.mxu0 %v4526
        %4618 = vmatmul.mubr.f32.gmra.mxu0 %v4488
        %v4619 = vpop.f32.mrf.mxu0
        %v4620 = vadd.f32 %v4517, %v4619
        %v4621 = vpop.f32.mrf.mxu0
        %4622 = vmatprep.mubr.f32.mxu0 %v4529
        %4623 = vmatmul.mubr.f32.gmra.mxu0 %v4489
        %v4624 = vpop.f32.mrf.mxu0
        %v4625 = vadd.f32 %v4517, %v4624
        %v4626 = vpop.f32.mrf.mxu0
        %4627 = vmatprep.mubr.f32.mxu0 %v4532
        %4628 = vmatmul.mubr.f32.gmra.mxu0 %v4490
        %v4629 = vpop.f32.mrf.mxu0
        %v4630 = vadd.f32 %v4517, %v4629
        %v4631 = vpop.f32.mrf.mxu0
        %4632 = vmatprep.mubr.f32.mxu0 %v4535
        %4633 = vmatmul.mubr.f32.gmra.mxu0 %v4491
        %v4634 = vpop.f32.mrf.mxu0
        %v4635 = vadd.f32 %v4517, %v4634
        %v4636 = vpop.f32.mrf.mxu0
        %4637 = vmatprep.mubr.f32.mxu0 %v4538
        %4638 = vmatmul.mubr.f32.gmra.mxu0 %v4492
        %v4639 = vpop.f32.mrf.mxu0
        %v4640 = vadd.f32 %v4517, %v4639
        %v4641 = vpop.f32.mrf.mxu0
        %4642 = vmatprep.mubr.f32.mxu0 %v4541
        %4643 = vmatmul.mubr.f32.gmra.mxu0 %v4493
        %v4644 = vpop.f32.mrf.mxu0
        %v4645 = vadd.f32 %v4517, %v4644
        %v4646 = vpop.f32.mrf.mxu0
        %4647 = vdwg.mxu0
        %v4648 = vmax.f32 %v4610, 0.0
        %v4649 = vmax.f32 %v4615, 0.0
        %v4650 = vmax.f32 %v4620, 0.0
        %v4651 = vmax.f32 %v4625, 0.0
        %v4652 = vmax.f32 %v4630, 0.0
        %v4653 = vmax.f32 %v4635, 0.0
        %v4654 = vmax.f32 %v4640, 0.0
        %v4655 = vmax.f32 %v4645, 0.0
        %4656 = vst.msk [vmem:[#allocation7] sm:$0xff] %vm4440, %v4648
        %4657 = vst.msk [vmem:[#allocation7 + $0x8] sm:$0xff] %vm4440, %v4649
        %4658 = vst.msk [vmem:[#allocation7 + $0x10] sm:$0xff] %vm4440, %v4650
        %4659 = vst.msk [vmem:[#allocation7 + $0x18] sm:$0xff] %vm4440, %v4651
        %4660 = vst.msk [vmem:[#allocation7 + $0x20] sm:$0xff] %vm4440, %v4652
        %4661 = vst.msk [vmem:[#allocation7 + $0x28] sm:$0xff] %vm4440, %v4653
        %4662 = vst.msk [vmem:[#allocation7 + $0x30] sm:$0xff] %vm4440, %v4654
        %4663 = vst.msk [vmem:[#allocation7 + $0x38] sm:$0xff] %vm4440, %v4655
        %v4664 = vld [vmem:[#allocation7] sm:$0xff]
        %v4665 = vld [vmem:[#allocation7 + $0x10] sm:$0xff]
        %v4666 = vld [vmem:[#allocation7 + $0x20] sm:$0xff]
        %v4667 = vld [vmem:[#allocation7 + $0x30] sm:$0xff]
        %s4668 = scalar_lea.vmem [#allocation7], 8
        %v4669 = vld [vmem:[%s4668] sm:$0xff]
        %v4670 = vld [vmem:[%s4668 + $0x10] sm:$0xff]
        %v4671 = vld [vmem:[%s4668 + $0x20] sm:$0xff]
        %v4672 = vld [vmem:[%s4668 + $0x30] sm:$0xff]
        %v4673 = vmax.f32 %v4664, %v4669
        %v4674 = vmax.f32 %v4665, %v4670
        %v4675 = vmax.f32 %v4666, %v4671
        %v4676 = vmax.f32 %v4667, %v4672
        %4677 = vst.msk [vmem:[#allocation8] sm:$0xff] %vm4440, %v4673
        %4678 = vst.msk [vmem:[#allocation8 + $0x8] sm:$0xff] %vm4440, %v4674
        %4679 = vst.msk [vmem:[#allocation8 + $0x10] sm:$0xff] %vm4440, %v4675
        %4680 = vst.msk [vmem:[#allocation8 + $0x18] sm:$0xff] %vm4440, %v4676
        %v4681 = vld [vmem:[#allocation8] ss:$2 sm:$0xf]
        %s4682 = scalar_lea.vmem [#allocation8], 8
        %v4683 = vld [vmem:[%s4682] ss:$2 sm:$0xf]
        %s4684 = scalar_lea.vmem [#allocation8], 16
        %v4685 = vld [vmem:[%s4684] ss:$2 sm:$0xf]
        %s4686 = scalar_lea.vmem [#allocation8], 24
        %v4687 = vld [vmem:[%s4686] ss:$2 sm:$0xf]
        %s4688 = scalar_lea.vmem [#allocation8], 1
        %v4689 = vld [vmem:[%s4688] ss:$2 sm:$0xf]
        %s4690 = scalar_lea.vmem [#allocation8], 9
        %v4691 = vld [vmem:[%s4690] ss:$2 sm:$0xf]
        %s4692 = scalar_lea.vmem [#allocation8], 17
        %v4693 = vld [vmem:[%s4692] ss:$2 sm:$0xf]
        %s4694 = scalar_lea.vmem [#allocation8], 25
        %v4695 = vld [vmem:[%s4694] ss:$2 sm:$0xf]
        %v4696 = vmax.f32 %v4681, %v4689
        %v4697 = vmax.f32 %v4683, %v4691
        %v4698 = vmax.f32 %v4685, %v4693
        %v4699 = vmax.f32 %v4687, %v4695
        %s4700 = scalar_lea.vmem [#allocation4], 8
        %vm4701 = vcmask 257024
        %4702 = vst.msk [vmem:[%s4700 + $0x1] sm:$0xf] %vm4701, %v4696
        %4703 = vst.msk [vmem:[%s4700 + $0x9] sm:$0xf] %vm4701, %v4697
        %4704 = vst.msk [vmem:[%s4700 + $0x11] sm:$0xf] %vm4701, %v4698
        %4705 = vst.msk [vmem:[%s4700 + $0x19] sm:$0xf] %vm4701, %v4699
        %v4706 = vld [vmem:[#allocation4] sm:$0xf]
        %v4707 = vld [vmem:[#allocation4 + $0x1] sm:$0xf]
        %v4708 = vld [vmem:[#allocation4 + $0x2] sm:$0xf]
        %v4709 = vld [vmem:[%s4700] sm:$0xf]
        %v4710 = vld [vmem:[%s4700 + $0x1] sm:$0xf]
        %v4711 = vld [vmem:[%s4700 + $0x2] sm:$0xf]
        %s4712 = scalar_lea.vmem [#allocation4], 16
        %v4713 = vld [vmem:[%s4712] sm:$0xf]
        %v4714 = vld [vmem:[%s4712 + $0x1] sm:$0xf]
        %v4715 = vld [vmem:[%s4712 + $0x2] sm:$0xf]
        %4717 = vrot.lane.b32.xlu0 %v4707, 32
        %v4718 = vpop.permute.xlu0 %4717
        %4721 = vrot.lane.b32.xlu0 %v4708, 64
        %v4722 = vpop.permute.xlu0 %4721
        %4725 = vrot.lane.b32.xlu0 %v4709, 96
        %v4726 = vpop.permute.xlu0 %4725
        %4729 = vrot.lane.b32.xlu0 %v4711, 32
        %v4730 = vpop.permute.xlu0 %4729
        %4733 = vrot.lane.b32.xlu0 %v4713, 64
        %v4734 = vpop.permute.xlu0 %4733
        %4737 = vrot.lane.b32.xlu0 %v4714, 96
        %v4738 = vpop.permute.xlu0 %4737
        %v4740 = vsel %vm4440, %v4706, %v4718
        %v4741 = vsel %vm4458, %v4740, %v4722
        %v4742 = vsel %vm4476, %v4741, %v4726
        %v4743 = vsel %vm4440, %v4710, %v4730
        %v4744 = vsel %vm4458, %v4743, %v4734
        %v4745 = vsel %vm4476, %v4744, %v4738
        %4746 = vst [vmem:[#allocation9] sm:$0xf] %v4742
        %4747 = vst [vmem:[#allocation9 + $0x8] sm:$0xf] %v4745
        %4748 = vst.msk [vmem:[#allocation9 + $0x10] sm:$0xf] %vm4701, %v4715
        %v4749 = vld [vmem:[%s4700] sm:$0xf]
        %v4750 = vld [vmem:[%s4700 + $0x1] sm:$0xf]
        %v4751 = vld [vmem:[%s4700 + $0x2] sm:$0xf]
        %v4752 = vld [vmem:[%s4712] sm:$0xf]
        %v4753 = vld [vmem:[%s4712 + $0x1] sm:$0xf]
        %v4754 = vld [vmem:[%s4712 + $0x2] sm:$0xf]
        %s4755 = scalar_lea.vmem [#allocation4], 24
        %v4756 = vld [vmem:[%s4755] sm:$0xf]
        %v4757 = vld [vmem:[%s4755 + $0x1] sm:$0xf]
        %v4758 = vld [vmem:[%s4755 + $0x2] sm:$0xf]
        %4760 = vrot.lane.b32.xlu0 %v4750, 32
        %v4761 = vpop.permute.xlu0 %4760
        %4764 = vrot.lane.b32.xlu0 %v4751, 64
        %v4765 = vpop.permute.xlu0 %4764
        %4768 = vrot.lane.b32.xlu0 %v4752, 96
        %v4769 = vpop.permute.xlu0 %4768
        %4772 = vrot.lane.b32.xlu0 %v4754, 32
        %v4773 = vpop.permute.xlu0 %4772
        %4776 = vrot.lane.b32.xlu0 %v4756, 64
        %v4777 = vpop.permute.xlu0 %4776
        %4780 = vrot.lane.b32.xlu0 %v4757, 96
        %v4781 = vpop.permute.xlu0 %4780
        %v4783 = vsel %vm4440, %v4749, %v4761
        %v4784 = vsel %vm4458, %v4783, %v4765
        %v4785 = vsel %vm4476, %v4784, %v4769
        %v4786 = vsel %vm4440, %v4753, %v4773
        %v4787 = vsel %vm4458, %v4786, %v4777
        %v4788 = vsel %vm4476, %v4787, %v4781
        %v4792 = vrot.slane %v4785, 4
        %v4793 = vrot.slane %v4788, 4
        %v4794 = vrot.slane %v4758, 4
        %4798 = vst [vmem:[#allocation9] sm:$0xf0] %v4792
        %4799 = vst [vmem:[#allocation9 + $0x8] sm:$0xf0] %v4793
        %vm4800 = vcmask 261124
        %4801 = vst.msk [vmem:[#allocation9 + $0x10] sm:$0xf0] %vm4800, %v4794
        %v4802 = vld [vmem:[%s4712] sm:$0xf]
        %v4803 = vld [vmem:[%s4712 + $0x1] sm:$0xf]
        %v4804 = vld [vmem:[%s4712 + $0x2] sm:$0xf]
        %v4805 = vld [vmem:[%s4755] sm:$0xf]
        %v4806 = vld [vmem:[%s4755 + $0x1] sm:$0xf]
        %v4807 = vld [vmem:[%s4755 + $0x2] sm:$0xf]
        %s4808 = scalar_lea.vmem [#allocation4], 32
        %v4809 = vld [vmem:[%s4808] sm:$0xf]
        %v4810 = vld [vmem:[%s4808 + $0x1] sm:$0xf]
        %v4811 = vld [vmem:[%s4808 + $0x2] sm:$0xf]
        %4813 = vrot.lane.b32.xlu0 %v4803, 32
        %v4814 = vpop.permute.xlu0 %4813
        %4817 = vrot.lane.b32.xlu0 %v4804, 64
        %v4818 = vpop.permute.xlu0 %4817
        %4821 = vrot.lane.b32.xlu0 %v4805, 96
        %v4822 = vpop.permute.xlu0 %4821
        %4825 = vrot.lane.b32.xlu0 %v4807, 32
        %v4826 = vpop.permute.xlu0 %4825
        %4829 = vrot.lane.b32.xlu0 %v4809, 64
        %v4830 = vpop.permute.xlu0 %4829
        %4833 = vrot.lane.b32.xlu0 %v4810, 96
        %v4834 = vpop.permute.xlu0 %4833
        %v4836 = vsel %vm4440, %v4802, %v4814
        %v4837 = vsel %vm4458, %v4836, %v4818
        %v4838 = vsel %vm4476, %v4837, %v4822
        %v4839 = vsel %vm4440, %v4806, %v4826
        %v4840 = vsel %vm4458, %v4839, %v4830
        %v4841 = vsel %vm4476, %v4840, %v4834
        %4842 = vst [vmem:[#allocation9 + $0x18] sm:$0xf] %v4838
        %4843 = vst [vmem:[#allocation9 + $0x20] sm:$0xf] %v4841
        %4844 = vst.msk [vmem:[#allocation9 + $0x28] sm:$0xf] %vm4701, %v4811
        %v4845 = vld [vmem:[%s4755] sm:$0xf]
        %v4846 = vld [vmem:[%s4755 + $0x1] sm:$0xf]
        %v4847 = vld [vmem:[%s4755 + $0x2] sm:$0xf]
        %v4848 = vld [vmem:[%s4808] sm:$0xf]
        %v4849 = vld [vmem:[%s4808 + $0x1] sm:$0xf]
        %v4850 = vld [vmem:[%s4808 + $0x2] sm:$0xf]
        %s4851 = scalar_lea.vmem [#allocation4], 40
        %v4852 = vld [vmem:[%s4851] sm:$0xf]
        %v4853 = vld [vmem:[%s4851 + $0x1] sm:$0xf]
        %v4854 = vld [vmem:[%s4851 + $0x2] sm:$0xf]
        %4856 = vrot.lane.b32.xlu0 %v4846, 32
        %v4857 = vpop.permute.xlu0 %4856
        %4860 = vrot.lane.b32.xlu0 %v4847, 64
        %v4861 = vpop.permute.xlu0 %4860
        %4864 = vrot.lane.b32.xlu0 %v4848, 96
        %v4865 = vpop.permute.xlu0 %4864
        %4868 = vrot.lane.b32.xlu0 %v4850, 32
        %v4869 = vpop.permute.xlu0 %4868
        %4872 = vrot.lane.b32.xlu0 %v4852, 64
        %v4873 = vpop.permute.xlu0 %4872
        %4876 = vrot.lane.b32.xlu0 %v4853, 96
        %v4877 = vpop.permute.xlu0 %4876
        %v4879 = vsel %vm4440, %v4845, %v4857
        %v4880 = vsel %vm4458, %v4879, %v4861
        %v4881 = vsel %vm4476, %v4880, %v4865
        %v4882 = vsel %vm4440, %v4849, %v4869
        %v4883 = vsel %vm4458, %v4882, %v4873
        %v4884 = vsel %vm4476, %v4883, %v4877
        %v4888 = vrot.slane %v4881, 4
        %v4889 = vrot.slane %v4884, 4
        %v4890 = vrot.slane %v4854, 4
        %4894 = vst [vmem:[#allocation9 + $0x18] sm:$0xf0] %v4888
        %4895 = vst [vmem:[#allocation9 + $0x20] sm:$0xf0] %v4889
        %4896 = vst.msk [vmem:[#allocation9 + $0x28] sm:$0xf0] %vm4800, %v4890
        %v4897 = vld [vmem:[#allocation9] sm:$0xff]
        %v4898 = vld [vmem:[#allocation9 + $0x8] sm:$0xff]
        %v4899 = vld [vmem:[#allocation9 + $0x10] sm:$0xff]
        %v4900 = vld [vmem:[#allocation9 + $0x18] sm:$0xff]
        %v4901 = vld [vmem:[#allocation9 + $0x20] sm:$0xff]
        %v4902 = vld [vmem:[#allocation9 + $0x28] sm:$0xff]
        %v4903 = vld [vmem:[%s5] sm:$0xff]
        %v4904 = vld [vmem:[%s5 + $0x8] sm:$0xff]
        %v4905 = vld [vmem:[%s5 + $0x10] sm:$0xff]
        %v4906 = vld [vmem:[%s5 + $0x18] sm:$0xff]
        %v4907 = vld [vmem:[%s5 + $0x20] sm:$0xff]
        %v4908 = vld [vmem:[%s5 + $0x28] sm:$0xff]
        %v4909 = vld [vmem:[%s5 + $0x30] sm:$0xff]
        %v4910 = vld [vmem:[%s5 + $0x38] sm:$0xff]
        %v4911 = vld [vmem:[%s5 + $0x40] sm:$0xff]
        %v4912 = vld [vmem:[%s5 + $0x48] sm:$0xff]
        %v4913 = vld [vmem:[%s5 + $0x50] sm:$0xff]
        %v4914 = vld [vmem:[%s5 + $0x58] sm:$0xff]
        %v4915 = vld [vmem:[%s5 + $0x60] sm:$0xff]
        %v4916 = vld [vmem:[%s5 + $0x68] sm:$0xff]
        %v4917 = vld [vmem:[%s5 + $0x70] sm:$0xff]
        %v4918 = vld [vmem:[%s5 + $0x78] sm:$0xff]
        %v4919 = vld [vmem:[%s5 + $0x80] sm:$0xff]
        %v4920 = vld [vmem:[%s5 + $0x88] sm:$0xff]
        %v4921 = vld [vmem:[%s5 + $0x90] sm:$0xff]
        %v4922 = vld [vmem:[%s5 + $0x98] sm:$0xff]
        %v4923 = vld [vmem:[%s5 + $0xa0] sm:$0xff]
        %v4924 = vld [vmem:[%s5 + $0xa8] sm:$0xff]
        %v4925 = vld [vmem:[%s5 + $0xb0] sm:$0xff]
        %v4926 = vld [vmem:[%s5 + $0xb8] sm:$0xff]
        %v4927 = vld [vmem:[%s5 + $0xc0] sm:$0xff]
        %v4928 = vld [vmem:[%s5 + $0xc8] sm:$0xff]
        %v4929 = vld [vmem:[%s5 + $0xd0] sm:$0xff]
        %v4930 = vld [vmem:[%s5 + $0xd8] sm:$0xff]
        %v4931 = vld [vmem:[%s5 + $0xe0] sm:$0xff]
        %v4932 = vld [vmem:[%s5 + $0xe8] sm:$0xff]
        %v4933 = vld [vmem:[%s5 + $0xf0] sm:$0xff]
        %v4934 = vld [vmem:[%s5 + $0xf8] sm:$0xff]
        %v4935 = vld [vmem:[%s5 + $0x100] sm:$0xff]
        %v4936 = vld [vmem:[%s5 + $0x108] sm:$0xff]
        %v4937 = vld [vmem:[%s5 + $0x110] sm:$0xff]
        %v4938 = vld [vmem:[%s5 + $0x118] sm:$0xff]
        %v4939 = vld [vmem:[%s6] sm:$0x1]
        %v4941 = vlaneseq
        %v4942 = vshrl.u32 %v4941, 7
        %v4943 = vsub.s32 0, %v4942
        %v4944 = vrot.slane %v4939, %v4943
        %v4947 = vsel %vm4440, %v4899, 0
        %v4950 = vsel %vm4440, %v4902, 0
        %4952 = vmatprep.subr.mxu0 0.0
        %4953 = vmatpush1.msra.mxu0 %v4918
        %4954 = vmatprep.subr.mxu0 0.0
        %4955 = vmatpush1.msra.mxu0 %v4917
        %4956 = vmatprep.subr.mxu0 0.0
        %4957 = vmatpush1.msra.mxu0 %v4916
        %4958 = vmatprep.subr.mxu0 0.0
        %4959 = vmatpush1.msra.mxu0 %v4915
        %4960 = vmatprep.subr.mxu0 0.0
        %4961 = vmatpush1.msra.mxu0 %v4914
        %4962 = vmatprep.subr.mxu0 0.0
        %4963 = vmatpush1.msra.mxu0 %v4913
        %4964 = vmatprep.subr.mxu0 0.0
        %4965 = vmatpush1.msra.mxu0 %v4912
        %4966 = vmatprep.subr.mxu0 0.0
        %4967 = vmatpush1.msra.mxu0 %v4911
        %4968 = vmatprep.subr.mxu0 0.0
        %4969 = vmatpush1.msra.mxu0 %v4910
        %4970 = vmatprep.subr.mxu0 0.0
        %4971 = vmatpush1.msra.mxu0 %v4909
        %4972 = vmatprep.subr.mxu0 0.0
        %4973 = vmatpush1.msra.mxu0 %v4908
        %4974 = vmatprep.subr.mxu0 0.0
        %4975 = vmatpush1.msra.mxu0 %v4907
        %4976 = vmatprep.subr.mxu0 0.0
        %4977 = vmatpush1.msra.mxu0 %v4906
        %4978 = vmatprep.subr.mxu0 0.0
        %4979 = vmatpush1.msra.mxu0 %v4905
        %4980 = vmatprep.subr.mxu0 0.0
        %4981 = vmatpush1.msra.mxu0 %v4904
        %4982 = vmatprep.subr.mxu0 0.0
        %4983 = vmatpush1.msra.mxu0 %v4903
        %4984 = vmatprep.subr.mxu0 0.0
        %4985 = vmatpush2.msra.mxu0 %v4934
        %4986 = vmatprep.subr.mxu0 0.0
        %4987 = vmatpush2.msra.mxu0 %v4933
        %4988 = vmatprep.subr.mxu0 0.0
        %4989 = vmatpush2.msra.mxu0 %v4932
        %4990 = vmatprep.subr.mxu0 0.0
        %4991 = vmatpush2.msra.mxu0 %v4931
        %4992 = vmatprep.subr.mxu0 0.0
        %4993 = vmatpush2.msra.mxu0 %v4930
        %4994 = vmatprep.subr.mxu0 0.0
        %4995 = vmatpush2.msra.mxu0 %v4929
        %4996 = vmatprep.subr.mxu0 0.0
        %4997 = vmatpush2.msra.mxu0 %v4928
        %4998 = vmatprep.subr.mxu0 0.0
        %4999 = vmatpush2.msra.mxu0 %v4927
        %5000 = vmatprep.subr.mxu0 0.0
        %5001 = vmatpush2.msra.mxu0 %v4926
        %5002 = vmatprep.subr.mxu0 0.0
        %5003 = vmatpush2.msra.mxu0 %v4925
        %5004 = vmatprep.subr.mxu0 0.0
        %5005 = vmatpush2.msra.mxu0 %v4924
        %5006 = vmatprep.subr.mxu0 0.0
        %5007 = vmatpush2.msra.mxu0 %v4923
        %5008 = vmatprep.subr.mxu0 0.0
        %5009 = vmatpush2.msra.mxu0 %v4922
        %5010 = vmatprep.subr.mxu0 0.0
        %5011 = vmatpush2.msra.mxu0 %v4921
        %5012 = vmatprep.subr.mxu0 0.0
        %5013 = vmatpush2.msra.mxu0 %v4920
        %5014 = vmatprep.subr.mxu0 0.0
        %5015 = vmatpush2.msra.mxu0 %v4919
        %5016 = vmatprep.mubr.f32.mxu0 %v4898
        %5017 = vmatmul.mubr.f32.gmra.mxu0 %v4897
        %v5018 = vpop.f32.mrf.mxu0
        %v5019 = vadd.f32 %v4944, %v5018
        %v5020 = vpop.f32.mrf.mxu0
        %5021 = vmatprep.mubr.f32.mxu0 %v4901
        %5022 = vmatmul.mubr.f32.gmra.mxu0 %v4900
        %v5023 = vpop.f32.mrf.mxu0
        %v5024 = vadd.f32 %v4944, %v5023
        %v5025 = vpop.f32.mrf.mxu0
        %5026 = vdwg.mxu0
        %5027 = vmatprep.subr.mxu0 0.0
        %5028 = vmatpush1.msra.mxu0 0.0
        %5029 = vmatprep.subr.mxu0 0.0
        %5030 = vmatpush1.msra.mxu0 0.0
        %5031 = vmatprep.subr.mxu0 0.0
        %5032 = vmatpush1.msra.mxu0 0.0
        %5033 = vmatprep.subr.mxu0 0.0
        %5034 = vmatpush1.msra.mxu0 0.0
        %5035 = vmatprep.subr.mxu0 0.0
        %5036 = vmatpush1.msra.mxu0 0.0
        %5037 = vmatprep.subr.mxu0 0.0
        %5038 = vmatpush1.msra.mxu0 0.0
        %5039 = vmatprep.subr.mxu0 0.0
        %5040 = vmatpush1.msra.mxu0 0.0
        %5041 = vmatprep.subr.mxu0 0.0
        %5042 = vmatpush1.msra.mxu0 0.0
        %5043 = vmatprep.subr.mxu0 0.0
        %5044 = vmatpush1.msra.mxu0 0.0
        %5045 = vmatprep.subr.mxu0 0.0
        %5046 = vmatpush1.msra.mxu0 0.0
        %5047 = vmatprep.subr.mxu0 0.0
        %5048 = vmatpush1.msra.mxu0 0.0
        %5049 = vmatprep.subr.mxu0 0.0
        %5050 = vmatpush1.msra.mxu0 0.0
        %5051 = vmatprep.subr.mxu0 0.0
        %5052 = vmatpush1.msra.mxu0 %v4938
        %5053 = vmatprep.subr.mxu0 0.0
        %5054 = vmatpush1.msra.mxu0 %v4937
        %5055 = vmatprep.subr.mxu0 0.0
        %5056 = vmatpush1.msra.mxu0 %v4936
        %5057 = vmatprep.subr.mxu0 0.0
        %5058 = vmatpush1.msra.mxu0 %v4935
        %5059 = vmatprep.subr.mxu0 0.0
        %5060 = vmatpush2.msra.mxu0 0.0
        %5061 = vmatprep.subr.mxu0 0.0
        %5062 = vmatpush2.msra.mxu0 0.0
        %5063 = vmatprep.subr.mxu0 0.0
        %5064 = vmatpush2.msra.mxu0 0.0
        %5065 = vmatprep.subr.mxu0 0.0
        %5066 = vmatpush2.msra.mxu0 0.0
        %5067 = vmatprep.subr.mxu0 0.0
        %5068 = vmatpush2.msra.mxu0 0.0
        %5069 = vmatprep.subr.mxu0 0.0
        %5070 = vmatpush2.msra.mxu0 0.0
        %5071 = vmatprep.subr.mxu0 0.0
        %5072 = vmatpush2.msra.mxu0 0.0
        %5073 = vmatprep.subr.mxu0 0.0
        %5074 = vmatpush2.msra.mxu0 0.0
        %5075 = vmatprep.subr.mxu0 0.0
        %5076 = vmatpush2.msra.mxu0 0.0
        %5077 = vmatprep.subr.mxu0 0.0
        %5078 = vmatpush2.msra.mxu0 0.0
        %5079 = vmatprep.subr.mxu0 0.0
        %5080 = vmatpush2.msra.mxu0 0.0
        %5081 = vmatprep.subr.mxu0 0.0
        %5082 = vmatpush2.msra.mxu0 0.0
        %5083 = vmatprep.subr.mxu0 0.0
        %5084 = vmatpush2.msra.mxu0 0.0
        %5085 = vmatprep.subr.mxu0 0.0
        %5086 = vmatpush2.msra.mxu0 0.0
        %5087 = vmatprep.subr.mxu0 0.0
        %5088 = vmatpush2.msra.mxu0 0.0
        %5089 = vmatprep.subr.mxu0 0.0
        %5090 = vmatpush2.msra.mxu0 0.0
        %5091 = vmatprep.mubr.f32.mxu0 0.0
        %5092 = vmatmul.mubr.f32.gmra.mxu0 %v4947
        %v5093 = vpop.f32.mrf.mxu0
        %v5094 = vadd.f32 %v5019, %v5093
        %v5095 = vpop.f32.mrf.mxu0
        %5096 = vmatprep.mubr.f32.mxu0 0.0
        %5097 = vmatmul.mubr.f32.gmra.mxu0 %v4950
        %v5098 = vpop.f32.mrf.mxu0
        %v5099 = vadd.f32 %v5024, %v5098
        %v5100 = vpop.f32.mrf.mxu0
        %5101 = vdwg.mxu0
        %v5102 = vmax.f32 %v5094, 0.0
        %v5103 = vmax.f32 %v5099, 0.0
        %v5104 = vsel %vm4458, %v5102, -inf
        %v5105 = vsel %vm4458, %v5103, -inf
        %v5106 = vmax.f32 %v5104, %v5105
        %v5107 = vrot.slane %v5106, 4
        %v5108 = vmax.f32 %v5106, %v5107
        %v5109 = vrot.slane %v5108, 2
        %v5110 = vmax.f32 %v5108, %v5109
        %v5111 = vrot.slane %v5110, 1
        %v5112 = vmax.f32 %v5110, %v5111
        %v5113 = vld [vmem:[%s7] sm:$0xff]
        %v5114 = vld [vmem:[%s7 + $0x8] sm:$0xff]
        %v5115 = vld [vmem:[%s7 + $0x10] sm:$0xff]
        %v5116 = vld [vmem:[%s7 + $0x18] sm:$0xff]
        %v5117 = vld [vmem:[%s7 + $0x20] sm:$0xff]
        %v5118 = vld [vmem:[%s7 + $0x28] sm:$0xff]
        %v5119 = vld [vmem:[%s7 + $0x30] sm:$0xff]
        %v5120 = vld [vmem:[%s7 + $0x38] sm:$0xff]
        %v5121 = vld [vmem:[%s8] sm:$0x1]
        %v5123 = vsel %vm4458, %v5112, 0
        %5125 = vmatprep.subr.mxu0 0.0
        %5126 = vmatpush1.msra.mxu0 0.0
        %5127 = vmatprep.subr.mxu0 0.0
        %5128 = vmatpush1.msra.mxu0 0.0
        %5129 = vmatprep.subr.mxu0 0.0
        %5130 = vmatpush1.msra.mxu0 0.0
        %5131 = vmatprep.subr.mxu0 0.0
        %5132 = vmatpush1.msra.mxu0 0.0
        %5133 = vmatprep.subr.mxu0 0.0
        %5134 = vmatpush1.msra.mxu0 0.0
        %5135 = vmatprep.subr.mxu0 0.0
        %5136 = vmatpush1.msra.mxu0 0.0
        %5137 = vmatprep.subr.mxu0 0.0
        %5138 = vmatpush1.msra.mxu0 0.0
        %5139 = vmatprep.subr.mxu0 0.0
        %5140 = vmatpush1.msra.mxu0 0.0
        %5141 = vmatprep.subr.mxu0 0.0
        %5142 = vmatpush1.msra.mxu0 %v5120
        %5143 = vmatprep.subr.mxu0 0.0
        %5144 = vmatpush1.msra.mxu0 %v5119
        %5145 = vmatprep.subr.mxu0 0.0
        %5146 = vmatpush1.msra.mxu0 %v5118
        %5147 = vmatprep.subr.mxu0 0.0
        %5148 = vmatpush1.msra.mxu0 %v5117
        %5149 = vmatprep.subr.mxu0 0.0
        %5150 = vmatpush1.msra.mxu0 %v5116
        %5151 = vmatprep.subr.mxu0 0.0
        %5152 = vmatpush1.msra.mxu0 %v5115
        %5153 = vmatprep.subr.mxu0 0.0
        %5154 = vmatpush1.msra.mxu0 %v5114
        %5155 = vmatprep.subr.mxu0 0.0
        %5156 = vmatpush1.msra.mxu0 %v5113
        %5157 = vmatprep.subr.mxu0 0.0
        %5158 = vmatpush2.msra.mxu0 0.0
        %5159 = vmatprep.subr.mxu0 0.0
        %5160 = vmatpush2.msra.mxu0 0.0
        %5161 = vmatprep.subr.mxu0 0.0
        %5162 = vmatpush2.msra.mxu0 0.0
        %5163 = vmatprep.subr.mxu0 0.0
        %5164 = vmatpush2.msra.mxu0 0.0
        %5165 = vmatprep.subr.mxu0 0.0
        %5166 = vmatpush2.msra.mxu0 0.0
        %5167 = vmatprep.subr.mxu0 0.0
        %5168 = vmatpush2.msra.mxu0 0.0
        %5169 = vmatprep.subr.mxu0 0.0
        %5170 = vmatpush2.msra.mxu0 0.0
        %5171 = vmatprep.subr.mxu0 0.0
        %5172 = vmatpush2.msra.mxu0 0.0
        %5173 = vmatprep.subr.mxu0 0.0
        %5174 = vmatpush2.msra.mxu0 0.0
        %5175 = vmatprep.subr.mxu0 0.0
        %5176 = vmatpush2.msra.mxu0 0.0
        %5177 = vmatprep.subr.mxu0 0.0
        %5178 = vmatpush2.msra.mxu0 0.0
        %5179 = vmatprep.subr.mxu0 0.0
        %5180 = vmatpush2.msra.mxu0 0.0
        %5181 = vmatprep.subr.mxu0 0.0
        %5182 = vmatpush2.msra.mxu0 0.0
        %5183 = vmatprep.subr.mxu0 0.0
        %5184 = vmatpush2.msra.mxu0 0.0
        %5185 = vmatprep.subr.mxu0 0.0
        %5186 = vmatpush2.msra.mxu0 0.0
        %5187 = vmatprep.subr.mxu0 0.0
        %5188 = vmatpush2.msra.mxu0 0.0
        %5189 = vmatprep.mubr.f32.mxu0 0.0
        %5190 = vmatmul.mubr.f32.gmra.mxu0 %v5123
        %v5191 = vpop.f32.mrf.mxu0
        %v5192 = vadd.f32 %v5121, %v5191
        %v5193 = vpop.f32.mrf.mxu0
        %5194 = vdwg.mxu0
        %vm5195 = vcmask 73728
        %5196 = vst.msk [vmem:[%s324] sm:$0x1] %vm5195, %v5192
        %s5197 = sand.u32 %s225, 1
        %s5198 = scalar_lea.sflag [#allocation11], %s5197
        %s5199 = sand.u32 %s225, 1
        %s5200 = scalar_lea.vmem [#allocation10], %s5199
        // Predicated region
        $region57: #{net_forward.1} parent=55 // pred_check
          %p5201 = pneg %p235
        $region58: #{net_forward.1} parent=55 // pred_check_branch
          %5203 = sbr.rel (%p5201) target = $region60
        $region59: #{net_forward.1} parent=55 // pred_region
          %s5205 = ssub.s32 16, 16
          %5206 = vsyncadd %s5198, %s5205
          %s5207 = smul.addr %s23, 16
          %s5208 = scalar_lea.hbm %s9, %s5207
          %s5210 = sshll.u32 %s5200, 4
          %s5211 = int_to_ptr.vmem [resolvable:$true] %s5210
          %5213 = dma.vmem_to_hbm [thread:$0]  %s5211, 16, %s5208, %s5198
        $region60: #{net_forward.1} parent=55 // pred_fallthru
          _
      $region56: #{net_forward.1} parent=5 // pred_fallthru
        _
      %p5214 = scmp.le.s32.totalorder 2, %s18
      // Predicated region
      $region61: #{net_forward.1} parent=5 // pred_check
        %p5215 = pneg %p5214
      $region62: #{net_forward.1} parent=5 // pred_check_branch
        %5217 = sbr.rel (%p5215) target = $region64
      $region63: #{net_forward.1} parent=5 // pred_region
        %s5218 = ssub.s32 %s18, 2
        // Predicated region
        $region65: #{net_forward.1} parent=63 // pred_check
          %p5219 = pneg %p241
        $region66: #{net_forward.1} parent=63 // pred_check_branch
          %5221 = sbr.rel (%p5219) target = $region68
        $region67: #{net_forward.1} parent=63 // pred_region
          %s5222 = sand.u32 %s226, 1
          %s5223 = scalar_lea.sflag [#allocation11], %s5222
          %s5224 = sand.u32 %s226, 1
          %s5225 = scalar_lea.vmem [#allocation10], %s5224
          %5226 = dma.done %s5223, 16
        $region68: #{net_forward.1} parent=63 // pred_fallthru
          _
      $region64: #{net_forward.1} parent=5 // pred_fallthru
        _
    $region6: #{net_forward.1} parent=1 // loop_footer
      %s22 = sadd.s32 1, %s18
    $region7: #{net_forward.1} parent=1 // loop_footer_branch
      %17 = sbr.rel target = $region3
    $region8: #{net_forward.1} parent=1 // loop_exit
      _
    %5227 = vsyncpa [#allocation11], 1
    %s5228 = scalar_lea.sflag [#allocation11], 1
    %5229 = vsyncpa %s5228, 1

</llo_original>
